<compile_context>
chip_gen: v5e
topology: v5e:2x2
jax: 0.10.0
libtpu: 0.0.40
codegen_flags: <defaults>
</compile_context>

<pallas_src>
import functools
import math

import jax
import jax.numpy as jnp
from jax.experimental import pallas as pl
from jax.experimental.pallas import tpu as pltpu


PARAM_ORDER = (
    "wq", "bq", "wk", "bk", "wv", "bv", "wo", "bo",
    "ln1_w", "ln1_b",
    "w1", "b1", "w2", "b2",
    "ln2_w", "ln2_b",
)
_MATMUL_WEIGHTS = frozenset({"wq", "wk", "wv", "wo", "w1", "w2"})


def _layernorm_f32(x, w, b, eps=1e-5):
    x = x.astype(jnp.float32)
    mu = jnp.mean(x, axis=-1, keepdims=True)
    var = jnp.mean(jnp.square(x - mu), axis=-1, keepdims=True)
    return ((x - mu) * jax.lax.rsqrt(var + eps)
            * w.astype(jnp.float32) + b.astype(jnp.float32))


def fused_encoder_kernel(x_ref,
                         wq_ref, bq_ref, wk_ref, bk_ref, wv_ref, bv_ref,
                         wo_ref, bo_ref,
                         ln1_w_ref, ln1_b_ref,
                         w1_ref, b1_ref, w2_ref, b2_ref,
                         ln2_w_ref, ln2_b_ref,
                         o_ref,
                         act_ref, ctx_ref,
                         *, num_heads, weights_resident):
    layer = pl.program_id(1)
    bn, T, D = x_ref.shape
    R = bn * T
    d_k = D // num_heads
    scale = 1.0 / math.sqrt(d_k)

    # Layer 0: stage the input tile into the VMEM-resident (bn*T, D) activation
    # buffer that carries across the layer grid axis.
    @pl.when(layer == 0)
    def _():
        act_ref[...] = x_ref[...].reshape(R, D).astype(jnp.float32)

    # Weights: either the full L-layer stack is resident (dynamic layer index)
    # or exactly one layer was streamed for this grid step (index 0).
    li = layer if weights_resident else 0
    wq = wq_ref[li]; bq = bq_ref[li]
    wk = wk_ref[li]; bk = bk_ref[li]
    wv = wv_ref[li]; bv = bv_ref[li]
    wo = wo_ref[li]; bo = bo_ref[li]
    w1 = w1_ref[li]; b1 = b1_ref[li]
    w2 = w2_ref[li]; b2 = b2_ref[li]

    act = act_ref[...]                          # (R, D) float32
    lhs = act.astype(wq.dtype)                  # bf16 MXU operands, f32 accumulate

    # ---- temporal multi-head self-attention (attention over T) ----
    q = jnp.dot(lhs, wq, preferred_element_type=jnp.float32) + bq      # (R, D)
    k = jnp.dot(lhs, wk, preferred_element_type=jnp.float32) + bk
    v = jnp.dot(lhs, wv, preferred_element_type=jnp.float32) + bv

    q3 = q.reshape(bn, T, D)
    k3 = k.reshape(bn, T, D)
    v3 = v.reshape(bn, T, D)

    # Per-head score/context (tiny K=d_k einsums, f32), contexts assembled into
    # a single (R, D) scratch so the output projection is ONE full-K matmul.
    for h in range(num_heads):                  # static unroll (small H)
        lo = h * d_k
        qh = q3[:, :, lo:lo + d_k]
        kh = k3[:, :, lo:lo + d_k]
        vh = v3[:, :, lo:lo + d_k]
        s = jnp.einsum("bqd,bkd->bqk", qh, kh,
                       preferred_element_type=jnp.float32) * scale
        s = s - jnp.max(s, axis=-1, keepdims=True)
        p = jnp.exp(s)
        p = p / jnp.sum(p, axis=-1, keepdims=True)        # exact divide (parity)
        ctx_h = jnp.einsum("bqk,bkd->bqd", p, vh,
                           preferred_element_type=jnp.float32)
        ctx_ref[:, lo:lo + d_k] = ctx_h.reshape(R, d_k)

    attn = jnp.dot(ctx_ref[...].astype(wo.dtype), wo,
                   preferred_element_type=jnp.float32) + bo

    # ---- residual + norm1 ----
    src = _layernorm_f32(act + attn, ln1_w_ref[li], ln1_b_ref[li])

    # ---- position-wise FFN ----
    h1 = jnp.dot(src.astype(w1.dtype), w1, preferred_element_type=jnp.float32) + b1
    h1 = jnp.maximum(h1, 0.0)
    ffn = jnp.dot(h1.astype(w2.dtype), w2, preferred_element_type=jnp.float32) + b2

    # ---- residual + norm2 ----
    out = _layernorm_f32(src + ffn, ln2_w_ref[li], ln2_b_ref[li])

    act_ref[...] = out                          # carry to the next layer

    @pl.when(layer == pl.num_programs(1) - 1)
    def _():
        o_ref[...] = out.reshape(bn, T, D).astype(o_ref.dtype)


def transformer_encoder_4d(x, layer_params, *, num_heads, block_bn=None,
                           param_dtype=jnp.bfloat16):
    """x: (B, N_nodes, T, D).  Returns same shape."""
    B, N, T, D = x.shape
    BN = B * N
    L = len(layer_params)
    assert D % num_heads == 0

    # Stack per-layer weights along a leading layer axis; matmul weights in the
    # MXU dtype (bf16 by default), biases / LayerNorm params in f32.
    stacked = {}
    for name in PARAM_ORDER:
        arr = jnp.stack([p[name] for p in layer_params], axis=0)
        stacked[name] = arr.astype(param_dtype if name in _MATMUL_WEIGHTS
                                   else jnp.float32)
    d_ff = stacked["w1"].shape[-1]

    # Generation-aware VMEM budget (v7x: 64 MiB per TensorCore).
    try:
        vmem_cap = int(pltpu.get_tpu_info().vmem_capacity_bytes)
    except Exception:
        vmem_cap = 64 * 2 ** 20

    x_bytes = jnp.dtype(x.dtype).itemsize
    weight_bytes = sum(int(v.size) * v.dtype.itemsize for v in stacked.values())
    # Budget 2x in case the pipeline double-buffers even constant-index inputs.
    weights_resident = 2 * weight_bytes <= int(0.30 * vmem_cap)

    if block_bn is None:
        # f32 intermediates per BN row: act,q,k,v,ctx,attn,src,ffn,out (~9*D),
        # FFN hidden (d_ff), per-head scores (H*T); plus double-buffered x/out.
        per_bn = T * 4 * (9 * D + d_ff + num_heads * T) + 4 * T * D * x_bytes
        act_budget = int(0.45 * vmem_cap) - (2 * weight_bytes if weights_resident
                                             else 6 * weight_bytes // max(L, 1))
        block_bn = max(1, min(act_budget // per_bn, max(1, 16384 // T)))
        # Keep >= 2 BN tiles so the "parallel" axis can shard across the two
        # TensorCores of a v7x chip and the I/O pipeline has something to hide.
        block_bn = min(block_bn, max(1, pl.cdiv(BN, 2)))
    block_bn = int(max(1, min(block_bn, BN)))

    # Pad BN up to a tile multiple instead of shrinking the tile (pad rows are
    # computed on but stripped below).
    num_tiles = pl.cdiv(BN, block_bn)
    BN_pad = num_tiles * block_bn

    x2 = x.reshape(BN, T, D)
    if BN_pad != BN:
        x2 = jnp.pad(x2, ((0, BN_pad - BN), (0, 0), (0, 0)))

    x_spec = pl.BlockSpec((block_bn, T, D), lambda i, l: (i, 0, 0))
    out_spec = pl.BlockSpec((block_bn, T, D), lambda i, l: (i, 0, 0))

    if weights_resident:
        # Whole weight stack lives in VMEM for the entire call: the block index
        # never changes, so Pallas DMAs each weight exactly once.
        param_specs = [pl.BlockSpec(stacked[name].shape, lambda i, l: (0, 0, 0))
                       for name in PARAM_ORDER]
    else:
        # Stream one layer of weights per grid step with deeper buffering so
        # the next layer's weight DMA hides behind this layer's compute.
        param_specs = [pl.BlockSpec((1,) + stacked[name].shape[1:],
                                    lambda i, l: (l, 0, 0),
                                    pipeline_mode=pl.Buffered(3))
                       for name in PARAM_ORDER]

    vmem_limit = int(max(32 * 2 ** 20, 0.75 * vmem_cap))

    kernel = functools.partial(fused_encoder_kernel, num_heads=num_heads,
                               weights_resident=weights_resident)
    out = pl.pallas_call(
        kernel,
        out_shape=jax.ShapeDtypeStruct((BN_pad, T, D), x.dtype),
        grid_spec=pltpu.PrefetchScalarGridSpec(
            num_scalar_prefetch=0,
            grid=(num_tiles, L),
            in_specs=[x_spec] + param_specs,
            out_specs=out_spec,
            scratch_shapes=[pltpu.VMEM((block_bn * T, D), jnp.float32),   # act
                            pltpu.VMEM((block_bn * T, D), jnp.float32)], # ctx
        ),
        compiler_params=pltpu.CompilerParams(
            dimension_semantics=("parallel", "arbitrary"),
            vmem_limit_bytes=vmem_limit),
    )(x2, *[stacked[name] for name in PARAM_ORDER])
    return out[:BN].reshape(B, N, T, D)


# ---------------- deterministic parameter init ----------------
def init_layer_params(key, d_model, d_ff):
    keys = jax.random.split(key, 8)
    s_in = 1.0 / math.sqrt(d_model)
    s_ff = 1.0 / math.sqrt(d_ff)

    def lin(k, din, dout, scale):
        kw, kb = jax.random.split(k)
        w = jax.random.uniform(kw, (din, dout), jnp.float32, -scale, scale)
        b = jax.random.uniform(kb, (1, dout), jnp.float32, -scale, scale)
        return w, b

    wq, bq = lin(keys[0], d_model, d_model, s_in)
    wk, bk = lin(keys[1], d_model, d_model, s_in)
    wv, bv = lin(keys[2], d_model, d_model, s_in)
    wo, bo = lin(keys[3], d_model, d_model, s_in)
    w1, b1 = lin(keys[4], d_model, d_ff, s_in)
    w2, b2 = lin(keys[5], d_ff, d_model, s_ff)
    return dict(
        wq=wq, bq=bq, wk=wk, bk=bk, wv=wv, bv=bv, wo=wo, bo=bo,
        ln1_w=jnp.ones((1, d_model), jnp.float32),
        ln1_b=jnp.zeros((1, d_model), jnp.float32),
        w1=w1, b1=b1, w2=w2, b2=b2,
        ln2_w=jnp.ones((1, d_model), jnp.float32),
        ln2_b=jnp.zeros((1, d_model), jnp.float32),
    )


# ---------------- pure-JAX reference (for correctness check) ----------------
def _ref_layer(x, p, num_heads):
    BN, T, D = x.shape
    d_k = D // num_heads

    def lin(inp, w, b):
        return inp @ w + b

    def ln(inp, w, b):
        mu = inp.mean(-1, keepdims=True)
        var = ((inp - mu) ** 2).mean(-1, keepdims=True)
        return (inp - mu) / jnp.sqrt(var + 1e-5) * w + b

    q = lin(x, p["wq"], p["bq"]).reshape(BN, T, num_heads, d_k).transpose(0, 2, 1, 3)
    k = lin(x, p["wk"], p["bk"]).reshape(BN, T, num_heads, d_k).transpose(0, 2, 1, 3)
    v = lin(x, p["wv"], p["bv"]).reshape(BN, T, num_heads, d_k).transpose(0, 2, 1, 3)
    s = jnp.einsum("bhqd,bhkd->bhqk", q, k) / math.sqrt(d_k)
    a = jax.nn.softmax(s, axis=-1)
    ctx = jnp.einsum("bhqk,bhkd->bhqd", a, v).transpose(0, 2, 1, 3).reshape(BN, T, D)
    src = ln(x + lin(ctx, p["wo"], p["bo"]), p["ln1_w"], p["ln1_b"])
    ffn = lin(jax.nn.relu(lin(src, p["w1"], p["b1"])), p["w2"], p["b2"])
    return ln(src + ffn, p["ln2_w"], p["ln2_b"])


def _ref_encoder(x, layer_params, num_heads):
    B, N, T, D = x.shape
    out = x.reshape(B * N, T, D)
    for p in layer_params:
        out = _ref_layer(out, p, num_heads)
    return out.reshape(B, N, T, D)


def _cast_matmul_weights(layer_params, dtype):
    """Round the matmul weights to `dtype` (values kept in f32 math)."""
    out = []
    for p in layer_params:
        q = dict(p)
        for name in _MATMUL_WEIGHTS:
            q[name] = p[name].astype(dtype).astype(jnp.float32)
        out.append(q)
    return out


if __name__ == "__main__":
    B, N_nodes, T, d_model = 2, 4, 8, 32
    num_heads, d_ff, num_layers = 4, 64, 2

    root = jax.random.PRNGKey(0)
    kx, *layer_keys = jax.random.split(root, num_layers + 1)

    x = jax.random.normal(kx, (B, N_nodes, T, d_model), jnp.float32)
    layer_params = [init_layer_params(k, d_model, d_ff) for k in layer_keys]

    # Default (perf) path: bf16 MXU operands.
    out_bf16 = jax.block_until_ready(
        transformer_encoder_4d(x, layer_params, num_heads=num_heads))
    # f32 path for a tight numerical check against the module semantics.
    out_f32 = jax.block_until_ready(
        transformer_encoder_4d(x, layer_params, num_heads=num_heads,
                               param_dtype=jnp.float32))

    ref = _ref_encoder(x, layer_params, num_heads)
    ref_bf16w = _ref_encoder(x, _cast_matmul_weights(layer_params, jnp.bfloat16),
                             num_heads)

    assert out_f32.shape == (B, N_nodes, T, d_model)
    assert out_bf16.shape == (B, N_nodes, T, d_model)
    assert jnp.allclose(out_f32, ref, atol=3e-3, rtol=3e-3), \
        "f32 kernel mismatch vs JAX reference"
    # bf16 path checked against a reference using the same bf16-rounded weights
    # (remaining delta comes from the kernel's bf16 MXU lhs casts — expected).
    assert jnp.allclose(out_bf16, ref_bf16w, atol=5e-2, rtol=5e-2), \
        "bf16 kernel mismatch vs bf16-weight JAX reference"

    print("KERNEL_OK")
</pallas_src>

<mosaic_0001>
module attributes {stable_mosaic.version = 11 : i64} {
  func.func @fused_encoder_kernel(%arg0: i32, %arg1: i32, %arg2: memref<4x8x32xf32, #tpu.memory_space<vmem>>, %arg3: memref<2x32x32xbf16, #tpu.memory_space<vmem>>, %arg4: memref<2x1x32xf32, #tpu.memory_space<vmem>>, %arg5: memref<2x32x32xbf16, #tpu.memory_space<vmem>>, %arg6: memref<2x1x32xf32, #tpu.memory_space<vmem>>, %arg7: memref<2x32x32xbf16, #tpu.memory_space<vmem>>, %arg8: memref<2x1x32xf32, #tpu.memory_space<vmem>>, %arg9: memref<2x32x32xbf16, #tpu.memory_space<vmem>>, %arg10: memref<2x1x32xf32, #tpu.memory_space<vmem>>, %arg11: memref<2x1x32xf32, #tpu.memory_space<vmem>>, %arg12: memref<2x1x32xf32, #tpu.memory_space<vmem>>, %arg13: memref<2x32x64xbf16, #tpu.memory_space<vmem>>, %arg14: memref<2x1x64xf32, #tpu.memory_space<vmem>>, %arg15: memref<2x64x32xbf16, #tpu.memory_space<vmem>>, %arg16: memref<2x1x32xf32, #tpu.memory_space<vmem>>, %arg17: memref<2x1x32xf32, #tpu.memory_space<vmem>>, %arg18: memref<2x1x32xf32, #tpu.memory_space<vmem>>, %arg19: memref<4x8x32xf32, #tpu.memory_space<vmem>>, %arg20: memref<32x32xf32, #tpu.memory_space<vmem>>, %arg21: memref<32x32xf32, #tpu.memory_space<vmem>>) attributes {dimension_semantics = [#tpu.dimension_semantics<parallel>, #tpu.dimension_semantics<arbitrary>], iteration_bounds = array<i64: 2, 2>, scalar_prefetch = 0 : i64, scratch_operands = 2 : i64, tpu.core_type = #tpu.core_type<tc>, window_params = [{transform_indices = @transform_0, window_bounds = array<i64: 4, 8, 32>}, {pipeline_mode = #tpu.pipeline_mode<synchronous>, transform_indices = @transform_1, window_bounds = array<i64: 2, 32, 32>}, {pipeline_mode = #tpu.pipeline_mode<synchronous>, transform_indices = @transform_2, window_bounds = array<i64: 2, 1, 32>}, {pipeline_mode = #tpu.pipeline_mode<synchronous>, transform_indices = @transform_3, window_bounds = array<i64: 2, 32, 32>}, {pipeline_mode = #tpu.pipeline_mode<synchronous>, transform_indices = @transform_4, window_bounds = array<i64: 2, 1, 32>}, {pipeline_mode = #tpu.pipeline_mode<synchronous>, transform_indices = @transform_5, window_bounds = array<i64: 2, 32, 32>}, {pipeline_mode = #tpu.pipeline_mode<synchronous>, transform_indices = @transform_6, window_bounds = array<i64: 2, 1, 32>}, {pipeline_mode = #tpu.pipeline_mode<synchronous>, transform_indices = @transform_7, window_bounds = array<i64: 2, 32, 32>}, {pipeline_mode = #tpu.pipeline_mode<synchronous>, transform_indices = @transform_8, window_bounds = array<i64: 2, 1, 32>}, {pipeline_mode = #tpu.pipeline_mode<synchronous>, transform_indices = @transform_9, window_bounds = array<i64: 2, 1, 32>}, {pipeline_mode = #tpu.pipeline_mode<synchronous>, transform_indices = @transform_10, window_bounds = array<i64: 2, 1, 32>}, {pipeline_mode = #tpu.pipeline_mode<synchronous>, transform_indices = @transform_11, window_bounds = array<i64: 2, 32, 64>}, {pipeline_mode = #tpu.pipeline_mode<synchronous>, transform_indices = @transform_12, window_bounds = array<i64: 2, 1, 64>}, {pipeline_mode = #tpu.pipeline_mode<synchronous>, transform_indices = @transform_13, window_bounds = array<i64: 2, 64, 32>}, {pipeline_mode = #tpu.pipeline_mode<synchronous>, transform_indices = @transform_14, window_bounds = array<i64: 2, 1, 32>}, {pipeline_mode = #tpu.pipeline_mode<synchronous>, transform_indices = @transform_15, window_bounds = array<i64: 2, 1, 32>}, {pipeline_mode = #tpu.pipeline_mode<synchronous>, transform_indices = @transform_16, window_bounds = array<i64: 2, 1, 32>}, {transform_indices = @transform_17, window_bounds = array<i64: 4, 8, 32>}]} {
    %c0_i32 = arith.constant 0 : i32
    %0 = arith.cmpi eq, %arg1, %c0_i32 : i32
    %1 = arith.extui %0 : i1 to i32
    %c0_i32_0 = arith.constant 0 : i32
    %2 = arith.cmpi ne, %1, %c0_i32_0 : i32
    scf.if %2 {
      %c0_80 = arith.constant 0 : index
      %c0_81 = arith.constant 0 : index
      %c0_82 = arith.constant 0 : index
      %202 = vector.load %arg2[%c0_80, %c0_81, %c0_82] : memref<4x8x32xf32, #tpu.memory_space<vmem>>, vector<4x8x32xf32>
      %203 = vector.shape_cast %202 : vector<4x8x32xf32> to vector<32x32xf32>
      %c0_83 = arith.constant 0 : index
      %c0_84 = arith.constant 0 : index
      %204 = vector.load %arg20[%c0_83, %c0_84] : memref<32x32xf32, #tpu.memory_space<vmem>>, vector<32x32xf32>
      tpu.vector_store %arg20[%c0_83, %c0_84], %203 {strides = array<i32>} : memref<32x32xf32, #tpu.memory_space<vmem>>, vector<32x32xf32>,
    } else {
    }
    %3 = arith.index_cast %arg1 : i32 to index
    %c0 = arith.constant 0 : index
    %c0_1 = arith.constant 0 : index
    %4 = vector.load %arg3[%3, %c0, %c0_1] : memref<2x32x32xbf16, #tpu.memory_space<vmem>>, vector<1x32x32xbf16>
    %5 = vector.shape_cast %4 : vector<1x32x32xbf16> to vector<32x32xbf16>
    %6 = arith.index_cast %arg1 : i32 to index
    %c0_2 = arith.constant 0 : index
    %c0_3 = arith.constant 0 : index
    %7 = vector.load %arg4[%6, %c0_2, %c0_3] : memref<2x1x32xf32, #tpu.memory_space<vmem>>, vector<1x1x32xf32>
    %8 = vector.shape_cast %7 : vector<1x1x32xf32> to vector<1x32xf32>
    %9 = arith.index_cast %arg1 : i32 to index
    %c0_4 = arith.constant 0 : index
    %c0_5 = arith.constant 0 : index
    %10 = vector.load %arg5[%9, %c0_4, %c0_5] : memref<2x32x32xbf16, #tpu.memory_space<vmem>>, vector<1x32x32xbf16>
    %11 = vector.shape_cast %10 : vector<1x32x32xbf16> to vector<32x32xbf16>
    %12 = arith.index_cast %arg1 : i32 to index
    %c0_6 = arith.constant 0 : index
    %c0_7 = arith.constant 0 : index
    %13 = vector.load %arg6[%12, %c0_6, %c0_7] : memref<2x1x32xf32, #tpu.memory_space<vmem>>, vector<1x1x32xf32>
    %14 = vector.shape_cast %13 : vector<1x1x32xf32> to vector<1x32xf32>
    %15 = arith.index_cast %arg1 : i32 to index
    %c0_8 = arith.constant 0 : index
    %c0_9 = arith.constant 0 : index
    %16 = vector.load %arg7[%15, %c0_8, %c0_9] : memref<2x32x32xbf16, #tpu.memory_space<vmem>>, vector<1x32x32xbf16>
    %17 = vector.shape_cast %16 : vector<1x32x32xbf16> to vector<32x32xbf16>
    %18 = arith.index_cast %arg1 : i32 to index
    %c0_10 = arith.constant 0 : index
    %c0_11 = arith.constant 0 : index
    %19 = vector.load %arg8[%18, %c0_10, %c0_11] : memref<2x1x32xf32, #tpu.memory_space<vmem>>, vector<1x1x32xf32>
    %20 = vector.shape_cast %19 : vector<1x1x32xf32> to vector<1x32xf32>
    %21 = arith.index_cast %arg1 : i32 to index
    %c0_12 = arith.constant 0 : index
    %c0_13 = arith.constant 0 : index
    %22 = vector.load %arg9[%21, %c0_12, %c0_13] : memref<2x32x32xbf16, #tpu.memory_space<vmem>>, vector<1x32x32xbf16>
    %23 = vector.shape_cast %22 : vector<1x32x32xbf16> to vector<32x32xbf16>
    %24 = arith.index_cast %arg1 : i32 to index
    %c0_14 = arith.constant 0 : index
    %c0_15 = arith.constant 0 : index
    %25 = vector.load %arg10[%24, %c0_14, %c0_15] : memref<2x1x32xf32, #tpu.memory_space<vmem>>, vector<1x1x32xf32>
    %26 = vector.shape_cast %25 : vector<1x1x32xf32> to vector<1x32xf32>
    %27 = arith.index_cast %arg1 : i32 to index
    %c0_16 = arith.constant 0 : index
    %c0_17 = arith.constant 0 : index
    %28 = vector.load %arg13[%27, %c0_16, %c0_17] : memref<2x32x64xbf16, #tpu.memory_space<vmem>>, vector<1x32x64xbf16>
    %29 = vector.shape_cast %28 : vector<1x32x64xbf16> to vector<32x64xbf16>
    %30 = arith.index_cast %arg1 : i32 to index
    %c0_18 = arith.constant 0 : index
    %c0_19 = arith.constant 0 : index
    %31 = vector.load %arg14[%30, %c0_18, %c0_19] : memref<2x1x64xf32, #tpu.memory_space<vmem>>, vector<1x1x64xf32>
    %32 = vector.shape_cast %31 : vector<1x1x64xf32> to vector<1x64xf32>
    %33 = arith.index_cast %arg1 : i32 to index
    %c0_20 = arith.constant 0 : index
    %c0_21 = arith.constant 0 : index
    %34 = vector.load %arg15[%33, %c0_20, %c0_21] : memref<2x64x32xbf16, #tpu.memory_space<vmem>>, vector<1x64x32xbf16>
    %35 = vector.shape_cast %34 : vector<1x64x32xbf16> to vector<64x32xbf16>
    %36 = arith.index_cast %arg1 : i32 to index
    %c0_22 = arith.constant 0 : index
    %c0_23 = arith.constant 0 : index
    %37 = vector.load %arg16[%36, %c0_22, %c0_23] : memref<2x1x32xf32, #tpu.memory_space<vmem>>, vector<1x1x32xf32>
    %38 = vector.shape_cast %37 : vector<1x1x32xf32> to vector<1x32xf32>
    %c0_24 = arith.constant 0 : index
    %c0_25 = arith.constant 0 : index
    %39 = vector.load %arg20[%c0_24, %c0_25] : memref<32x32xf32, #tpu.memory_space<vmem>>, vector<32x32xf32>
    %40 = arith.truncf %39 : vector<32x32xf32> to vector<32x32xbf16>
    %cst = arith.constant dense<0.000000e+00> : vector<32x32xf32>
    %41 = tpu.matmul %40, %5, %cst {dimension_numbers = #tpu.dot_dimension_numbers<[1], [0], [0], [1], [0, 0, 1, 1], [], []>} : vector<32x32xbf16>, vector<32x32xbf16>, vector<32x32xf32> -> vector<32x32xf32>
    %42 = vector.broadcast %8 : vector<1x32xf32> to vector<32x32xf32>
    %43 = arith.addf %41, %42 : vector<32x32xf32>
    %cst_26 = arith.constant dense<0.000000e+00> : vector<32x32xf32>
    %44 = tpu.matmul %40, %11, %cst_26 {dimension_numbers = #tpu.dot_dimension_numbers<[1], [0], [0], [1], [0, 0, 1, 1], [], []>} : vector<32x32xbf16>, vector<32x32xbf16>, vector<32x32xf32> -> vector<32x32xf32>
    %45 = vector.broadcast %14 : vector<1x32xf32> to vector<32x32xf32>
    %46 = arith.addf %44, %45 : vector<32x32xf32>
    %cst_27 = arith.constant dense<0.000000e+00> : vector<32x32xf32>
    %47 = tpu.matmul %40, %17, %cst_27 {dimension_numbers = #tpu.dot_dimension_numbers<[1], [0], [0], [1], [0, 0, 1, 1], [], []>} : vector<32x32xbf16>, vector<32x32xbf16>, vector<32x32xf32> -> vector<32x32xf32>
    %48 = vector.broadcast %20 : vector<1x32xf32> to vector<32x32xf32>
    %49 = arith.addf %47, %48 : vector<32x32xf32>
    %50 = vector.shape_cast %43 : vector<32x32xf32> to vector<4x8x32xf32>
    %51 = vector.shape_cast %46 : vector<32x32xf32> to vector<4x8x32xf32>
    %52 = vector.shape_cast %49 : vector<32x32xf32> to vector<4x8x32xf32>
    %53 = vector.extract_strided_slice %50 {offsets = [0, 0, 0], sizes = [4, 8, 8], strides = [1, 1, 1]} : vector<4x8x32xf32> to vector<4x8x8xf32>
    %54 = vector.extract_strided_slice %51 {offsets = [0, 0, 0], sizes = [4, 8, 8], strides = [1, 1, 1]} : vector<4x8x32xf32> to vector<4x8x8xf32>
    %55 = vector.extract_strided_slice %52 {offsets = [0, 0, 0], sizes = [4, 8, 8], strides = [1, 1, 1]} : vector<4x8x32xf32> to vector<4x8x8xf32>
    "tpu.trace_start"() <{level = 10 : i32, message = "bqd,bkd->bqk"}> : () -> ()
    %cst_28 = arith.constant dense<0.000000e+00> : vector<4x8x8xf32>
    %56 = tpu.matmul %53, %54, %cst_28 {dimension_numbers = #tpu.dot_dimension_numbers<[2], [2], [1], [1], [0, 0, 0, 1, 1, 1], [0], [0]>} : vector<4x8x8xf32>, vector<4x8x8xf32>, vector<4x8x8xf32> -> vector<4x8x8xf32>
    "tpu.trace_stop"() : () -> ()
    %cst_29 = arith.constant 0.353553385 : f32
    %57 = vector.broadcast %cst_29 : f32 to vector<4x8x8xf32>
    %58 = arith.mulf %56, %57 : vector<4x8x8xf32>
    %cst_30 = arith.constant dense<0xFF800000> : vector<4x8xf32>
    %59 = vector.multi_reduction <maximumf>, %58, %cst_30 [2] : vector<4x8x8xf32> to vector<4x8xf32>
    %60 = vector.shape_cast %59 : vector<4x8xf32> to vector<4x8x1xf32>
    %61 = vector.broadcast %60 : vector<4x8x1xf32> to vector<4x8x8xf32>
    %62 = arith.subf %58, %61 : vector<4x8x8xf32>
    %63 = math.exp %62 : vector<4x8x8xf32>
    %cst_31 = arith.constant dense<0.000000e+00> : vector<4x8xf32>
    %64 = vector.multi_reduction <add>, %63, %cst_31 [2] : vector<4x8x8xf32> to vector<4x8xf32>
    %65 = vector.shape_cast %64 : vector<4x8xf32> to vector<4x8x1xf32>
    %66 = vector.broadcast %65 : vector<4x8x1xf32> to vector<4x8x8xf32>
    %67 = arith.divf %63, %66 : vector<4x8x8xf32>
    "tpu.trace_start"() <{level = 10 : i32, message = "bqk,bkd->bqd"}> : () -> ()
    %cst_32 = arith.constant dense<0.000000e+00> : vector<4x8x8xf32>
    %68 = tpu.matmul %67, %55, %cst_32 {dimension_numbers = #tpu.dot_dimension_numbers<[2], [1], [1], [2], [0, 0, 0, 1, 1, 2], [0], [0]>} : vector<4x8x8xf32>, vector<4x8x8xf32>, vector<4x8x8xf32> -> vector<4x8x8xf32>
    "tpu.trace_stop"() : () -> ()
    %69 = vector.shape_cast %68 : vector<4x8x8xf32> to vector<32x8xf32>
    %c0_33 = arith.constant 0 : index
    %c0_34 = arith.constant 0 : index
    %70 = vector.load %arg21[%c0_33, %c0_34] : memref<32x32xf32, #tpu.memory_space<vmem>>, vector<32x8xf32>
    tpu.vector_store %arg21[%c0_33, %c0_34], %69 {strides = array<i32>} : memref<32x32xf32, #tpu.memory_space<vmem>>, vector<32x8xf32>,
    %71 = vector.extract_strided_slice %50 {offsets = [0, 0, 8], sizes = [4, 8, 8], strides = [1, 1, 1]} : vector<4x8x32xf32> to vector<4x8x8xf32>
    %72 = vector.extract_strided_slice %51 {offsets = [0, 0, 8], sizes = [4, 8, 8], strides = [1, 1, 1]} : vector<4x8x32xf32> to vector<4x8x8xf32>
    %73 = vector.extract_strided_slice %52 {offsets = [0, 0, 8], sizes = [4, 8, 8], strides = [1, 1, 1]} : vector<4x8x32xf32> to vector<4x8x8xf32>
    "tpu.trace_start"() <{level = 10 : i32, message = "bqd,bkd->bqk"}> : () -> ()
    %cst_35 = arith.constant dense<0.000000e+00> : vector<4x8x8xf32>
    %74 = tpu.matmul %71, %72, %cst_35 {dimension_numbers = #tpu.dot_dimension_numbers<[2], [2], [1], [1], [0, 0, 0, 1, 1, 1], [0], [0]>} : vector<4x8x8xf32>, vector<4x8x8xf32>, vector<4x8x8xf32> -> vector<4x8x8xf32>
    "tpu.trace_stop"() : () -> ()
    %cst_36 = arith.constant 0.353553385 : f32
    %75 = vector.broadcast %cst_36 : f32 to vector<4x8x8xf32>
    %76 = arith.mulf %74, %75 : vector<4x8x8xf32>
    %cst_37 = arith.constant dense<0xFF800000> : vector<4x8xf32>
    %77 = vector.multi_reduction <maximumf>, %76, %cst_37 [2] : vector<4x8x8xf32> to vector<4x8xf32>
    %78 = vector.shape_cast %77 : vector<4x8xf32> to vector<4x8x1xf32>
    %79 = vector.broadcast %78 : vector<4x8x1xf32> to vector<4x8x8xf32>
    %80 = arith.subf %76, %79 : vector<4x8x8xf32>
    %81 = math.exp %80 : vector<4x8x8xf32>
    %cst_38 = arith.constant dense<0.000000e+00> : vector<4x8xf32>
    %82 = vector.multi_reduction <add>, %81, %cst_38 [2] : vector<4x8x8xf32> to vector<4x8xf32>
    %83 = vector.shape_cast %82 : vector<4x8xf32> to vector<4x8x1xf32>
    %84 = vector.broadcast %83 : vector<4x8x1xf32> to vector<4x8x8xf32>
    %85 = arith.divf %81, %84 : vector<4x8x8xf32>
    "tpu.trace_start"() <{level = 10 : i32, message = "bqk,bkd->bqd"}> : () -> ()
    %cst_39 = arith.constant dense<0.000000e+00> : vector<4x8x8xf32>
    %86 = tpu.matmul %85, %73, %cst_39 {dimension_numbers = #tpu.dot_dimension_numbers<[2], [1], [1], [2], [0, 0, 0, 1, 1, 2], [0], [0]>} : vector<4x8x8xf32>, vector<4x8x8xf32>, vector<4x8x8xf32> -> vector<4x8x8xf32>
    "tpu.trace_stop"() : () -> ()
    %87 = vector.shape_cast %86 : vector<4x8x8xf32> to vector<32x8xf32>
    %c0_40 = arith.constant 0 : index
    %c8 = arith.constant 8 : index
    %88 = vector.load %arg21[%c0_40, %c8] : memref<32x32xf32, #tpu.memory_space<vmem>>, vector<32x8xf32>
    tpu.vector_store %arg21[%c0_40, %c8], %87 {strides = array<i32>} : memref<32x32xf32, #tpu.memory_space<vmem>>, vector<32x8xf32>,
    %89 = vector.extract_strided_slice %50 {offsets = [0, 0, 16], sizes = [4, 8, 8], strides = [1, 1, 1]} : vector<4x8x32xf32> to vector<4x8x8xf32>
    %90 = vector.extract_strided_slice %51 {offsets = [0, 0, 16], sizes = [4, 8, 8], strides = [1, 1, 1]} : vector<4x8x32xf32> to vector<4x8x8xf32>
    %91 = vector.extract_strided_slice %52 {offsets = [0, 0, 16], sizes = [4, 8, 8], strides = [1, 1, 1]} : vector<4x8x32xf32> to vector<4x8x8xf32>
    "tpu.trace_start"() <{level = 10 : i32, message = "bqd,bkd->bqk"}> : () -> ()
    %cst_41 = arith.constant dense<0.000000e+00> : vector<4x8x8xf32>
    %92 = tpu.matmul %89, %90, %cst_41 {dimension_numbers = #tpu.dot_dimension_numbers<[2], [2], [1], [1], [0, 0, 0, 1, 1, 1], [0], [0]>} : vector<4x8x8xf32>, vector<4x8x8xf32>, vector<4x8x8xf32> -> vector<4x8x8xf32>
    "tpu.trace_stop"() : () -> ()
    %cst_42 = arith.constant 0.353553385 : f32
    %93 = vector.broadcast %cst_42 : f32 to vector<4x8x8xf32>
    %94 = arith.mulf %92, %93 : vector<4x8x8xf32>
    %cst_43 = arith.constant dense<0xFF800000> : vector<4x8xf32>
    %95 = vector.multi_reduction <maximumf>, %94, %cst_43 [2] : vector<4x8x8xf32> to vector<4x8xf32>
    %96 = vector.shape_cast %95 : vector<4x8xf32> to vector<4x8x1xf32>
    %97 = vector.broadcast %96 : vector<4x8x1xf32> to vector<4x8x8xf32>
    %98 = arith.subf %94, %97 : vector<4x8x8xf32>
    %99 = math.exp %98 : vector<4x8x8xf32>
    %cst_44 = arith.constant dense<0.000000e+00> : vector<4x8xf32>
    %100 = vector.multi_reduction <add>, %99, %cst_44 [2] : vector<4x8x8xf32> to vector<4x8xf32>
    %101 = vector.shape_cast %100 : vector<4x8xf32> to vector<4x8x1xf32>
    %102 = vector.broadcast %101 : vector<4x8x1xf32> to vector<4x8x8xf32>
    %103 = arith.divf %99, %102 : vector<4x8x8xf32>
    "tpu.trace_start"() <{level = 10 : i32, message = "bqk,bkd->bqd"}> : () -> ()
    %cst_45 = arith.constant dense<0.000000e+00> : vector<4x8x8xf32>
    %104 = tpu.matmul %103, %91, %cst_45 {dimension_numbers = #tpu.dot_dimension_numbers<[2], [1], [1], [2], [0, 0, 0, 1, 1, 2], [0], [0]>} : vector<4x8x8xf32>, vector<4x8x8xf32>, vector<4x8x8xf32> -> vector<4x8x8xf32>
    "tpu.trace_stop"() : () -> ()
    %105 = vector.shape_cast %104 : vector<4x8x8xf32> to vector<32x8xf32>
    %c0_46 = arith.constant 0 : index
    %c16 = arith.constant 16 : index
    %106 = vector.load %arg21[%c0_46, %c16] : memref<32x32xf32, #tpu.memory_space<vmem>>, vector<32x8xf32>
    tpu.vector_store %arg21[%c0_46, %c16], %105 {strides = array<i32>} : memref<32x32xf32, #tpu.memory_space<vmem>>, vector<32x8xf32>,
    %107 = vector.extract_strided_slice %50 {offsets = [0, 0, 24], sizes = [4, 8, 8], strides = [1, 1, 1]} : vector<4x8x32xf32> to vector<4x8x8xf32>
    %108 = vector.extract_strided_slice %51 {offsets = [0, 0, 24], sizes = [4, 8, 8], strides = [1, 1, 1]} : vector<4x8x32xf32> to vector<4x8x8xf32>
    %109 = vector.extract_strided_slice %52 {offsets = [0, 0, 24], sizes = [4, 8, 8], strides = [1, 1, 1]} : vector<4x8x32xf32> to vector<4x8x8xf32>
    "tpu.trace_start"() <{level = 10 : i32, message = "bqd,bkd->bqk"}> : () -> ()
    %cst_47 = arith.constant dense<0.000000e+00> : vector<4x8x8xf32>
    %110 = tpu.matmul %107, %108, %cst_47 {dimension_numbers = #tpu.dot_dimension_numbers<[2], [2], [1], [1], [0, 0, 0, 1, 1, 1], [0], [0]>} : vector<4x8x8xf32>, vector<4x8x8xf32>, vector<4x8x8xf32> -> vector<4x8x8xf32>
    "tpu.trace_stop"() : () -> ()
    %cst_48 = arith.constant 0.353553385 : f32
    %111 = vector.broadcast %cst_48 : f32 to vector<4x8x8xf32>
    %112 = arith.mulf %110, %111 : vector<4x8x8xf32>
    %cst_49 = arith.constant dense<0xFF800000> : vector<4x8xf32>
    %113 = vector.multi_reduction <maximumf>, %112, %cst_49 [2] : vector<4x8x8xf32> to vector<4x8xf32>
    %114 = vector.shape_cast %113 : vector<4x8xf32> to vector<4x8x1xf32>
    %115 = vector.broadcast %114 : vector<4x8x1xf32> to vector<4x8x8xf32>
    %116 = arith.subf %112, %115 : vector<4x8x8xf32>
    %117 = math.exp %116 : vector<4x8x8xf32>
    %cst_50 = arith.constant dense<0.000000e+00> : vector<4x8xf32>
    %118 = vector.multi_reduction <add>, %117, %cst_50 [2] : vector<4x8x8xf32> to vector<4x8xf32>
    %119 = vector.shape_cast %118 : vector<4x8xf32> to vector<4x8x1xf32>
    %120 = vector.broadcast %119 : vector<4x8x1xf32> to vector<4x8x8xf32>
    %121 = arith.divf %117, %120 : vector<4x8x8xf32>
    "tpu.trace_start"() <{level = 10 : i32, message = "bqk,bkd->bqd"}> : () -> ()
    %cst_51 = arith.constant dense<0.000000e+00> : vector<4x8x8xf32>
    %122 = tpu.matmul %121, %109, %cst_51 {dimension_numbers = #tpu.dot_dimension_numbers<[2], [1], [1], [2], [0, 0, 0, 1, 1, 2], [0], [0]>} : vector<4x8x8xf32>, vector<4x8x8xf32>, vector<4x8x8xf32> -> vector<4x8x8xf32>
    "tpu.trace_stop"() : () -> ()
    %123 = vector.shape_cast %122 : vector<4x8x8xf32> to vector<32x8xf32>
    %c0_52 = arith.constant 0 : index
    %c24 = arith.constant 24 : index
    %124 = vector.load %arg21[%c0_52, %c24] : memref<32x32xf32, #tpu.memory_space<vmem>>, vector<32x8xf32>
    tpu.vector_store %arg21[%c0_52, %c24], %123 {strides = array<i32>} : memref<32x32xf32, #tpu.memory_space<vmem>>, vector<32x8xf32>,
    %c0_53 = arith.constant 0 : index
    %c0_54 = arith.constant 0 : index
    %125 = vector.load %arg21[%c0_53, %c0_54] : memref<32x32xf32, #tpu.memory_space<vmem>>, vector<32x32xf32>
    %126 = arith.truncf %125 : vector<32x32xf32> to vector<32x32xbf16>
    %cst_55 = arith.constant dense<0.000000e+00> : vector<32x32xf32>
    %127 = tpu.matmul %126, %23, %cst_55 {dimension_numbers = #tpu.dot_dimension_numbers<[1], [0], [0], [1], [0, 0, 1, 1], [], []>} : vector<32x32xbf16>, vector<32x32xbf16>, vector<32x32xf32> -> vector<32x32xf32>
    %128 = vector.broadcast %26 : vector<1x32xf32> to vector<32x32xf32>
    %129 = arith.addf %127, %128 : vector<32x32xf32>
    %130 = arith.addf %39, %129 : vector<32x32xf32>
    %131 = arith.index_cast %arg1 : i32 to index
    %c0_56 = arith.constant 0 : index
    %c0_57 = arith.constant 0 : index
    %132 = vector.load %arg11[%131, %c0_56, %c0_57] : memref<2x1x32xf32, #tpu.memory_space<vmem>>, vector<1x1x32xf32>
    %133 = vector.shape_cast %132 : vector<1x1x32xf32> to vector<1x32xf32>
    %134 = arith.index_cast %arg1 : i32 to index
    %c0_58 = arith.constant 0 : index
    %c0_59 = arith.constant 0 : index
    %135 = vector.load %arg12[%134, %c0_58, %c0_59] : memref<2x1x32xf32, #tpu.memory_space<vmem>>, vector<1x1x32xf32>
    %136 = vector.shape_cast %135 : vector<1x1x32xf32> to vector<1x32xf32>
    %cst_60 = arith.constant dense<0.000000e+00> : vector<32xf32>
    %137 = vector.multi_reduction <add>, %130, %cst_60 [1] : vector<32x32xf32> to vector<32xf32>
    %138 = vector.shape_cast %137 : vector<32xf32> to vector<32x1xf32>
    %cst_61 = arith.constant 3.200000e+01 : f32
    %139 = vector.broadcast %cst_61 : f32 to vector<32x1xf32>
    %140 = arith.divf %138, %139 : vector<32x1xf32>
    %141 = vector.broadcast %140 : vector<32x1xf32> to vector<32x32xf32>
    %142 = arith.subf %130, %141 : vector<32x32xf32>
    %143 = arith.mulf %142, %142 : vector<32x32xf32>
    %cst_62 = arith.constant dense<0.000000e+00> : vector<32xf32>
    %144 = vector.multi_reduction <add>, %143, %cst_62 [1] : vector<32x32xf32> to vector<32xf32>
    %145 = vector.shape_cast %144 : vector<32xf32> to vector<32x1xf32>
    %cst_63 = arith.constant 3.200000e+01 : f32
    %146 = vector.broadcast %cst_63 : f32 to vector<32x1xf32>
    %147 = arith.divf %145, %146 : vector<32x1xf32>
    %148 = vector.broadcast %140 : vector<32x1xf32> to vector<32x32xf32>
    %149 = arith.subf %130, %148 : vector<32x32xf32>
    %cst_64 = arith.constant 9.99999974E-6 : f32
    %150 = vector.broadcast %cst_64 : f32 to vector<32x1xf32>
    %151 = arith.addf %147, %150 : vector<32x1xf32>
    %152 = math.rsqrt %151 : vector<32x1xf32>
    %153 = vector.broadcast %152 : vector<32x1xf32> to vector<32x32xf32>
    %154 = arith.mulf %149, %153 : vector<32x32xf32>
    %155 = vector.broadcast %133 : vector<1x32xf32> to vector<32x32xf32>
    %156 = arith.mulf %154, %155 : vector<32x32xf32>
    %157 = vector.broadcast %136 : vector<1x32xf32> to vector<32x32xf32>
    %158 = arith.addf %156, %157 : vector<32x32xf32>
    %159 = arith.truncf %158 : vector<32x32xf32> to vector<32x32xbf16>
    %cst_65 = arith.constant dense<0.000000e+00> : vector<32x64xf32>
    %160 = tpu.matmul %159, %29, %cst_65 {dimension_numbers = #tpu.dot_dimension_numbers<[1], [0], [0], [1], [0, 0, 1, 1], [], []>} : vector<32x32xbf16>, vector<32x64xbf16>, vector<32x64xf32> -> vector<32x64xf32>
    %161 = vector.broadcast %32 : vector<1x64xf32> to vector<32x64xf32>
    %162 = arith.addf %160, %161 : vector<32x64xf32>
    %cst_66 = arith.constant 0.000000e+00 : f32
    %163 = vector.broadcast %cst_66 : f32 to vector<32x64xf32>
    %164 = arith.maximumf %162, %163 : vector<32x64xf32>
    %165 = arith.truncf %164 : vector<32x64xf32> to vector<32x64xbf16>
    %cst_67 = arith.constant dense<0.000000e+00> : vector<32x32xf32>
    %166 = tpu.matmul %165, %35, %cst_67 {dimension_numbers = #tpu.dot_dimension_numbers<[1], [0], [0], [1], [0, 0, 1, 1], [], []>} : vector<32x64xbf16>, vector<64x32xbf16>, vector<32x32xf32> -> vector<32x32xf32>
    %167 = vector.broadcast %38 : vector<1x32xf32> to vector<32x32xf32>
    %168 = arith.addf %166, %167 : vector<32x32xf32>
    %169 = arith.addf %158, %168 : vector<32x32xf32>
    %170 = arith.index_cast %arg1 : i32 to index
    %c0_68 = arith.constant 0 : index
    %c0_69 = arith.constant 0 : index
    %171 = vector.load %arg17[%170, %c0_68, %c0_69] : memref<2x1x32xf32, #tpu.memory_space<vmem>>, vector<1x1x32xf32>
    %172 = vector.shape_cast %171 : vector<1x1x32xf32> to vector<1x32xf32>
    %173 = arith.index_cast %arg1 : i32 to index
    %c0_70 = arith.constant 0 : index
    %c0_71 = arith.constant 0 : index
    %174 = vector.load %arg18[%173, %c0_70, %c0_71] : memref<2x1x32xf32, #tpu.memory_space<vmem>>, vector<1x1x32xf32>
    %175 = vector.shape_cast %174 : vector<1x1x32xf32> to vector<1x32xf32>
    %cst_72 = arith.constant dense<0.000000e+00> : vector<32xf32>
    %176 = vector.multi_reduction <add>, %169, %cst_72 [1] : vector<32x32xf32> to vector<32xf32>
    %177 = vector.shape_cast %176 : vector<32xf32> to vector<32x1xf32>
    %cst_73 = arith.constant 3.200000e+01 : f32
    %178 = vector.broadcast %cst_73 : f32 to vector<32x1xf32>
    %179 = arith.divf %177, %178 : vector<32x1xf32>
    %180 = vector.broadcast %179 : vector<32x1xf32> to vector<32x32xf32>
    %181 = arith.subf %169, %180 : vector<32x32xf32>
    %182 = arith.mulf %181, %181 : vector<32x32xf32>
    %cst_74 = arith.constant dense<0.000000e+00> : vector<32xf32>
    %183 = vector.multi_reduction <add>, %182, %cst_74 [1] : vector<32x32xf32> to vector<32xf32>
    %184 = vector.shape_cast %183 : vector<32xf32> to vector<32x1xf32>
    %cst_75 = arith.constant 3.200000e+01 : f32
    %185 = vector.broadcast %cst_75 : f32 to vector<32x1xf32>
    %186 = arith.divf %184, %185 : vector<32x1xf32>
    %187 = vector.broadcast %179 : vector<32x1xf32> to vector<32x32xf32>
    %188 = arith.subf %169, %187 : vector<32x32xf32>
    %cst_76 = arith.constant 9.99999974E-6 : f32
    %189 = vector.broadcast %cst_76 : f32 to vector<32x1xf32>
    %190 = arith.addf %186, %189 : vector<32x1xf32>
    %191 = math.rsqrt %190 : vector<32x1xf32>
    %192 = vector.broadcast %191 : vector<32x1xf32> to vector<32x32xf32>
    %193 = arith.mulf %188, %192 : vector<32x32xf32>
    %194 = vector.broadcast %172 : vector<1x32xf32> to vector<32x32xf32>
    %195 = arith.mulf %193, %194 : vector<32x32xf32>
    %196 = vector.broadcast %175 : vector<1x32xf32> to vector<32x32xf32>
    %197 = arith.addf %195, %196 : vector<32x32xf32>
    %c0_77 = arith.constant 0 : index
    %c0_78 = arith.constant 0 : index
    %198 = vector.load %arg20[%c0_77, %c0_78] : memref<32x32xf32, #tpu.memory_space<vmem>>, vector<32x32xf32>
    tpu.vector_store %arg20[%c0_77, %c0_78], %197 {strides = array<i32>} : memref<32x32xf32, #tpu.memory_space<vmem>>, vector<32x32xf32>,
    %c1_i32 = arith.constant 1 : i32
    %199 = arith.cmpi eq, %arg1, %c1_i32 : i32
    %200 = arith.extui %199 : i1 to i32
    %c0_i32_79 = arith.constant 0 : i32
    %201 = arith.cmpi ne, %200, %c0_i32_79 : i32
    scf.if %201 {
      %202 = vector.shape_cast %197 : vector<32x32xf32> to vector<4x8x32xf32>
      %c0_80 = arith.constant 0 : index
      %c0_81 = arith.constant 0 : index
      %c0_82 = arith.constant 0 : index
      %203 = vector.load %arg19[%c0_80, %c0_81, %c0_82] : memref<4x8x32xf32, #tpu.memory_space<vmem>>, vector<4x8x32xf32>
      tpu.vector_store %arg19[%c0_80, %c0_81, %c0_82], %202 {strides = array<i32>} : memref<4x8x32xf32, #tpu.memory_space<vmem>>, vector<4x8x32xf32>,
    } else {
    }
    return
  }
  func.func @transform_0(%arg0: i32, %arg1: i32) -> (i32, i32, i32) {
    %c0_i32 = arith.constant 0 : i32
    %c0_i32_0 = arith.constant 0 : i32
    %c0_i32_1 = arith.constant 0 : i32
    return %arg0, %c0_i32, %c0_i32_0 : i32, i32, i32
  }
  func.func @transform_1(%arg0: i32, %arg1: i32) -> (i32, i32, i32) {
    %c0_i32 = arith.constant 0 : i32
    %c0_i32_0 = arith.constant 0 : i32
    %c0_i32_1 = arith.constant 0 : i32
    %c0_i32_2 = arith.constant 0 : i32
    return %c0_i32, %c0_i32_0, %c0_i32_1 : i32, i32, i32
  }
  func.func @transform_2(%arg0: i32, %arg1: i32) -> (i32, i32, i32) {
    %c0_i32 = arith.constant 0 : i32
    %c0_i32_0 = arith.constant 0 : i32
    %c0_i32_1 = arith.constant 0 : i32
    %c0_i32_2 = arith.constant 0 : i32
    return %c0_i32, %c0_i32_0, %c0_i32_1 : i32, i32, i32
  }
  func.func @transform_3(%arg0: i32, %arg1: i32) -> (i32, i32, i32) {
    %c0_i32 = arith.constant 0 : i32
    %c0_i32_0 = arith.constant 0 : i32
    %c0_i32_1 = arith.constant 0 : i32
    %c0_i32_2 = arith.constant 0 : i32
    return %c0_i32, %c0_i32_0, %c0_i32_1 : i32, i32, i32
  }
  func.func @transform_4(%arg0: i32, %arg1: i32) -> (i32, i32, i32) {
    %c0_i32 = arith.constant 0 : i32
    %c0_i32_0 = arith.constant 0 : i32
    %c0_i32_1 = arith.constant 0 : i32
    %c0_i32_2 = arith.constant 0 : i32
    return %c0_i32, %c0_i32_0, %c0_i32_1 : i32, i32, i32
  }
  func.func @transform_5(%arg0: i32, %arg1: i32) -> (i32, i32, i32) {
    %c0_i32 = arith.constant 0 : i32
    %c0_i32_0 = arith.constant 0 : i32
    %c0_i32_1 = arith.constant 0 : i32
    %c0_i32_2 = arith.constant 0 : i32
    return %c0_i32, %c0_i32_0, %c0_i32_1 : i32, i32, i32
  }
  func.func @transform_6(%arg0: i32, %arg1: i32) -> (i32, i32, i32) {
    %c0_i32 = arith.constant 0 : i32
    %c0_i32_0 = arith.constant 0 : i32
    %c0_i32_1 = arith.constant 0 : i32
    %c0_i32_2 = arith.constant 0 : i32
    return %c0_i32, %c0_i32_0, %c0_i32_1 : i32, i32, i32
  }
  func.func @transform_7(%arg0: i32, %arg1: i32) -> (i32, i32, i32) {
    %c0_i32 = arith.constant 0 : i32
    %c0_i32_0 = arith.constant 0 : i32
    %c0_i32_1 = arith.constant 0 : i32
    %c0_i32_2 = arith.constant 0 : i32
    return %c0_i32, %c0_i32_0, %c0_i32_1 : i32, i32, i32
  }
  func.func @transform_8(%arg0: i32, %arg1: i32) -> (i32, i32, i32) {
    %c0_i32 = arith.constant 0 : i32
    %c0_i32_0 = arith.constant 0 : i32
    %c0_i32_1 = arith.constant 0 : i32
    %c0_i32_2 = arith.constant 0 : i32
    return %c0_i32, %c0_i32_0, %c0_i32_1 : i32, i32, i32
  }
  func.func @transform_9(%arg0: i32, %arg1: i32) -> (i32, i32, i32) {
    %c0_i32 = arith.constant 0 : i32
    %c0_i32_0 = arith.constant 0 : i32
    %c0_i32_1 = arith.constant 0 : i32
    %c0_i32_2 = arith.constant 0 : i32
    return %c0_i32, %c0_i32_0, %c0_i32_1 : i32, i32, i32
  }
  func.func @transform_10(%arg0: i32, %arg1: i32) -> (i32, i32, i32) {
    %c0_i32 = arith.constant 0 : i32
    %c0_i32_0 = arith.constant 0 : i32
    %c0_i32_1 = arith.constant 0 : i32
    %c0_i32_2 = arith.constant 0 : i32
    return %c0_i32, %c0_i32_0, %c0_i32_1 : i32, i32, i32
  }
  func.func @transform_11(%arg0: i32, %arg1: i32) -> (i32, i32, i32) {
    %c0_i32 = arith.constant 0 : i32
    %c0_i32_0 = arith.constant 0 : i32
    %c0_i32_1 = arith.constant 0 : i32
    %c0_i32_2 = arith.constant 0 : i32
    return %c0_i32, %c0_i32_0, %c0_i32_1 : i32, i32, i32
  }
  func.func @transform_12(%arg0: i32, %arg1: i32) -> (i32, i32, i32) {
    %c0_i32 = arith.constant 0 : i32
    %c0_i32_0 = arith.constant 0 : i32
    %c0_i32_1 = arith.constant 0 : i32
    %c0_i32_2 = arith.constant 0 : i32
    return %c0_i32, %c0_i32_0, %c0_i32_1 : i32, i32, i32
  }
  func.func @transform_13(%arg0: i32, %arg1: i32) -> (i32, i32, i32) {
    %c0_i32 = arith.constant 0 : i32
    %c0_i32_0 = arith.constant 0 : i32
    %c0_i32_1 = arith.constant 0 : i32
    %c0_i32_2 = arith.constant 0 : i32
    return %c0_i32, %c0_i32_0, %c0_i32_1 : i32, i32, i32
  }
  func.func @transform_14(%arg0: i32, %arg1: i32) -> (i32, i32, i32) {
    %c0_i32 = arith.constant 0 : i32
    %c0_i32_0 = arith.constant 0 : i32
    %c0_i32_1 = arith.constant 0 : i32
    %c0_i32_2 = arith.constant 0 : i32
    return %c0_i32, %c0_i32_0, %c0_i32_1 : i32, i32, i32
  }
  func.func @transform_15(%arg0: i32, %arg1: i32) -> (i32, i32, i32) {
    %c0_i32 = arith.constant 0 : i32
    %c0_i32_0 = arith.constant 0 : i32
    %c0_i32_1 = arith.constant 0 : i32
    %c0_i32_2 = arith.constant 0 : i32
    return %c0_i32, %c0_i32_0, %c0_i32_1 : i32, i32, i32
  }
  func.func @transform_16(%arg0: i32, %arg1: i32) -> (i32, i32, i32) {
    %c0_i32 = arith.constant 0 : i32
    %c0_i32_0 = arith.constant 0 : i32
    %c0_i32_1 = arith.constant 0 : i32
    %c0_i32_2 = arith.constant 0 : i32
    return %c0_i32, %c0_i32_0, %c0_i32_1 : i32, i32, i32
  }
  func.func @transform_17(%arg0: i32, %arg1: i32) -> (i32, i32, i32) {
    %c0_i32 = arith.constant 0 : i32
    %c0_i32_0 = arith.constant 0 : i32
    %c0_i32_1 = arith.constant 0 : i32
    return %arg0, %c0_i32, %c0_i32_0 : i32, i32, i32
  }
}

</mosaic_0001>

<llo_original>
// kernel: tpu_custom_call.1
$region0: #{tpu_custom_call.1}
  #allocation0 [shape = 'u32[]', space=smem, size = 0x4, offset = 0x4, fixed_abs, tag = 'smem constant byte address 0x4 - core index']
  #allocation1 [shape = 'u32[72,128]{1,0:T(1,128)}', space=vmem, size = 0x9000, scoped, tag = 'internal scratch']
  #allocation2 [shape = 'f32[32,32]{1,0:T(8,128)}', space=vmem, size = 0x4000, scoped, tag = 'scratch operand']
  #allocation3 [shape = 'f32[32,32]{1,0:T(8,128)}', space=vmem, size = 0x4000, scoped, tag = 'scratch operand']
  %s0 = inlined_call_operand.vmem [shape: f32[8,8,32], index: 0, kind: input, shape index: {}]
  %s1 = inlined_call_operand.vmem [shape: bf16[2,32,32], index: 1, kind: input, shape index: {}]
  %s2 = inlined_call_operand.hbm [shape: f32[2,1,32], index: 2, kind: input, shape index: {}]
  %s3 = inlined_call_operand.hbm [shape: bf16[2,32,32], index: 3, kind: input, shape index: {}]
  %s4 = inlined_call_operand.vmem [shape: f32[2,1,32], index: 4, kind: input, shape index: {}]
  %s5 = inlined_call_operand.hbm [shape: bf16[2,32,32], index: 5, kind: input, shape index: {}]
  %s6 = inlined_call_operand.vmem [shape: f32[2,1,32], index: 6, kind: input, shape index: {}]
  %s7 = inlined_call_operand.hbm [shape: bf16[2,32,32], index: 7, kind: input, shape index: {}]
  %s8 = inlined_call_operand.vmem [shape: f32[2,1,32], index: 8, kind: input, shape index: {}]
  %s9 = inlined_call_operand.hbm [shape: f32[2,1,32], index: 9, kind: input, shape index: {}]
  %s10 = inlined_call_operand.vmem [shape: f32[2,1,32], index: 10, kind: input, shape index: {}]
  %s11 = inlined_call_operand.hbm [shape: bf16[2,32,64], index: 11, kind: input, shape index: {}]
  %s12 = inlined_call_operand.vmem [shape: f32[2,1,64], index: 12, kind: input, shape index: {}]
  %s13 = inlined_call_operand.vmem [shape: bf16[2,64,32], index: 13, kind: input, shape index: {}]
  %s14 = inlined_call_operand.vmem [shape: f32[2,1,32], index: 14, kind: input, shape index: {}]
  %s15 = inlined_call_operand.hbm [shape: f32[2,1,32], index: 15, kind: input, shape index: {}]
  %s16 = inlined_call_operand.vmem [shape: f32[2,1,32], index: 16, kind: input, shape index: {}]
  %s17 = inlined_call_operand.hbm [shape: f32[8,8,32], index: 17, kind: output, shape index: {}]
  %s18 = sld [smem:[#allocation0]]
  $region137: #{tpu_custom_call.1} parent=0
    _
  %s20 = ssub.s32 1, %s18
  %s21 = scalar_select 0, %s20, %s18
  $region1: #{tpu_custom_call.1} parent=0
    #allocation4 [shape = 'u8[1024]{0}', space=vmem, size = 0x400, scoped, tag = 'input window, operand 2, single buffered']
    #allocation5 [shape = 's32[2]{0}', space=sflag, size = 0x8, scoped, tag = 'scoped memory for tpu_custom_call.1']
    #allocation6 [shape = 's32[2]{0}', space=sflag, size = 0x8, scoped, tag = 'scoped memory for tpu_custom_call.1']
    #allocation7 [shape = 'u8[16384]{0}', space=vmem, size = 0x4000, scoped, tag = 'input window, operand 3, single buffered']
    #allocation8 [shape = 's32[1]{0}', space=sflag, size = 0x4, scoped, tag = 'scoped memory for tpu_custom_call.1']
    #allocation9 [shape = 'u8[16384]{0}', space=vmem, size = 0x4000, scoped, tag = 'input window, operand 5, single buffered']
    #allocation10 [shape = 'u8[16384]{0}', space=vmem, size = 0x4000, scoped, tag = 'input window, operand 7, single buffered']
    #allocation11 [shape = 's32[1]{0}', space=sflag, size = 0x4, scoped, tag = 'scoped memory for tpu_custom_call.1']
    #allocation12 [shape = 'u8[1024]{0}', space=vmem, size = 0x400, scoped, tag = 'input window, operand 9, single buffered']
    #allocation13 [shape = 'u8[16384]{0}', space=vmem, size = 0x4000, scoped, tag = 'input window, operand 11, single buffered']
    #allocation14 [shape = 's32[1]{0}', space=sflag, size = 0x4, scoped, tag = 'scoped memory for tpu_custom_call.1']
    #allocation15 [shape = 'u8[1024]{0}', space=vmem, size = 0x400, scoped, tag = 'input window, operand 15, single buffered']
    #allocation16 [shape = 'u8[32768]{0}', space=vmem, size = 0x8000, scoped, tag = 'output window, operand 0']
    %22 = vsyncpa [#allocation5], 0
    %23 = vsyncpa [#allocation8], 0
    %24 = vsyncpa [#allocation11], 0
    %25 = vsyncpa [#allocation14], 0
    %26 = vsyncpa [#allocation6], 0
    %s27 = scalar_lea.sflag [#allocation6], 1
    %28 = vsyncpa %s27, 0
    loop: start=0, step=1, limit=6
    $region2: #{tpu_custom_call.1} parent=1 // loop_pre_header
      _
    $region3: #{tpu_custom_call.1} parent=1 // loop_header
      %s30 = sphi 0, %s34
      %p31 = scmp.ge.s32.totalorder %s30, 6
      %s37 = sphi 0, %s49
      %s38 = sphi 0, %s45
      %s39 = sphi 0, %s37
      %s40 = sphi 0, %s38
      %s41 = sphi 0, %s39
      %s42 = sphi 0, %s40
      %s52 = sphi 0, %s54
      %s55 = sphi 0, %s52
      %s56 = sphi 0, %s55
      %s72 = sphi 0, %s56
      %s76 = sphi 0, %s76
      %s78 = sphi 0, %s76
      %s79 = sphi 0, %s78
      %s93 = sphi 0, %s79
      %s97 = sphi 0, %s97
      %s99 = sphi 0, %s97
      %s100 = sphi 0, %s99
      %s114 = sphi 0, %s100
      %s118 = sphi 0, %s118
      %s120 = sphi 0, %s118
      %s121 = sphi 0, %s120
      %s135 = sphi 0, %s121
      %s139 = sphi 0, %s139
      %s141 = sphi 0, %s139
      %s142 = sphi 0, %s141
      %s156 = sphi 0, %s142
      %s160 = sphi 0, %s160
      %s162 = sphi 0, %s160
      %s163 = sphi 0, %s162
      %s177 = sphi 0, %s163
      %s181 = sphi 0, %s181
      %s183 = sphi 0, %s181
      %s184 = sphi 0, %s183
      %s198 = sphi 0, %s184
      %s202 = sphi 0, %s202
      %s204 = sphi 0, %s202
      %s205 = sphi 0, %s204
      %s219 = sphi 0, %s205
      %s223 = sphi 0, %s223
      %s225 = sphi 0, %s223
      %s226 = sphi 0, %s225
      %s240 = sphi 0, %s226
      %s244 = sphi 0, %s244
      %s246 = sphi 0, %s244
      %s247 = sphi 0, %s246
      %s261 = sphi 0, %s247
      %s265 = sphi 0, %s265
      %s267 = sphi 0, %s265
      %s268 = sphi 0, %s267
      %s282 = sphi 0, %s268
      %s286 = sphi 0, %s286
      %s288 = sphi 0, %s286
      %s289 = sphi 0, %s288
      %s303 = sphi 0, %s289
      %s307 = sphi 0, %s307
      %s309 = sphi 0, %s307
      %s310 = sphi 0, %s309
      %s324 = sphi 0, %s310
      %s328 = sphi 0, %s328
      %s330 = sphi 0, %s328
      %s331 = sphi 0, %s330
      %s345 = sphi 0, %s331
      %s349 = sphi 0, %s349
      %s351 = sphi 0, %s349
      %s352 = sphi 0, %s351
      %s366 = sphi 0, %s352
      %s370 = sphi 0, %s370
      %s372 = sphi 0, %s370
      %s373 = sphi 0, %s372
      %s387 = sphi 0, %s373
      %s391 = sphi 0, %s391
      %s393 = sphi 0, %s391
      %s394 = sphi 0, %s393
      %s408 = sphi 0, %s394
      %s414 = sphi 0, %s416
      %s417 = sphi 0, %s414
      %s418 = sphi 0, %s417
      %s434 = sphi 0, %s418
    $region4: #{tpu_custom_call.1} parent=1 // loop_header_branch
      %33 = sbr.rel (%p31) target = $region8
    $region5: #{tpu_custom_call.1} parent=1 // loop_body
      %s35 = ssub.s32 %s30, 1
      %s36 = ssub.s32 %s30, 2
      %s43 = sadd.s32 1, %s38
      %p44 = scmp.ge.s32.totalorder %s43, 2
      %s45 = scalar_select %p44, 0, %s43
      %s46 = sadd.s32 1, %s37
      %s47 = scalar_select %p44, %s46, %s37
      %p48 = scmp.ge.s32.totalorder %s47, 2
      %s49 = scalar_select %p48, 0, %s47
      %s50 = ssub.s32 %s37, %s49
      %p51 = scmp.eq.s32.totalorder %s50, 0
      %s53 = sadd.s32 %s52, 1
      %s54 = scalar_select %p51, %s52, %s53
      %p57 = pneg %p51
      %p58 = scmp.eq.s32.totalorder %s30, 3
      %p59 = por %p57, %p58
      %p60 = scmp.ne.s32.totalorder %s52, %s55
      %p61 = scmp.eq.s32.totalorder %s30, 0
      %p62 = por %p60, %p61
      %p63 = scmp.ne.s32.totalorder %s52, %s55
      %p64 = scmp.eq.s32.totalorder %s35, 3
      %p65 = por %p63, %p64
      %p66 = scmp.ne.s32.totalorder %s55, %s56
      %p67 = scmp.eq.s32.totalorder %s35, 0
      %p68 = por %p66, %p67
      %p69 = scmp.ne.s32.totalorder %s55, %s56
      %p70 = scmp.eq.s32.totalorder %s36, 3
      %p71 = por %p69, %p70
      %p73 = scmp.ne.s32.totalorder %s56, %s72
      %p74 = scmp.eq.s32.totalorder %s36, 0
      %p75 = por %p73, %p74
      %s77 = sadd.s32 %s76, 1
      %p80 = scmp.eq.s32.totalorder %s30, 3
      %p81 = scmp.ne.s32.totalorder %s76, %s78
      %p82 = scmp.eq.s32.totalorder %s30, 0
      %p83 = por %p81, %p82
      %p84 = scmp.ne.s32.totalorder %s76, %s78
      %p85 = scmp.eq.s32.totalorder %s35, 3
      %p86 = por %p84, %p85
      %p87 = scmp.ne.s32.totalorder %s78, %s79
      %p88 = scmp.eq.s32.totalorder %s35, 0
      %p89 = por %p87, %p88
      %p90 = scmp.ne.s32.totalorder %s78, %s79
      %p91 = scmp.eq.s32.totalorder %s36, 3
      %p92 = por %p90, %p91
      %p94 = scmp.ne.s32.totalorder %s79, %s93
      %p95 = scmp.eq.s32.totalorder %s36, 0
      %p96 = por %p94, %p95
      %s98 = sadd.s32 %s97, 1
      %p101 = scmp.eq.s32.totalorder %s30, 3
      %p102 = scmp.ne.s32.totalorder %s97, %s99
      %p103 = scmp.eq.s32.totalorder %s30, 0
      %p104 = por %p102, %p103
      %p105 = scmp.ne.s32.totalorder %s97, %s99
      %p106 = scmp.eq.s32.totalorder %s35, 3
      %p107 = por %p105, %p106
      %p108 = scmp.ne.s32.totalorder %s99, %s100
      %p109 = scmp.eq.s32.totalorder %s35, 0
      %p110 = por %p108, %p109
      %p111 = scmp.ne.s32.totalorder %s99, %s100
      %p112 = scmp.eq.s32.totalorder %s36, 3
      %p113 = por %p111, %p112
      %p115 = scmp.ne.s32.totalorder %s100, %s114
      %p116 = scmp.eq.s32.totalorder %s36, 0
      %p117 = por %p115, %p116
      %s119 = sadd.s32 %s118, 1
      %p122 = scmp.eq.s32.totalorder %s30, 3
      %p123 = scmp.ne.s32.totalorder %s118, %s120
      %p124 = scmp.eq.s32.totalorder %s30, 0
      %p125 = por %p123, %p124
      %p126 = scmp.ne.s32.totalorder %s118, %s120
      %p127 = scmp.eq.s32.totalorder %s35, 3
      %p128 = por %p126, %p127
      %p129 = scmp.ne.s32.totalorder %s120, %s121
      %p130 = scmp.eq.s32.totalorder %s35, 0
      %p131 = por %p129, %p130
      %p132 = scmp.ne.s32.totalorder %s120, %s121
      %p133 = scmp.eq.s32.totalorder %s36, 3
      %p134 = por %p132, %p133
      %p136 = scmp.ne.s32.totalorder %s121, %s135
      %p137 = scmp.eq.s32.totalorder %s36, 0
      %p138 = por %p136, %p137
      %s140 = sadd.s32 %s139, 1
      %p143 = scmp.eq.s32.totalorder %s30, 3
      %p144 = scmp.ne.s32.totalorder %s139, %s141
      %p145 = scmp.eq.s32.totalorder %s30, 0
      %p146 = por %p144, %p145
      %p147 = scmp.ne.s32.totalorder %s139, %s141
      %p148 = scmp.eq.s32.totalorder %s35, 3
      %p149 = por %p147, %p148
      %p150 = scmp.ne.s32.totalorder %s141, %s142
      %p151 = scmp.eq.s32.totalorder %s35, 0
      %p152 = por %p150, %p151
      %p153 = scmp.ne.s32.totalorder %s141, %s142
      %p154 = scmp.eq.s32.totalorder %s36, 3
      %p155 = por %p153, %p154
      %p157 = scmp.ne.s32.totalorder %s142, %s156
      %p158 = scmp.eq.s32.totalorder %s36, 0
      %p159 = por %p157, %p158
      %s161 = sadd.s32 %s160, 1
      %p164 = scmp.eq.s32.totalorder %s30, 3
      %p165 = scmp.ne.s32.totalorder %s160, %s162
      %p166 = scmp.eq.s32.totalorder %s30, 0
      %p167 = por %p165, %p166
      %p168 = scmp.ne.s32.totalorder %s160, %s162
      %p169 = scmp.eq.s32.totalorder %s35, 3
      %p170 = por %p168, %p169
      %p171 = scmp.ne.s32.totalorder %s162, %s163
      %p172 = scmp.eq.s32.totalorder %s35, 0
      %p173 = por %p171, %p172
      %p174 = scmp.ne.s32.totalorder %s162, %s163
      %p175 = scmp.eq.s32.totalorder %s36, 3
      %p176 = por %p174, %p175
      %p178 = scmp.ne.s32.totalorder %s163, %s177
      %p179 = scmp.eq.s32.totalorder %s36, 0
      %p180 = por %p178, %p179
      %s182 = sadd.s32 %s181, 1
      %p185 = scmp.eq.s32.totalorder %s30, 3
      %p186 = scmp.ne.s32.totalorder %s181, %s183
      %p187 = scmp.eq.s32.totalorder %s30, 0
      %p188 = por %p186, %p187
      %p189 = scmp.ne.s32.totalorder %s181, %s183
      %p190 = scmp.eq.s32.totalorder %s35, 3
      %p191 = por %p189, %p190
      %p192 = scmp.ne.s32.totalorder %s183, %s184
      %p193 = scmp.eq.s32.totalorder %s35, 0
      %p194 = por %p192, %p193
      %p195 = scmp.ne.s32.totalorder %s183, %s184
      %p196 = scmp.eq.s32.totalorder %s36, 3
      %p197 = por %p195, %p196
      %p199 = scmp.ne.s32.totalorder %s184, %s198
      %p200 = scmp.eq.s32.totalorder %s36, 0
      %p201 = por %p199, %p200
      %s203 = sadd.s32 %s202, 1
      %p206 = scmp.eq.s32.totalorder %s30, 3
      %p207 = scmp.ne.s32.totalorder %s202, %s204
      %p208 = scmp.eq.s32.totalorder %s30, 0
      %p209 = por %p207, %p208
      %p210 = scmp.ne.s32.totalorder %s202, %s204
      %p211 = scmp.eq.s32.totalorder %s35, 3
      %p212 = por %p210, %p211
      %p213 = scmp.ne.s32.totalorder %s204, %s205
      %p214 = scmp.eq.s32.totalorder %s35, 0
      %p215 = por %p213, %p214
      %p216 = scmp.ne.s32.totalorder %s204, %s205
      %p217 = scmp.eq.s32.totalorder %s36, 3
      %p218 = por %p216, %p217
      %p220 = scmp.ne.s32.totalorder %s205, %s219
      %p221 = scmp.eq.s32.totalorder %s36, 0
      %p222 = por %p220, %p221
      %s224 = sadd.s32 %s223, 1
      %p227 = scmp.eq.s32.totalorder %s30, 3
      %p228 = scmp.ne.s32.totalorder %s223, %s225
      %p229 = scmp.eq.s32.totalorder %s30, 0
      %p230 = por %p228, %p229
      %p231 = scmp.ne.s32.totalorder %s223, %s225
      %p232 = scmp.eq.s32.totalorder %s35, 3
      %p233 = por %p231, %p232
      %p234 = scmp.ne.s32.totalorder %s225, %s226
      %p235 = scmp.eq.s32.totalorder %s35, 0
      %p236 = por %p234, %p235
      %p237 = scmp.ne.s32.totalorder %s225, %s226
      %p238 = scmp.eq.s32.totalorder %s36, 3
      %p239 = por %p237, %p238
      %p241 = scmp.ne.s32.totalorder %s226, %s240
      %p242 = scmp.eq.s32.totalorder %s36, 0
      %p243 = por %p241, %p242
      %s245 = sadd.s32 %s244, 1
      %p248 = scmp.eq.s32.totalorder %s30, 3
      %p249 = scmp.ne.s32.totalorder %s244, %s246
      %p250 = scmp.eq.s32.totalorder %s30, 0
      %p251 = por %p249, %p250
      %p252 = scmp.ne.s32.totalorder %s244, %s246
      %p253 = scmp.eq.s32.totalorder %s35, 3
      %p254 = por %p252, %p253
      %p255 = scmp.ne.s32.totalorder %s246, %s247
      %p256 = scmp.eq.s32.totalorder %s35, 0
      %p257 = por %p255, %p256
      %p258 = scmp.ne.s32.totalorder %s246, %s247
      %p259 = scmp.eq.s32.totalorder %s36, 3
      %p260 = por %p258, %p259
      %p262 = scmp.ne.s32.totalorder %s247, %s261
      %p263 = scmp.eq.s32.totalorder %s36, 0
      %p264 = por %p262, %p263
      %s266 = sadd.s32 %s265, 1
      %p269 = scmp.eq.s32.totalorder %s30, 3
      %p270 = scmp.ne.s32.totalorder %s265, %s267
      %p271 = scmp.eq.s32.totalorder %s30, 0
      %p272 = por %p270, %p271
      %p273 = scmp.ne.s32.totalorder %s265, %s267
      %p274 = scmp.eq.s32.totalorder %s35, 3
      %p275 = por %p273, %p274
      %p276 = scmp.ne.s32.totalorder %s267, %s268
      %p277 = scmp.eq.s32.totalorder %s35, 0
      %p278 = por %p276, %p277
      %p279 = scmp.ne.s32.totalorder %s267, %s268
      %p280 = scmp.eq.s32.totalorder %s36, 3
      %p281 = por %p279, %p280
      %p283 = scmp.ne.s32.totalorder %s268, %s282
      %p284 = scmp.eq.s32.totalorder %s36, 0
      %p285 = por %p283, %p284
      %s287 = sadd.s32 %s286, 1
      %p290 = scmp.eq.s32.totalorder %s30, 3
      %p291 = scmp.ne.s32.totalorder %s286, %s288
      %p292 = scmp.eq.s32.totalorder %s30, 0
      %p293 = por %p291, %p292
      %p294 = scmp.ne.s32.totalorder %s286, %s288
      %p295 = scmp.eq.s32.totalorder %s35, 3
      %p296 = por %p294, %p295
      %p297 = scmp.ne.s32.totalorder %s288, %s289
      %p298 = scmp.eq.s32.totalorder %s35, 0
      %p299 = por %p297, %p298
      %p300 = scmp.ne.s32.totalorder %s288, %s289
      %p301 = scmp.eq.s32.totalorder %s36, 3
      %p302 = por %p300, %p301
      %p304 = scmp.ne.s32.totalorder %s289, %s303
      %p305 = scmp.eq.s32.totalorder %s36, 0
      %p306 = por %p304, %p305
      %s308 = sadd.s32 %s307, 1
      %p311 = scmp.eq.s32.totalorder %s30, 3
      %p312 = scmp.ne.s32.totalorder %s307, %s309
      %p313 = scmp.eq.s32.totalorder %s30, 0
      %p314 = por %p312, %p313
      %p315 = scmp.ne.s32.totalorder %s307, %s309
      %p316 = scmp.eq.s32.totalorder %s35, 3
      %p317 = por %p315, %p316
      %p318 = scmp.ne.s32.totalorder %s309, %s310
      %p319 = scmp.eq.s32.totalorder %s35, 0
      %p320 = por %p318, %p319
      %p321 = scmp.ne.s32.totalorder %s309, %s310
      %p322 = scmp.eq.s32.totalorder %s36, 3
      %p323 = por %p321, %p322
      %p325 = scmp.ne.s32.totalorder %s310, %s324
      %p326 = scmp.eq.s32.totalorder %s36, 0
      %p327 = por %p325, %p326
      %s329 = sadd.s32 %s328, 1
      %p332 = scmp.eq.s32.totalorder %s30, 3
      %p333 = scmp.ne.s32.totalorder %s328, %s330
      %p334 = scmp.eq.s32.totalorder %s30, 0
      %p335 = por %p333, %p334
      %p336 = scmp.ne.s32.totalorder %s328, %s330
      %p337 = scmp.eq.s32.totalorder %s35, 3
      %p338 = por %p336, %p337
      %p339 = scmp.ne.s32.totalorder %s330, %s331
      %p340 = scmp.eq.s32.totalorder %s35, 0
      %p341 = por %p339, %p340
      %p342 = scmp.ne.s32.totalorder %s330, %s331
      %p343 = scmp.eq.s32.totalorder %s36, 3
      %p344 = por %p342, %p343
      %p346 = scmp.ne.s32.totalorder %s331, %s345
      %p347 = scmp.eq.s32.totalorder %s36, 0
      %p348 = por %p346, %p347
      %s350 = sadd.s32 %s349, 1
      %p353 = scmp.eq.s32.totalorder %s30, 3
      %p354 = scmp.ne.s32.totalorder %s349, %s351
      %p355 = scmp.eq.s32.totalorder %s30, 0
      %p356 = por %p354, %p355
      %p357 = scmp.ne.s32.totalorder %s349, %s351
      %p358 = scmp.eq.s32.totalorder %s35, 3
      %p359 = por %p357, %p358
      %p360 = scmp.ne.s32.totalorder %s351, %s352
      %p361 = scmp.eq.s32.totalorder %s35, 0
      %p362 = por %p360, %p361
      %p363 = scmp.ne.s32.totalorder %s351, %s352
      %p364 = scmp.eq.s32.totalorder %s36, 3
      %p365 = por %p363, %p364
      %p367 = scmp.ne.s32.totalorder %s352, %s366
      %p368 = scmp.eq.s32.totalorder %s36, 0
      %p369 = por %p367, %p368
      %s371 = sadd.s32 %s370, 1
      %p374 = scmp.eq.s32.totalorder %s30, 3
      %p375 = scmp.ne.s32.totalorder %s370, %s372
      %p376 = scmp.eq.s32.totalorder %s30, 0
      %p377 = por %p375, %p376
      %p378 = scmp.ne.s32.totalorder %s370, %s372
      %p379 = scmp.eq.s32.totalorder %s35, 3
      %p380 = por %p378, %p379
      %p381 = scmp.ne.s32.totalorder %s372, %s373
      %p382 = scmp.eq.s32.totalorder %s35, 0
      %p383 = por %p381, %p382
      %p384 = scmp.ne.s32.totalorder %s372, %s373
      %p385 = scmp.eq.s32.totalorder %s36, 3
      %p386 = por %p384, %p385
      %p388 = scmp.ne.s32.totalorder %s373, %s387
      %p389 = scmp.eq.s32.totalorder %s36, 0
      %p390 = por %p388, %p389
      %s392 = sadd.s32 %s391, 1
      %p395 = scmp.eq.s32.totalorder %s30, 3
      %p396 = scmp.ne.s32.totalorder %s391, %s393
      %p397 = scmp.eq.s32.totalorder %s30, 0
      %p398 = por %p396, %p397
      %p399 = scmp.ne.s32.totalorder %s391, %s393
      %p400 = scmp.eq.s32.totalorder %s35, 3
      %p401 = por %p399, %p400
      %p402 = scmp.ne.s32.totalorder %s393, %s394
      %p403 = scmp.eq.s32.totalorder %s35, 0
      %p404 = por %p402, %p403
      %p405 = scmp.ne.s32.totalorder %s393, %s394
      %p406 = scmp.eq.s32.totalorder %s36, 3
      %p407 = por %p405, %p406
      %p409 = scmp.ne.s32.totalorder %s394, %s408
      %p410 = scmp.eq.s32.totalorder %s36, 0
      %p411 = por %p409, %p410
      %s412 = ssub.s32 %s37, %s49
      %p413 = scmp.eq.s32.totalorder %s412, 0
      %s415 = sadd.s32 %s414, 1
      %s416 = scalar_select %p413, %s414, %s415
      %p419 = pneg %p413
      %p420 = scmp.eq.s32.totalorder %s30, 3
      %p421 = por %p419, %p420
      %p422 = scmp.ne.s32.totalorder %s414, %s417
      %p423 = scmp.eq.s32.totalorder %s30, 0
      %p424 = por %p422, %p423
      %p425 = scmp.ne.s32.totalorder %s414, %s417
      %p426 = scmp.eq.s32.totalorder %s35, 3
      %p427 = por %p425, %p426
      %p428 = scmp.ne.s32.totalorder %s417, %s418
      %p429 = scmp.eq.s32.totalorder %s35, 0
      %p430 = por %p428, %p429
      %p431 = scmp.ne.s32.totalorder %s417, %s418
      %p432 = scmp.eq.s32.totalorder %s36, 3
      %p433 = por %p431, %p432
      %p435 = scmp.ne.s32.totalorder %s418, %s434
      %p436 = scmp.eq.s32.totalorder %s36, 0
      %p437 = por %p435, %p436
      %p438 = scmp.le.s32.totalorder 1, %s30
      %p439 = scmp.lt.s32.totalorder %s30, 5
      %p440 = pnand %p438, %p439
      %p441 = pneg %p440
      // Predicated region
      $region9: #{tpu_custom_call.1} parent=5 // pred_check
        _
      $region10: #{tpu_custom_call.1} parent=5 // pred_check_branch
        %443 = sbr.rel (%p440) target = $region12
      $region11: #{tpu_custom_call.1} parent=5 // pred_region
        %s444 = ssub.s32 %s30, 1
        // Predicated region
        $region13: #{tpu_custom_call.1} parent=11 // pred_check
          %p445 = pneg %p89
        $region14: #{tpu_custom_call.1} parent=11 // pred_check_branch
          %447 = sbr.rel (%p445) target = $region16
        $region15: #{tpu_custom_call.1} parent=11 // pred_region
          _
        $region16: #{tpu_custom_call.1} parent=11 // pred_fallthru
          _
        // Predicated region
        $region17: #{tpu_custom_call.1} parent=11 // pred_check
          %p448 = pneg %p110
        $region18: #{tpu_custom_call.1} parent=11 // pred_check_branch
          %450 = sbr.rel (%p448) target = $region20
        $region19: #{tpu_custom_call.1} parent=11 // pred_region
          %452 = vsyncadd [#allocation5], 0
          %s453 = sshll.u32 %s2, 4
          %s454 = int_to_ptr.hbm [resolvable:$true] %s453
          %s455 = sshll.u32 [#allocation4], 4
          %s456 = int_to_ptr.vmem [resolvable:$true] %s455
          %461 = dma.hbm_to_vmem [thread:$0]  %s454, 32, %s456, [#allocation5], 16, 16, 1
        $region20: #{tpu_custom_call.1} parent=11 // pred_fallthru
          _
        // Predicated region
        $region21: #{tpu_custom_call.1} parent=11 // pred_check
          %p462 = pneg %p131
        $region22: #{tpu_custom_call.1} parent=11 // pred_check_branch
          %464 = sbr.rel (%p462) target = $region24
        $region23: #{tpu_custom_call.1} parent=11 // pred_region
          %466 = vsyncadd [#allocation8], 0
          %s467 = sshll.u32 %s3, 4
          %s468 = int_to_ptr.hbm [resolvable:$true] %s467
          %s469 = sshll.u32 [#allocation7], 4
          %s470 = int_to_ptr.vmem [resolvable:$true] %s469
          %475 = dma.hbm_to_vmem [thread:$0]  %s468, 512, %s470, [#allocation8], 64, 64, 4
        $region24: #{tpu_custom_call.1} parent=11 // pred_fallthru
          _
        // Predicated region
        $region25: #{tpu_custom_call.1} parent=11 // pred_check
          %p476 = pneg %p152
        $region26: #{tpu_custom_call.1} parent=11 // pred_check_branch
          %478 = sbr.rel (%p476) target = $region28
        $region27: #{tpu_custom_call.1} parent=11 // pred_region
          _
        $region28: #{tpu_custom_call.1} parent=11 // pred_fallthru
          _
        // Predicated region
        $region29: #{tpu_custom_call.1} parent=11 // pred_check
          %p479 = pneg %p173
        $region30: #{tpu_custom_call.1} parent=11 // pred_check_branch
          %481 = sbr.rel (%p479) target = $region32
        $region31: #{tpu_custom_call.1} parent=11 // pred_region
          %483 = vsyncadd [#allocation8], 0
          %s484 = sshll.u32 %s5, 4
          %s485 = int_to_ptr.hbm [resolvable:$true] %s484
          %s486 = sshll.u32 [#allocation9], 4
          %s487 = int_to_ptr.vmem [resolvable:$true] %s486
          %492 = dma.hbm_to_vmem [thread:$0]  %s485, 512, %s487, [#allocation8], 64, 64, 4
        $region32: #{tpu_custom_call.1} parent=11 // pred_fallthru
          _
        // Predicated region
        $region33: #{tpu_custom_call.1} parent=11 // pred_check
          %p493 = pneg %p194
        $region34: #{tpu_custom_call.1} parent=11 // pred_check_branch
          %495 = sbr.rel (%p493) target = $region36
        $region35: #{tpu_custom_call.1} parent=11 // pred_region
          _
        $region36: #{tpu_custom_call.1} parent=11 // pred_fallthru
          _
        // Predicated region
        $region37: #{tpu_custom_call.1} parent=11 // pred_check
          %p496 = pneg %p215
        $region38: #{tpu_custom_call.1} parent=11 // pred_check_branch
          %498 = sbr.rel (%p496) target = $region40
        $region39: #{tpu_custom_call.1} parent=11 // pred_region
          %500 = vsyncadd [#allocation11], 0
          %s501 = sshll.u32 %s7, 4
          %s502 = int_to_ptr.hbm [resolvable:$true] %s501
          %s503 = sshll.u32 [#allocation10], 4
          %s504 = int_to_ptr.vmem [resolvable:$true] %s503
          %509 = dma.hbm_to_vmem [thread:$0]  %s502, 512, %s504, [#allocation11], 64, 64, 4
        $region40: #{tpu_custom_call.1} parent=11 // pred_fallthru
          _
        // Predicated region
        $region41: #{tpu_custom_call.1} parent=11 // pred_check
          %p510 = pneg %p236
        $region42: #{tpu_custom_call.1} parent=11 // pred_check_branch
          %512 = sbr.rel (%p510) target = $region44
        $region43: #{tpu_custom_call.1} parent=11 // pred_region
          _
        $region44: #{tpu_custom_call.1} parent=11 // pred_fallthru
          _
        // Predicated region
        $region45: #{tpu_custom_call.1} parent=11 // pred_check
          %p513 = pneg %p257
        $region46: #{tpu_custom_call.1} parent=11 // pred_check_branch
          %515 = sbr.rel (%p513) target = $region48
        $region47: #{tpu_custom_call.1} parent=11 // pred_region
          %517 = vsyncadd [#allocation11], 0
          %s518 = sshll.u32 %s9, 4
          %s519 = int_to_ptr.hbm [resolvable:$true] %s518
          %s520 = sshll.u32 [#allocation12], 4
          %s521 = int_to_ptr.vmem [resolvable:$true] %s520
          %526 = dma.hbm_to_vmem [thread:$0]  %s519, 32, %s521, [#allocation11], 16, 16, 1
        $region48: #{tpu_custom_call.1} parent=11 // pred_fallthru
          _
        // Predicated region
        $region49: #{tpu_custom_call.1} parent=11 // pred_check
          %p527 = pneg %p278
        $region50: #{tpu_custom_call.1} parent=11 // pred_check_branch
          %529 = sbr.rel (%p527) target = $region52
        $region51: #{tpu_custom_call.1} parent=11 // pred_region
          _
        $region52: #{tpu_custom_call.1} parent=11 // pred_fallthru
          _
        // Predicated region
        $region53: #{tpu_custom_call.1} parent=11 // pred_check
          %p530 = pneg %p299
        $region54: #{tpu_custom_call.1} parent=11 // pred_check_branch
          %532 = sbr.rel (%p530) target = $region56
        $region55: #{tpu_custom_call.1} parent=11 // pred_region
          %534 = vsyncadd [#allocation14], 0
          %s535 = sshll.u32 %s11, 4
          %s536 = int_to_ptr.hbm [resolvable:$true] %s535
          %s537 = sshll.u32 [#allocation13], 4
          %s538 = int_to_ptr.vmem [resolvable:$true] %s537
          %543 = dma.hbm_to_vmem [thread:$0]  %s536, 512, %s538, [#allocation14], 64, 64, 4
        $region56: #{tpu_custom_call.1} parent=11 // pred_fallthru
          _
        // Predicated region
        $region57: #{tpu_custom_call.1} parent=11 // pred_check
          %p544 = pneg %p320
        $region58: #{tpu_custom_call.1} parent=11 // pred_check_branch
          %546 = sbr.rel (%p544) target = $region60
        $region59: #{tpu_custom_call.1} parent=11 // pred_region
          _
        $region60: #{tpu_custom_call.1} parent=11 // pred_fallthru
          _
        // Predicated region
        $region61: #{tpu_custom_call.1} parent=11 // pred_check
          %p547 = pneg %p341
        $region62: #{tpu_custom_call.1} parent=11 // pred_check_branch
          %549 = sbr.rel (%p547) target = $region64
        $region63: #{tpu_custom_call.1} parent=11 // pred_region
          _
        $region64: #{tpu_custom_call.1} parent=11 // pred_fallthru
          _
        // Predicated region
        $region65: #{tpu_custom_call.1} parent=11 // pred_check
          %p550 = pneg %p362
        $region66: #{tpu_custom_call.1} parent=11 // pred_check_branch
          %552 = sbr.rel (%p550) target = $region68
        $region67: #{tpu_custom_call.1} parent=11 // pred_region
          _
        $region68: #{tpu_custom_call.1} parent=11 // pred_fallthru
          _
        // Predicated region
        $region69: #{tpu_custom_call.1} parent=11 // pred_check
          %p553 = pneg %p383
        $region70: #{tpu_custom_call.1} parent=11 // pred_check_branch
          %555 = sbr.rel (%p553) target = $region72
        $region71: #{tpu_custom_call.1} parent=11 // pred_region
          %557 = vsyncadd [#allocation14], 0
          %s558 = sshll.u32 %s15, 4
          %s559 = int_to_ptr.hbm [resolvable:$true] %s558
          %s560 = sshll.u32 [#allocation15], 4
          %s561 = int_to_ptr.vmem [resolvable:$true] %s560
          %566 = dma.hbm_to_vmem [thread:$0]  %s559, 32, %s561, [#allocation14], 16, 16, 1
        $region72: #{tpu_custom_call.1} parent=11 // pred_fallthru
          _
        // Predicated region
        $region73: #{tpu_custom_call.1} parent=11 // pred_check
          %p567 = pneg %p404
        $region74: #{tpu_custom_call.1} parent=11 // pred_check_branch
          %569 = sbr.rel (%p567) target = $region76
        $region75: #{tpu_custom_call.1} parent=11 // pred_region
          _
        $region76: #{tpu_custom_call.1} parent=11 // pred_fallthru
          _
      $region12: #{tpu_custom_call.1} parent=5 // pred_fallthru
        _
      %p570 = scmp.lt.s32.totalorder %s30, 4
      // Predicated region
      $region77: #{tpu_custom_call.1} parent=5 // pred_check
        %p571 = pneg %p570
      $region78: #{tpu_custom_call.1} parent=5 // pred_check_branch
        %573 = sbr.rel (%p571) target = $region80
      $region79: #{tpu_custom_call.1} parent=5 // pred_region
        // Predicated region
        $region81: #{tpu_custom_call.1} parent=79 // pred_check
          %p574 = pneg %p62
        $region82: #{tpu_custom_call.1} parent=79 // pred_check_branch
          %576 = sbr.rel (%p574) target = $region84
        $region83: #{tpu_custom_call.1} parent=79 // pred_region
          %s577 = smul.u32 4, %s37
          %p578 = scmp.lt.s32.totalorder %s577, 7
          %s579 = scalar_select %p578, %s577, 7
          %s580 = smul.addr %s579, 8
          %s581 = scalar_lea.vmem %s0, %s580
          %s582 = smul.u32 4, %s37
        $region84: #{tpu_custom_call.1} parent=79 // pred_fallthru
          _
      $region80: #{tpu_custom_call.1} parent=5 // pred_fallthru
        _
      %p583 = scmp.le.s32.totalorder 1, %s30
      %p584 = scmp.lt.s32.totalorder %s30, 5
      %p585 = pnand %p583, %p584
      %p586 = pneg %p585
      // Predicated region
      $region85: #{tpu_custom_call.1} parent=5 // pred_check
        _
      $region86: #{tpu_custom_call.1} parent=5 // pred_check_branch
        %588 = sbr.rel (%p585) target = $region88
      $region87: #{tpu_custom_call.1} parent=5 // pred_region
        %s589 = ssub.s32 %s30, 1
        // Predicated region
        $region89: #{tpu_custom_call.1} parent=87 // pred_check
          %p590 = pneg %p110
        $region90: #{tpu_custom_call.1} parent=87 // pred_check_branch
          %592 = sbr.rel (%p590) target = $region92
        $region91: #{tpu_custom_call.1} parent=87 // pred_region
          %594 = dma.done [#allocation5], 32
        $region92: #{tpu_custom_call.1} parent=87 // pred_fallthru
          _
        // Predicated region
        $region93: #{tpu_custom_call.1} parent=87 // pred_check
          %p595 = pneg %p131
        $region94: #{tpu_custom_call.1} parent=87 // pred_check_branch
          %597 = sbr.rel (%p595) target = $region96
        $region95: #{tpu_custom_call.1} parent=87 // pred_region
          %599 = dma.done [#allocation8], 512
        $region96: #{tpu_custom_call.1} parent=87 // pred_fallthru
          _
        // Predicated region
        $region97: #{tpu_custom_call.1} parent=87 // pred_check
          %p600 = pneg %p173
        $region98: #{tpu_custom_call.1} parent=87 // pred_check_branch
          %602 = sbr.rel (%p600) target = $region100
        $region99: #{tpu_custom_call.1} parent=87 // pred_region
          %604 = dma.done [#allocation8], 512
        $region100: #{tpu_custom_call.1} parent=87 // pred_fallthru
          _
        // Predicated region
        $region101: #{tpu_custom_call.1} parent=87 // pred_check
          %p605 = pneg %p215
        $region102: #{tpu_custom_call.1} parent=87 // pred_check_branch
          %607 = sbr.rel (%p605) target = $region104
        $region103: #{tpu_custom_call.1} parent=87 // pred_region
          %609 = dma.done [#allocation11], 512
        $region104: #{tpu_custom_call.1} parent=87 // pred_fallthru
          _
        // Predicated region
        $region105: #{tpu_custom_call.1} parent=87 // pred_check
          %p610 = pneg %p257
        $region106: #{tpu_custom_call.1} parent=87 // pred_check_branch
          %612 = sbr.rel (%p610) target = $region108
        $region107: #{tpu_custom_call.1} parent=87 // pred_region
          %614 = dma.done [#allocation11], 32
        $region108: #{tpu_custom_call.1} parent=87 // pred_fallthru
          _
        // Predicated region
        $region109: #{tpu_custom_call.1} parent=87 // pred_check
          %p615 = pneg %p299
        $region110: #{tpu_custom_call.1} parent=87 // pred_check_branch
          %617 = sbr.rel (%p615) target = $region112
        $region111: #{tpu_custom_call.1} parent=87 // pred_region
          %619 = dma.done [#allocation14], 512
        $region112: #{tpu_custom_call.1} parent=87 // pred_fallthru
          _
        // Predicated region
        $region113: #{tpu_custom_call.1} parent=87 // pred_check
          %p620 = pneg %p383
        $region114: #{tpu_custom_call.1} parent=87 // pred_check_branch
          %622 = sbr.rel (%p620) target = $region116
        $region115: #{tpu_custom_call.1} parent=87 // pred_region
          %624 = dma.done [#allocation14], 32
        $region116: #{tpu_custom_call.1} parent=87 // pred_fallthru
          _
        %s625 = smul.u32 4, %s39
        %p626 = scmp.lt.s32.totalorder %s625, 7
        %s627 = scalar_select %p626, %s625, 7
        %s628 = smul.addr %s627, 8
        %s629 = scalar_lea.vmem %s0, %s628
        %p630 = pneg %p68
        %p631 = pneg %p65
        %p632 = pneg %p89
        %p633 = pneg %p86
        %p634 = pneg %p110
        %p635 = pneg %p107
        %p636 = pneg %p131
        %p637 = pneg %p128
        %p638 = pneg %p152
        %p639 = pneg %p149
        %p640 = pneg %p173
        %p641 = pneg %p170
        %p642 = pneg %p194
        %p643 = pneg %p191
        %p644 = pneg %p215
        %p645 = pneg %p212
        %p646 = pneg %p236
        %p647 = pneg %p233
        %p648 = pneg %p257
        %p649 = pneg %p254
        %p650 = pneg %p278
        %p651 = pneg %p275
        %p652 = pneg %p299
        %p653 = pneg %p296
        %p654 = pneg %p320
        %p655 = pneg %p317
        %p656 = pneg %p341
        %p657 = pneg %p338
        %p658 = pneg %p362
        %p659 = pneg %p359
        %p660 = pneg %p383
        %p661 = pneg %p380
        %p662 = pneg %p404
        %p663 = pneg %p401
        %p664 = pneg %p430
        %p665 = pneg %p427
        %s666 = sand.u32 %s417, 1
        %s667 = scalar_lea.sflag [#allocation6], %s666
        %s668 = sand.u32 %s417, 1
        %s669 = smul.addr %s668, 32
        %s670 = scalar_lea.vmem [#allocation16], %s669
        %s671 = smul.u32 4, %s39
        %p672 = scmp.lt.s32.totalorder %s671, 7
        %s673 = scalar_select %p672, %s671, 7
        %s674 = smul.addr %s673, 8
        %s675 = scalar_lea.vmem %s0, %s674
        %s676 = smul.u32 4, %s39
        %s677 = smul.u32 4, %s39
        %p679 = scmp.eq.s32.totalorder %s40, 0
        // Predicated region
        $region117: #{tpu_custom_call.1} parent=87 // pred_check
          %p680 = pneg %p679
        $region118: #{tpu_custom_call.1} parent=87 // pred_check_branch
          %682 = sbr.rel (%p680) target = $region120
        $region119: #{tpu_custom_call.1} parent=87 // pred_region
          %v683 = vld [vmem:[%s675] sm:$0xff]
          %v684 = vld [vmem:[%s675 + $0x8] sm:$0xff]
          %v685 = vld [vmem:[%s675 + $0x10] sm:$0xff]
          %v686 = vld [vmem:[%s675 + $0x18] sm:$0xff]
          %vm687 = vcmask 261120
          %688 = vst.msk [vmem:[#allocation2] sm:$0xff] %vm687, %v683
          %689 = vst.msk [vmem:[#allocation2 + $0x8] sm:$0xff] %vm687, %v684
          %690 = vst.msk [vmem:[#allocation2 + $0x10] sm:$0xff] %vm687, %v685
          %691 = vst.msk [vmem:[#allocation2 + $0x18] sm:$0xff] %vm687, %v686
        $region120: #{tpu_custom_call.1} parent=87 // pred_fallthru
          _
        %s692 = smul.u32 %s40, 4
        %s693 = smul.addr %s692, 4
        %s694 = scalar_lea.vmem %s1, %s693
        %v695 = vld [vmem:[%s694] sm:$0xf]
        %v696 = vld [vmem:[%s694 + $0x4] sm:$0xf]
        %v697 = vld [vmem:[%s694 + $0x8] sm:$0xf]
        %v698 = vld [vmem:[%s694 + $0xc] sm:$0xf]
        %s699 = scalar_lea.vmem [#allocation4], %s40
        %v700 = vld [vmem:[%s699] sm:$0x1]
        %s701 = smul.addr %s692, 4
        %s702 = scalar_lea.vmem [#allocation7], %s701
        %v703 = vld [vmem:[%s702] sm:$0xf]
        %v704 = vld [vmem:[%s702 + $0x4] sm:$0xf]
        %v705 = vld [vmem:[%s702 + $0x8] sm:$0xf]
        %v706 = vld [vmem:[%s702 + $0xc] sm:$0xf]
        %s707 = scalar_lea.vmem %s4, %s40
        %v708 = vld [vmem:[%s707] sm:$0x1]
        %s709 = smul.addr %s692, 4
        %s710 = scalar_lea.vmem [#allocation9], %s709
        %v711 = vld [vmem:[%s710] sm:$0xf]
        %v712 = vld [vmem:[%s710 + $0x4] sm:$0xf]
        %v713 = vld [vmem:[%s710 + $0x8] sm:$0xf]
        %v714 = vld [vmem:[%s710 + $0xc] sm:$0xf]
        %s715 = scalar_lea.vmem %s6, %s40
        %v716 = vld [vmem:[%s715] sm:$0x1]
        %s717 = smul.addr %s692, 4
        %s718 = scalar_lea.vmem [#allocation10], %s717
        %v719 = vld [vmem:[%s718] sm:$0xf]
        %v720 = vld [vmem:[%s718 + $0x4] sm:$0xf]
        %v721 = vld [vmem:[%s718 + $0x8] sm:$0xf]
        %v722 = vld [vmem:[%s718 + $0xc] sm:$0xf]
        %s723 = scalar_lea.vmem %s8, %s40
        %v724 = vld [vmem:[%s723] sm:$0x1]
        %s725 = smul.addr %s692, 4
        %s726 = scalar_lea.vmem [#allocation13], %s725
        %v727 = vld [vmem:[%s726] sm:$0xf]
        %v728 = vld [vmem:[%s726 + $0x4] sm:$0xf]
        %v729 = vld [vmem:[%s726 + $0x8] sm:$0xf]
        %v730 = vld [vmem:[%s726 + $0xc] sm:$0xf]
        %s731 = scalar_lea.vmem %s12, %s40
        %v732 = vld [vmem:[%s731] sm:$0x1]
        %s733 = smul.u32 %s40, 8
        %s734 = smul.addr %s733, 4
        %s735 = scalar_lea.vmem %s13, %s734
        %v736 = vld [vmem:[%s735] sm:$0xf]
        %v737 = vld [vmem:[%s735 + $0x4] sm:$0xf]
        %v738 = vld [vmem:[%s735 + $0x8] sm:$0xf]
        %v739 = vld [vmem:[%s735 + $0xc] sm:$0xf]
        %v740 = vld [vmem:[%s735 + $0x10] sm:$0xf]
        %v741 = vld [vmem:[%s735 + $0x14] sm:$0xf]
        %v742 = vld [vmem:[%s735 + $0x18] sm:$0xf]
        %v743 = vld [vmem:[%s735 + $0x1c] sm:$0xf]
        %s744 = scalar_lea.vmem %s14, %s40
        %v745 = vld [vmem:[%s744] sm:$0x1]
        %v746 = vld [vmem:[#allocation2] sm:$0xff]
        %v747 = vld [vmem:[#allocation2 + $0x8] sm:$0xff]
        %v748 = vld [vmem:[#allocation2 + $0x10] sm:$0xff]
        %v749 = vld [vmem:[#allocation2 + $0x18] sm:$0xff]
        %v750 = vpack.c.bf16 %v747, %v746
        %v751 = vpack.c.bf16 %v749, %v748
        %v753 = vperm.slane %v700, 0
        %v759 = vunpack.c.l.b16 %v695
        %v760 = vunpack.c.l.b16 %v696
        %v761 = vunpack.c.l.b16 %v697
        %v762 = vunpack.c.l.b16 %v698
        %v763 = vpack.c.b16 %v760, %v759
        %v764 = vpack.c.b16 %v762, %v761
        %vm767 = vcmask 261120
        %v769 = vsel %vm767, %v750, 0
        %v772 = vsel %vm767, %v751, 0
        %774 = vmatpush.bf16.msra.mxu0 0
        %775 = vmatpush.bf16.msra.mxu0 0
        %776 = vmatpush.bf16.msra.mxu0 0
        %777 = vmatpush.bf16.msra.mxu0 0
        %778 = vmatpush.bf16.msra.mxu0 0
        %779 = vmatpush.bf16.msra.mxu0 0
        %780 = vmatpush.bf16.msra.mxu0 %v764
        %781 = vmatpush.bf16.msra.mxu0 %v763
        %782 = vmatmul.bf16.gmra.mxu0 %v769
        %v783 = vpop.f32.mrf.mxu0
        %v784 = vadd.f32 %v753, %v783
        %v785 = vpop.f32.mrf.mxu0
        %v786 = vadd.f32 %v753, %v785
        %787 = vmatmul.bf16.gmra.mxu0 %v772
        %v788 = vpop.f32.mrf.mxu0
        %v789 = vadd.f32 %v753, %v788
        %v790 = vpop.f32.mrf.mxu0
        %v791 = vadd.f32 %v753, %v790
        %792 = vdwg.mxu0
        %v794 = vperm.slane %v708, 0
        %v800 = vunpack.c.l.b16 %v703
        %v801 = vunpack.c.l.b16 %v704
        %v802 = vunpack.c.l.b16 %v705
        %v803 = vunpack.c.l.b16 %v706
        %v804 = vpack.c.b16 %v801, %v800
        %v805 = vpack.c.b16 %v803, %v802
        %808 = vmatpush.bf16.msra.mxu0 0
        %809 = vmatpush.bf16.msra.mxu0 0
        %810 = vmatpush.bf16.msra.mxu0 0
        %811 = vmatpush.bf16.msra.mxu0 0
        %812 = vmatpush.bf16.msra.mxu0 0
        %813 = vmatpush.bf16.msra.mxu0 0
        %814 = vmatpush.bf16.msra.mxu0 %v805
        %815 = vmatpush.bf16.msra.mxu0 %v804
        %816 = vmatmul.bf16.gmra.mxu0 %v769
        %v817 = vpop.f32.mrf.mxu0
        %v818 = vadd.f32 %v794, %v817
        %v819 = vpop.f32.mrf.mxu0
        %v820 = vadd.f32 %v794, %v819
        %821 = vmatmul.bf16.gmra.mxu0 %v772
        %v822 = vpop.f32.mrf.mxu0
        %v823 = vadd.f32 %v794, %v822
        %v824 = vpop.f32.mrf.mxu0
        %v825 = vadd.f32 %v794, %v824
        %826 = vdwg.mxu0
        %v828 = vperm.slane %v716, 0
        %v834 = vunpack.c.l.b16 %v711
        %v835 = vunpack.c.l.b16 %v712
        %v836 = vunpack.c.l.b16 %v713
        %v837 = vunpack.c.l.b16 %v714
        %v838 = vpack.c.b16 %v835, %v834
        %v839 = vpack.c.b16 %v837, %v836
        %842 = vmatpush.bf16.msra.mxu0 0
        %843 = vmatpush.bf16.msra.mxu0 0
        %844 = vmatpush.bf16.msra.mxu0 0
        %845 = vmatpush.bf16.msra.mxu0 0
        %846 = vmatpush.bf16.msra.mxu0 0
        %847 = vmatpush.bf16.msra.mxu0 0
        %848 = vmatpush.bf16.msra.mxu0 %v839
        %849 = vmatpush.bf16.msra.mxu0 %v838
        %850 = vmatmul.bf16.gmra.mxu0 %v769
        %v851 = vpop.f32.mrf.mxu0
        %v852 = vadd.f32 %v828, %v851
        %v853 = vpop.f32.mrf.mxu0
        %v854 = vadd.f32 %v828, %v853
        %855 = vmatmul.bf16.gmra.mxu0 %v772
        %v856 = vpop.f32.mrf.mxu0
        %v857 = vadd.f32 %v828, %v856
        %v858 = vpop.f32.mrf.mxu0
        %v859 = vadd.f32 %v828, %v858
        %860 = vdwg.mxu0
        %vm861 = vcmask 64512
        %v863 = vsel %vm861, %v784, 0
        %v866 = vsel %vm861, %v818, 0
        %868 = vmatpush.xpose.msra.mxu0 0.0
        %869 = vmatpush.xpose.msra.mxu0 0.0
        %870 = vmatpush.xpose.msra.mxu0 0.0
        %871 = vmatpush.xpose.msra.mxu0 0.0
        %872 = vmatpush.xpose.msra.mxu0 0.0
        %873 = vmatpush.xpose.msra.mxu0 0.0
        %874 = vmatpush.xpose.msra.mxu0 0.0
        %875 = vmatpush.xpose.msra.mxu0 0.0
        %876 = vmatpush.xpose.msra.mxu0 0.0
        %877 = vmatpush.xpose.msra.mxu0 0.0
        %878 = vmatpush.xpose.msra.mxu0 0.0
        %879 = vmatpush.xpose.msra.mxu0 0.0
        %880 = vmatpush.xpose.msra.mxu0 0.0
        %881 = vmatpush.xpose.msra.mxu0 0.0
        %882 = vmatpush.xpose.msra.mxu0 0.0
        %883 = vmatpush.xpose.msra.mxu0 %v866
        %884 = vmatmul.f32.gmra.mxu0 %v863
        %v885 = vpop.f32.mrf.mxu0
        %v886 = vadd.f32 0.0, %v885
        %887 = vdwg.mxu0
        %v889 = vsel %vm861, %v786, 0
        %v892 = vsel %vm861, %v820, 0
        %894 = vmatpush.xpose.msra.mxu0 0.0
        %895 = vmatpush.xpose.msra.mxu0 0.0
        %896 = vmatpush.xpose.msra.mxu0 0.0
        %897 = vmatpush.xpose.msra.mxu0 0.0
        %898 = vmatpush.xpose.msra.mxu0 0.0
        %899 = vmatpush.xpose.msra.mxu0 0.0
        %900 = vmatpush.xpose.msra.mxu0 0.0
        %901 = vmatpush.xpose.msra.mxu0 0.0
        %902 = vmatpush.xpose.msra.mxu0 0.0
        %903 = vmatpush.xpose.msra.mxu0 0.0
        %904 = vmatpush.xpose.msra.mxu0 0.0
        %905 = vmatpush.xpose.msra.mxu0 0.0
        %906 = vmatpush.xpose.msra.mxu0 0.0
        %907 = vmatpush.xpose.msra.mxu0 0.0
        %908 = vmatpush.xpose.msra.mxu0 0.0
        %909 = vmatpush.xpose.msra.mxu0 %v892
        %910 = vmatmul.f32.gmra.mxu0 %v889
        %v911 = vpop.f32.mrf.mxu0
        %v912 = vadd.f32 0.0, %v911
        %913 = vdwg.mxu0
        %v915 = vsel %vm861, %v789, 0
        %v918 = vsel %vm861, %v823, 0
        %920 = vmatpush.xpose.msra.mxu0 0.0
        %921 = vmatpush.xpose.msra.mxu0 0.0
        %922 = vmatpush.xpose.msra.mxu0 0.0
        %923 = vmatpush.xpose.msra.mxu0 0.0
        %924 = vmatpush.xpose.msra.mxu0 0.0
        %925 = vmatpush.xpose.msra.mxu0 0.0
        %926 = vmatpush.xpose.msra.mxu0 0.0
        %927 = vmatpush.xpose.msra.mxu0 0.0
        %928 = vmatpush.xpose.msra.mxu0 0.0
        %929 = vmatpush.xpose.msra.mxu0 0.0
        %930 = vmatpush.xpose.msra.mxu0 0.0
        %931 = vmatpush.xpose.msra.mxu0 0.0
        %932 = vmatpush.xpose.msra.mxu0 0.0
        %933 = vmatpush.xpose.msra.mxu0 0.0
        %934 = vmatpush.xpose.msra.mxu0 0.0
        %935 = vmatpush.xpose.msra.mxu0 %v918
        %936 = vmatmul.f32.gmra.mxu0 %v915
        %v937 = vpop.f32.mrf.mxu0
        %v938 = vadd.f32 0.0, %v937
        %939 = vdwg.mxu0
        %v941 = vsel %vm861, %v791, 0
        %v944 = vsel %vm861, %v825, 0
        %946 = vmatpush.xpose.msra.mxu0 0.0
        %947 = vmatpush.xpose.msra.mxu0 0.0
        %948 = vmatpush.xpose.msra.mxu0 0.0
        %949 = vmatpush.xpose.msra.mxu0 0.0
        %950 = vmatpush.xpose.msra.mxu0 0.0
        %951 = vmatpush.xpose.msra.mxu0 0.0
        %952 = vmatpush.xpose.msra.mxu0 0.0
        %953 = vmatpush.xpose.msra.mxu0 0.0
        %954 = vmatpush.xpose.msra.mxu0 0.0
        %955 = vmatpush.xpose.msra.mxu0 0.0
        %956 = vmatpush.xpose.msra.mxu0 0.0
        %957 = vmatpush.xpose.msra.mxu0 0.0
        %958 = vmatpush.xpose.msra.mxu0 0.0
        %959 = vmatpush.xpose.msra.mxu0 0.0
        %960 = vmatpush.xpose.msra.mxu0 0.0
        %961 = vmatpush.xpose.msra.mxu0 %v944
        %962 = vmatmul.f32.gmra.mxu0 %v941
        %v963 = vpop.f32.mrf.mxu0
        %v964 = vadd.f32 0.0, %v963
        %965 = vdwg.mxu0
        %v966 = vmul.f32 %v886, 0.35355338
        %v967 = vmul.f32 %v912, 0.35355338
        %v968 = vmul.f32 %v938, 0.35355338
        %v969 = vmul.f32 %v964, 0.35355338
        %v970 = vsel %vm861, %v966, -inf
        %971 = vmax.xlane.f32.xlu0 %v970
        %v972 = vpop.xlane.xlu0 %971
        %v973 = vsel %vm861, %v967, -inf
        %974 = vmax.xlane.f32.xlu0 %v973
        %v975 = vpop.xlane.xlu0 %974
        %v976 = vsel %vm861, %v968, -inf
        %977 = vmax.xlane.f32.xlu0 %v976
        %v978 = vpop.xlane.xlu0 %977
        %v979 = vsel %vm861, %v969, -inf
        %980 = vmax.xlane.f32.xlu0 %v979
        %v981 = vpop.xlane.xlu0 %980
        %v982 = vsub.f32 %v966, %v972
        %v983 = vsub.f32 %v967, %v975
        %v984 = vsub.f32 %v968, %v978
        %v985 = vsub.f32 %v969, %v981
        %v986 = vmul.f32 %v982, 1.442695
        %v987 = vpow.pop %v986
        %v988 = vmul.f32 %v983, 1.442695
        %v989 = vpow.pop %v988
        %v990 = vmul.f32 %v984, 1.442695
        %v991 = vpow.pop %v990
        %v992 = vmul.f32 %v985, 1.442695
        %v993 = vpow.pop %v992
        %v994 = vsel %vm861, %v987, 0.0
        %995 = vadd.xlane.f32.xlu0 %v994
        %v996 = vpop.xlane.xlu0 %995
        %v997 = vsel %vm861, %v989, 0.0
        %998 = vadd.xlane.f32.xlu0 %v997
        %v999 = vpop.xlane.xlu0 %998
        %v1000 = vsel %vm861, %v991, 0.0
        %1001 = vadd.xlane.f32.xlu0 %v1000
        %v1002 = vpop.xlane.xlu0 %1001
        %v1003 = vsel %vm861, %v993, 0.0
        %1004 = vadd.xlane.f32.xlu0 %v1003
        %v1005 = vpop.xlane.xlu0 %1004
        %v1006 = vrcp.pop %v996
        %v1007 = vmul.f32 %v996, %v1006
        %v1008 = vsub.f32 1.0, %v1007
        %v1009 = vmul.f32 %v1006, %v1008
        %v1010 = vadd.f32 %v1006, %v1009
        %vm1011 = vweird.f32 %v996
        %vm1012 = vweird.f32 %v1006
        %vm1013 = vmor %vm1011, %vm1012
        %v1014 = vsel %vm1013, %v1006, %v1010
        %v1015 = vand.u32 2147483647, %v996
        %vm1016 = vcmp.eq.f32.partialorder %v1015, 8.507059e+37
        %v1017 = vand.u32 %v996, 2147483648
        %v1018 = vor.u32 1.1754944e-38, %v1017
        %v1019 = vsel %vm1016, %v1018, %v1014
        %v1020 = vmul.f32 %v987, %v1019
        %v1021 = vrcp.pop %v999
        %v1022 = vmul.f32 %v999, %v1021
        %v1023 = vsub.f32 1.0, %v1022
        %v1024 = vmul.f32 %v1021, %v1023
        %v1025 = vadd.f32 %v1021, %v1024
        %vm1026 = vweird.f32 %v999
        %vm1027 = vweird.f32 %v1021
        %vm1028 = vmor %vm1026, %vm1027
        %v1029 = vsel %vm1028, %v1021, %v1025
        %v1030 = vand.u32 2147483647, %v999
        %vm1031 = vcmp.eq.f32.partialorder %v1030, 8.507059e+37
        %v1032 = vand.u32 %v999, 2147483648
        %v1033 = vor.u32 1.1754944e-38, %v1032
        %v1034 = vsel %vm1031, %v1033, %v1029
        %v1035 = vmul.f32 %v989, %v1034
        %v1036 = vrcp.pop %v1002
        %v1037 = vmul.f32 %v1002, %v1036
        %v1038 = vsub.f32 1.0, %v1037
        %v1039 = vmul.f32 %v1036, %v1038
        %v1040 = vadd.f32 %v1036, %v1039
        %vm1041 = vweird.f32 %v1002
        %vm1042 = vweird.f32 %v1036
        %vm1043 = vmor %vm1041, %vm1042
        %v1044 = vsel %vm1043, %v1036, %v1040
        %v1045 = vand.u32 2147483647, %v1002
        %vm1046 = vcmp.eq.f32.partialorder %v1045, 8.507059e+37
        %v1047 = vand.u32 %v1002, 2147483648
        %v1048 = vor.u32 1.1754944e-38, %v1047
        %v1049 = vsel %vm1046, %v1048, %v1044
        %v1050 = vmul.f32 %v991, %v1049
        %v1051 = vrcp.pop %v1005
        %v1052 = vmul.f32 %v1005, %v1051
        %v1053 = vsub.f32 1.0, %v1052
        %v1054 = vmul.f32 %v1051, %v1053
        %v1055 = vadd.f32 %v1051, %v1054
        %vm1056 = vweird.f32 %v1005
        %vm1057 = vweird.f32 %v1051
        %vm1058 = vmor %vm1056, %vm1057
        %v1059 = vsel %vm1058, %v1051, %v1055
        %v1060 = vand.u32 2147483647, %v1005
        %vm1061 = vcmp.eq.f32.partialorder %v1060, 8.507059e+37
        %v1062 = vand.u32 %v1005, 2147483648
        %v1063 = vor.u32 1.1754944e-38, %v1062
        %v1064 = vsel %vm1061, %v1063, %v1059
        %v1065 = vmul.f32 %v993, %v1064
        %v1067 = vsel %vm861, %v1020, 0
        %1069 = vmatpush.msra.mxu0 0.0
        %1070 = vmatpush.msra.mxu0 0.0
        %1071 = vmatpush.msra.mxu0 0.0
        %1072 = vmatpush.msra.mxu0 0.0
        %1073 = vmatpush.msra.mxu0 0.0
        %1074 = vmatpush.msra.mxu0 0.0
        %1075 = vmatpush.msra.mxu0 0.0
        %1076 = vmatpush.msra.mxu0 0.0
        %1077 = vmatpush.msra.mxu0 0.0
        %1078 = vmatpush.msra.mxu0 0.0
        %1079 = vmatpush.msra.mxu0 0.0
        %1080 = vmatpush.msra.mxu0 0.0
        %1081 = vmatpush.msra.mxu0 0.0
        %1082 = vmatpush.msra.mxu0 0.0
        %1083 = vmatpush.msra.mxu0 0.0
        %1084 = vmatpush.msra.mxu0 %v852
        %1085 = vmatmul.f32.gmra.mxu0 %v1067
        %v1086 = vpop.f32.mrf.mxu0
        %v1087 = vadd.f32 0.0, %v1086
        %1088 = vdwg.mxu0
        %v1090 = vsel %vm861, %v1035, 0
        %1092 = vmatpush.msra.mxu0 0.0
        %1093 = vmatpush.msra.mxu0 0.0
        %1094 = vmatpush.msra.mxu0 0.0
        %1095 = vmatpush.msra.mxu0 0.0
        %1096 = vmatpush.msra.mxu0 0.0
        %1097 = vmatpush.msra.mxu0 0.0
        %1098 = vmatpush.msra.mxu0 0.0
        %1099 = vmatpush.msra.mxu0 0.0
        %1100 = vmatpush.msra.mxu0 0.0
        %1101 = vmatpush.msra.mxu0 0.0
        %1102 = vmatpush.msra.mxu0 0.0
        %1103 = vmatpush.msra.mxu0 0.0
        %1104 = vmatpush.msra.mxu0 0.0
        %1105 = vmatpush.msra.mxu0 0.0
        %1106 = vmatpush.msra.mxu0 0.0
        %1107 = vmatpush.msra.mxu0 %v854
        %1108 = vmatmul.f32.gmra.mxu0 %v1090
        %v1109 = vpop.f32.mrf.mxu0
        %v1110 = vadd.f32 0.0, %v1109
        %1111 = vdwg.mxu0
        %v1113 = vsel %vm861, %v1050, 0
        %1115 = vmatpush.msra.mxu0 0.0
        %1116 = vmatpush.msra.mxu0 0.0
        %1117 = vmatpush.msra.mxu0 0.0
        %1118 = vmatpush.msra.mxu0 0.0
        %1119 = vmatpush.msra.mxu0 0.0
        %1120 = vmatpush.msra.mxu0 0.0
        %1121 = vmatpush.msra.mxu0 0.0
        %1122 = vmatpush.msra.mxu0 0.0
        %1123 = vmatpush.msra.mxu0 0.0
        %1124 = vmatpush.msra.mxu0 0.0
        %1125 = vmatpush.msra.mxu0 0.0
        %1126 = vmatpush.msra.mxu0 0.0
        %1127 = vmatpush.msra.mxu0 0.0
        %1128 = vmatpush.msra.mxu0 0.0
        %1129 = vmatpush.msra.mxu0 0.0
        %1130 = vmatpush.msra.mxu0 %v857
        %1131 = vmatmul.f32.gmra.mxu0 %v1113
        %v1132 = vpop.f32.mrf.mxu0
        %v1133 = vadd.f32 0.0, %v1132
        %1134 = vdwg.mxu0
        %v1136 = vsel %vm861, %v1065, 0
        %1138 = vmatpush.msra.mxu0 0.0
        %1139 = vmatpush.msra.mxu0 0.0
        %1140 = vmatpush.msra.mxu0 0.0
        %1141 = vmatpush.msra.mxu0 0.0
        %1142 = vmatpush.msra.mxu0 0.0
        %1143 = vmatpush.msra.mxu0 0.0
        %1144 = vmatpush.msra.mxu0 0.0
        %1145 = vmatpush.msra.mxu0 0.0
        %1146 = vmatpush.msra.mxu0 0.0
        %1147 = vmatpush.msra.mxu0 0.0
        %1148 = vmatpush.msra.mxu0 0.0
        %1149 = vmatpush.msra.mxu0 0.0
        %1150 = vmatpush.msra.mxu0 0.0
        %1151 = vmatpush.msra.mxu0 0.0
        %1152 = vmatpush.msra.mxu0 0.0
        %1153 = vmatpush.msra.mxu0 %v859
        %1154 = vmatmul.f32.gmra.mxu0 %v1136
        %v1155 = vpop.f32.mrf.mxu0
        %v1156 = vadd.f32 0.0, %v1155
        %1157 = vdwg.mxu0
        %1158 = vst.msk [vmem:[#allocation3] sm:$0xff] %vm861, %v1087
        %1159 = vst.msk [vmem:[#allocation3 + $0x8] sm:$0xff] %vm861, %v1110
        %1160 = vst.msk [vmem:[#allocation3 + $0x10] sm:$0xff] %vm861, %v1133
        %1161 = vst.msk [vmem:[#allocation3 + $0x18] sm:$0xff] %vm861, %v1156
        %1162 = vrot.lane.b32.xlu0 %v784, 120
        %v1163 = vpop.permute.xlu0 %1162
        %1164 = vrot.lane.b32.xlu0 %v818, 120
        %v1165 = vpop.permute.xlu0 %1164
        %v1166 = vsel %vm861, %v1163, 0
        %v1168 = vsel %vm861, %v1165, 0
        %1170 = vmatpush.xpose.msra.mxu0 0.0
        %1171 = vmatpush.xpose.msra.mxu0 0.0
        %1172 = vmatpush.xpose.msra.mxu0 0.0
        %1173 = vmatpush.xpose.msra.mxu0 0.0
        %1174 = vmatpush.xpose.msra.mxu0 0.0
        %1175 = vmatpush.xpose.msra.mxu0 0.0
        %1176 = vmatpush.xpose.msra.mxu0 0.0
        %1177 = vmatpush.xpose.msra.mxu0 0.0
        %1178 = vmatpush.xpose.msra.mxu0 0.0
        %1179 = vmatpush.xpose.msra.mxu0 0.0
        %1180 = vmatpush.xpose.msra.mxu0 0.0
        %1181 = vmatpush.xpose.msra.mxu0 0.0
        %1182 = vmatpush.xpose.msra.mxu0 0.0
        %1183 = vmatpush.xpose.msra.mxu0 0.0
        %1184 = vmatpush.xpose.msra.mxu0 0.0
        %1185 = vmatpush.xpose.msra.mxu0 %v1168
        %1186 = vmatmul.f32.gmra.mxu0 %v1166
        %v1187 = vpop.f32.mrf.mxu0
        %v1188 = vadd.f32 0.0, %v1187
        %1189 = vdwg.mxu0
        %1190 = vrot.lane.b32.xlu0 %v786, 120
        %v1191 = vpop.permute.xlu0 %1190
        %1192 = vrot.lane.b32.xlu0 %v820, 120
        %v1193 = vpop.permute.xlu0 %1192
        %v1194 = vsel %vm861, %v1191, 0
        %v1196 = vsel %vm861, %v1193, 0
        %1198 = vmatpush.xpose.msra.mxu0 0.0
        %1199 = vmatpush.xpose.msra.mxu0 0.0
        %1200 = vmatpush.xpose.msra.mxu0 0.0
        %1201 = vmatpush.xpose.msra.mxu0 0.0
        %1202 = vmatpush.xpose.msra.mxu0 0.0
        %1203 = vmatpush.xpose.msra.mxu0 0.0
        %1204 = vmatpush.xpose.msra.mxu0 0.0
        %1205 = vmatpush.xpose.msra.mxu0 0.0
        %1206 = vmatpush.xpose.msra.mxu0 0.0
        %1207 = vmatpush.xpose.msra.mxu0 0.0
        %1208 = vmatpush.xpose.msra.mxu0 0.0
        %1209 = vmatpush.xpose.msra.mxu0 0.0
        %1210 = vmatpush.xpose.msra.mxu0 0.0
        %1211 = vmatpush.xpose.msra.mxu0 0.0
        %1212 = vmatpush.xpose.msra.mxu0 0.0
        %1213 = vmatpush.xpose.msra.mxu0 %v1196
        %1214 = vmatmul.f32.gmra.mxu0 %v1194
        %v1215 = vpop.f32.mrf.mxu0
        %v1216 = vadd.f32 0.0, %v1215
        %1217 = vdwg.mxu0
        %1218 = vrot.lane.b32.xlu0 %v789, 120
        %v1219 = vpop.permute.xlu0 %1218
        %1220 = vrot.lane.b32.xlu0 %v823, 120
        %v1221 = vpop.permute.xlu0 %1220
        %v1222 = vsel %vm861, %v1219, 0
        %v1224 = vsel %vm861, %v1221, 0
        %1226 = vmatpush.xpose.msra.mxu0 0.0
        %1227 = vmatpush.xpose.msra.mxu0 0.0
        %1228 = vmatpush.xpose.msra.mxu0 0.0
        %1229 = vmatpush.xpose.msra.mxu0 0.0
        %1230 = vmatpush.xpose.msra.mxu0 0.0
        %1231 = vmatpush.xpose.msra.mxu0 0.0
        %1232 = vmatpush.xpose.msra.mxu0 0.0
        %1233 = vmatpush.xpose.msra.mxu0 0.0
        %1234 = vmatpush.xpose.msra.mxu0 0.0
        %1235 = vmatpush.xpose.msra.mxu0 0.0
        %1236 = vmatpush.xpose.msra.mxu0 0.0
        %1237 = vmatpush.xpose.msra.mxu0 0.0
        %1238 = vmatpush.xpose.msra.mxu0 0.0
        %1239 = vmatpush.xpose.msra.mxu0 0.0
        %1240 = vmatpush.xpose.msra.mxu0 0.0
        %1241 = vmatpush.xpose.msra.mxu0 %v1224
        %1242 = vmatmul.f32.gmra.mxu0 %v1222
        %v1243 = vpop.f32.mrf.mxu0
        %v1244 = vadd.f32 0.0, %v1243
        %1245 = vdwg.mxu0
        %1246 = vrot.lane.b32.xlu0 %v791, 120
        %v1247 = vpop.permute.xlu0 %1246
        %1248 = vrot.lane.b32.xlu0 %v825, 120
        %v1249 = vpop.permute.xlu0 %1248
        %v1250 = vsel %vm861, %v1247, 0
        %v1252 = vsel %vm861, %v1249, 0
        %1254 = vmatpush.xpose.msra.mxu0 0.0
        %1255 = vmatpush.xpose.msra.mxu0 0.0
        %1256 = vmatpush.xpose.msra.mxu0 0.0
        %1257 = vmatpush.xpose.msra.mxu0 0.0
        %1258 = vmatpush.xpose.msra.mxu0 0.0
        %1259 = vmatpush.xpose.msra.mxu0 0.0
        %1260 = vmatpush.xpose.msra.mxu0 0.0
        %1261 = vmatpush.xpose.msra.mxu0 0.0
        %1262 = vmatpush.xpose.msra.mxu0 0.0
        %1263 = vmatpush.xpose.msra.mxu0 0.0
        %1264 = vmatpush.xpose.msra.mxu0 0.0
        %1265 = vmatpush.xpose.msra.mxu0 0.0
        %1266 = vmatpush.xpose.msra.mxu0 0.0
        %1267 = vmatpush.xpose.msra.mxu0 0.0
        %1268 = vmatpush.xpose.msra.mxu0 0.0
        %1269 = vmatpush.xpose.msra.mxu0 %v1252
        %1270 = vmatmul.f32.gmra.mxu0 %v1250
        %v1271 = vpop.f32.mrf.mxu0
        %v1272 = vadd.f32 0.0, %v1271
        %1273 = vdwg.mxu0
        %v1274 = vmul.f32 %v1188, 0.35355338
        %v1275 = vmul.f32 %v1216, 0.35355338
        %v1276 = vmul.f32 %v1244, 0.35355338
        %v1277 = vmul.f32 %v1272, 0.35355338
        %v1278 = vsel %vm861, %v1274, -inf
        %1279 = vmax.xlane.f32.xlu0 %v1278
        %v1280 = vpop.xlane.xlu0 %1279
        %v1281 = vsel %vm861, %v1275, -inf
        %1282 = vmax.xlane.f32.xlu0 %v1281
        %v1283 = vpop.xlane.xlu0 %1282
        %v1284 = vsel %vm861, %v1276, -inf
        %1285 = vmax.xlane.f32.xlu0 %v1284
        %v1286 = vpop.xlane.xlu0 %1285
        %v1287 = vsel %vm861, %v1277, -inf
        %1288 = vmax.xlane.f32.xlu0 %v1287
        %v1289 = vpop.xlane.xlu0 %1288
        %v1290 = vsub.f32 %v1274, %v1280
        %v1291 = vsub.f32 %v1275, %v1283
        %v1292 = vsub.f32 %v1276, %v1286
        %v1293 = vsub.f32 %v1277, %v1289
        %v1294 = vmul.f32 %v1290, 1.442695
        %v1295 = vpow.pop %v1294
        %v1296 = vmul.f32 %v1291, 1.442695
        %v1297 = vpow.pop %v1296
        %v1298 = vmul.f32 %v1292, 1.442695
        %v1299 = vpow.pop %v1298
        %v1300 = vmul.f32 %v1293, 1.442695
        %v1301 = vpow.pop %v1300
        %v1302 = vsel %vm861, %v1295, 0.0
        %1303 = vadd.xlane.f32.xlu0 %v1302
        %v1304 = vpop.xlane.xlu0 %1303
        %v1305 = vsel %vm861, %v1297, 0.0
        %1306 = vadd.xlane.f32.xlu0 %v1305
        %v1307 = vpop.xlane.xlu0 %1306
        %v1308 = vsel %vm861, %v1299, 0.0
        %1309 = vadd.xlane.f32.xlu0 %v1308
        %v1310 = vpop.xlane.xlu0 %1309
        %v1311 = vsel %vm861, %v1301, 0.0
        %1312 = vadd.xlane.f32.xlu0 %v1311
        %v1313 = vpop.xlane.xlu0 %1312
        %v1314 = vrcp.pop %v1304
        %v1315 = vmul.f32 %v1304, %v1314
        %v1316 = vsub.f32 1.0, %v1315
        %v1317 = vmul.f32 %v1314, %v1316
        %v1318 = vadd.f32 %v1314, %v1317
        %vm1319 = vweird.f32 %v1304
        %vm1320 = vweird.f32 %v1314
        %vm1321 = vmor %vm1319, %vm1320
        %v1322 = vsel %vm1321, %v1314, %v1318
        %v1323 = vand.u32 2147483647, %v1304
        %vm1324 = vcmp.eq.f32.partialorder %v1323, 8.507059e+37
        %v1325 = vand.u32 %v1304, 2147483648
        %v1326 = vor.u32 1.1754944e-38, %v1325
        %v1327 = vsel %vm1324, %v1326, %v1322
        %v1328 = vmul.f32 %v1295, %v1327
        %v1329 = vrcp.pop %v1307
        %v1330 = vmul.f32 %v1307, %v1329
        %v1331 = vsub.f32 1.0, %v1330
        %v1332 = vmul.f32 %v1329, %v1331
        %v1333 = vadd.f32 %v1329, %v1332
        %vm1334 = vweird.f32 %v1307
        %vm1335 = vweird.f32 %v1329
        %vm1336 = vmor %vm1334, %vm1335
        %v1337 = vsel %vm1336, %v1329, %v1333
        %v1338 = vand.u32 2147483647, %v1307
        %vm1339 = vcmp.eq.f32.partialorder %v1338, 8.507059e+37
        %v1340 = vand.u32 %v1307, 2147483648
        %v1341 = vor.u32 1.1754944e-38, %v1340
        %v1342 = vsel %vm1339, %v1341, %v1337
        %v1343 = vmul.f32 %v1297, %v1342
        %v1344 = vrcp.pop %v1310
        %v1345 = vmul.f32 %v1310, %v1344
        %v1346 = vsub.f32 1.0, %v1345
        %v1347 = vmul.f32 %v1344, %v1346
        %v1348 = vadd.f32 %v1344, %v1347
        %vm1349 = vweird.f32 %v1310
        %vm1350 = vweird.f32 %v1344
        %vm1351 = vmor %vm1349, %vm1350
        %v1352 = vsel %vm1351, %v1344, %v1348
        %v1353 = vand.u32 2147483647, %v1310
        %vm1354 = vcmp.eq.f32.partialorder %v1353, 8.507059e+37
        %v1355 = vand.u32 %v1310, 2147483648
        %v1356 = vor.u32 1.1754944e-38, %v1355
        %v1357 = vsel %vm1354, %v1356, %v1352
        %v1358 = vmul.f32 %v1299, %v1357
        %v1359 = vrcp.pop %v1313
        %v1360 = vmul.f32 %v1313, %v1359
        %v1361 = vsub.f32 1.0, %v1360
        %v1362 = vmul.f32 %v1359, %v1361
        %v1363 = vadd.f32 %v1359, %v1362
        %vm1364 = vweird.f32 %v1313
        %vm1365 = vweird.f32 %v1359
        %vm1366 = vmor %vm1364, %vm1365
        %v1367 = vsel %vm1366, %v1359, %v1363
        %v1368 = vand.u32 2147483647, %v1313
        %vm1369 = vcmp.eq.f32.partialorder %v1368, 8.507059e+37
        %v1370 = vand.u32 %v1313, 2147483648
        %v1371 = vor.u32 1.1754944e-38, %v1370
        %v1372 = vsel %vm1369, %v1371, %v1367
        %v1373 = vmul.f32 %v1301, %v1372
        %1375 = vrot.lane.b32.xlu0 %v852, 120
        %v1376 = vpop.permute.xlu0 %1375
        %v1379 = vsel %vm861, %v1328, 0
        %1381 = vmatpush.msra.mxu0 0.0
        %1382 = vmatpush.msra.mxu0 0.0
        %1383 = vmatpush.msra.mxu0 0.0
        %1384 = vmatpush.msra.mxu0 0.0
        %1385 = vmatpush.msra.mxu0 0.0
        %1386 = vmatpush.msra.mxu0 0.0
        %1387 = vmatpush.msra.mxu0 0.0
        %1388 = vmatpush.msra.mxu0 0.0
        %1389 = vmatpush.msra.mxu0 0.0
        %1390 = vmatpush.msra.mxu0 0.0
        %1391 = vmatpush.msra.mxu0 0.0
        %1392 = vmatpush.msra.mxu0 0.0
        %1393 = vmatpush.msra.mxu0 0.0
        %1394 = vmatpush.msra.mxu0 0.0
        %1395 = vmatpush.msra.mxu0 0.0
        %1396 = vmatpush.msra.mxu0 %v1376
        %1397 = vmatmul.f32.gmra.mxu0 %v1379
        %v1398 = vpop.f32.mrf.mxu0
        %v1399 = vadd.f32 0.0, %v1398
        %1400 = vdwg.mxu0
        %1402 = vrot.lane.b32.xlu0 %v854, 120
        %v1403 = vpop.permute.xlu0 %1402
        %v1406 = vsel %vm861, %v1343, 0
        %1408 = vmatpush.msra.mxu0 0.0
        %1409 = vmatpush.msra.mxu0 0.0
        %1410 = vmatpush.msra.mxu0 0.0
        %1411 = vmatpush.msra.mxu0 0.0
        %1412 = vmatpush.msra.mxu0 0.0
        %1413 = vmatpush.msra.mxu0 0.0
        %1414 = vmatpush.msra.mxu0 0.0
        %1415 = vmatpush.msra.mxu0 0.0
        %1416 = vmatpush.msra.mxu0 0.0
        %1417 = vmatpush.msra.mxu0 0.0
        %1418 = vmatpush.msra.mxu0 0.0
        %1419 = vmatpush.msra.mxu0 0.0
        %1420 = vmatpush.msra.mxu0 0.0
        %1421 = vmatpush.msra.mxu0 0.0
        %1422 = vmatpush.msra.mxu0 0.0
        %1423 = vmatpush.msra.mxu0 %v1403
        %1424 = vmatmul.f32.gmra.mxu0 %v1406
        %v1425 = vpop.f32.mrf.mxu0
        %v1426 = vadd.f32 0.0, %v1425
        %1427 = vdwg.mxu0
        %1429 = vrot.lane.b32.xlu0 %v857, 120
        %v1430 = vpop.permute.xlu0 %1429
        %v1433 = vsel %vm861, %v1358, 0
        %1435 = vmatpush.msra.mxu0 0.0
        %1436 = vmatpush.msra.mxu0 0.0
        %1437 = vmatpush.msra.mxu0 0.0
        %1438 = vmatpush.msra.mxu0 0.0
        %1439 = vmatpush.msra.mxu0 0.0
        %1440 = vmatpush.msra.mxu0 0.0
        %1441 = vmatpush.msra.mxu0 0.0
        %1442 = vmatpush.msra.mxu0 0.0
        %1443 = vmatpush.msra.mxu0 0.0
        %1444 = vmatpush.msra.mxu0 0.0
        %1445 = vmatpush.msra.mxu0 0.0
        %1446 = vmatpush.msra.mxu0 0.0
        %1447 = vmatpush.msra.mxu0 0.0
        %1448 = vmatpush.msra.mxu0 0.0
        %1449 = vmatpush.msra.mxu0 0.0
        %1450 = vmatpush.msra.mxu0 %v1430
        %1451 = vmatmul.f32.gmra.mxu0 %v1433
        %v1452 = vpop.f32.mrf.mxu0
        %v1453 = vadd.f32 0.0, %v1452
        %1454 = vdwg.mxu0
        %1456 = vrot.lane.b32.xlu0 %v859, 120
        %v1457 = vpop.permute.xlu0 %1456
        %v1460 = vsel %vm861, %v1373, 0
        %1462 = vmatpush.msra.mxu0 0.0
        %1463 = vmatpush.msra.mxu0 0.0
        %1464 = vmatpush.msra.mxu0 0.0
        %1465 = vmatpush.msra.mxu0 0.0
        %1466 = vmatpush.msra.mxu0 0.0
        %1467 = vmatpush.msra.mxu0 0.0
        %1468 = vmatpush.msra.mxu0 0.0
        %1469 = vmatpush.msra.mxu0 0.0
        %1470 = vmatpush.msra.mxu0 0.0
        %1471 = vmatpush.msra.mxu0 0.0
        %1472 = vmatpush.msra.mxu0 0.0
        %1473 = vmatpush.msra.mxu0 0.0
        %1474 = vmatpush.msra.mxu0 0.0
        %1475 = vmatpush.msra.mxu0 0.0
        %1476 = vmatpush.msra.mxu0 0.0
        %1477 = vmatpush.msra.mxu0 %v1457
        %1478 = vmatmul.f32.gmra.mxu0 %v1460
        %v1479 = vpop.f32.mrf.mxu0
        %v1480 = vadd.f32 0.0, %v1479
        %1481 = vdwg.mxu0
        %1486 = vrot.lane.b32.xlu0 %v1399, 8
        %v1487 = vpop.permute.xlu0 %1486
        %1488 = vrot.lane.b32.xlu0 %v1426, 8
        %v1489 = vpop.permute.xlu0 %1488
        %1490 = vrot.lane.b32.xlu0 %v1453, 8
        %v1491 = vpop.permute.xlu0 %1490
        %1492 = vrot.lane.b32.xlu0 %v1480, 8
        %v1493 = vpop.permute.xlu0 %1492
        %vm1498 = vcmask 130112
        %1499 = vst.msk [vmem:[#allocation3] sm:$0xff] %vm1498, %v1487
        %1500 = vst.msk [vmem:[#allocation3 + $0x8] sm:$0xff] %vm1498, %v1489
        %1501 = vst.msk [vmem:[#allocation3 + $0x10] sm:$0xff] %vm1498, %v1491
        %1502 = vst.msk [vmem:[#allocation3 + $0x18] sm:$0xff] %vm1498, %v1493
        %1503 = vrot.lane.b32.xlu0 %v784, 112
        %v1504 = vpop.permute.xlu0 %1503
        %1505 = vrot.lane.b32.xlu0 %v818, 112
        %v1506 = vpop.permute.xlu0 %1505
        %v1507 = vsel %vm861, %v1504, 0
        %v1509 = vsel %vm861, %v1506, 0
        %1511 = vmatpush.xpose.msra.mxu0 0.0
        %1512 = vmatpush.xpose.msra.mxu0 0.0
        %1513 = vmatpush.xpose.msra.mxu0 0.0
        %1514 = vmatpush.xpose.msra.mxu0 0.0
        %1515 = vmatpush.xpose.msra.mxu0 0.0
        %1516 = vmatpush.xpose.msra.mxu0 0.0
        %1517 = vmatpush.xpose.msra.mxu0 0.0
        %1518 = vmatpush.xpose.msra.mxu0 0.0
        %1519 = vmatpush.xpose.msra.mxu0 0.0
        %1520 = vmatpush.xpose.msra.mxu0 0.0
        %1521 = vmatpush.xpose.msra.mxu0 0.0
        %1522 = vmatpush.xpose.msra.mxu0 0.0
        %1523 = vmatpush.xpose.msra.mxu0 0.0
        %1524 = vmatpush.xpose.msra.mxu0 0.0
        %1525 = vmatpush.xpose.msra.mxu0 0.0
        %1526 = vmatpush.xpose.msra.mxu0 %v1509
        %1527 = vmatmul.f32.gmra.mxu0 %v1507
        %v1528 = vpop.f32.mrf.mxu0
        %v1529 = vadd.f32 0.0, %v1528
        %1530 = vdwg.mxu0
        %1531 = vrot.lane.b32.xlu0 %v786, 112
        %v1532 = vpop.permute.xlu0 %1531
        %1533 = vrot.lane.b32.xlu0 %v820, 112
        %v1534 = vpop.permute.xlu0 %1533
        %v1535 = vsel %vm861, %v1532, 0
        %v1537 = vsel %vm861, %v1534, 0
        %1539 = vmatpush.xpose.msra.mxu0 0.0
        %1540 = vmatpush.xpose.msra.mxu0 0.0
        %1541 = vmatpush.xpose.msra.mxu0 0.0
        %1542 = vmatpush.xpose.msra.mxu0 0.0
        %1543 = vmatpush.xpose.msra.mxu0 0.0
        %1544 = vmatpush.xpose.msra.mxu0 0.0
        %1545 = vmatpush.xpose.msra.mxu0 0.0
        %1546 = vmatpush.xpose.msra.mxu0 0.0
        %1547 = vmatpush.xpose.msra.mxu0 0.0
        %1548 = vmatpush.xpose.msra.mxu0 0.0
        %1549 = vmatpush.xpose.msra.mxu0 0.0
        %1550 = vmatpush.xpose.msra.mxu0 0.0
        %1551 = vmatpush.xpose.msra.mxu0 0.0
        %1552 = vmatpush.xpose.msra.mxu0 0.0
        %1553 = vmatpush.xpose.msra.mxu0 0.0
        %1554 = vmatpush.xpose.msra.mxu0 %v1537
        %1555 = vmatmul.f32.gmra.mxu0 %v1535
        %v1556 = vpop.f32.mrf.mxu0
        %v1557 = vadd.f32 0.0, %v1556
        %1558 = vdwg.mxu0
        %1559 = vrot.lane.b32.xlu0 %v789, 112
        %v1560 = vpop.permute.xlu0 %1559
        %1561 = vrot.lane.b32.xlu0 %v823, 112
        %v1562 = vpop.permute.xlu0 %1561
        %v1563 = vsel %vm861, %v1560, 0
        %v1565 = vsel %vm861, %v1562, 0
        %1567 = vmatpush.xpose.msra.mxu0 0.0
        %1568 = vmatpush.xpose.msra.mxu0 0.0
        %1569 = vmatpush.xpose.msra.mxu0 0.0
        %1570 = vmatpush.xpose.msra.mxu0 0.0
        %1571 = vmatpush.xpose.msra.mxu0 0.0
        %1572 = vmatpush.xpose.msra.mxu0 0.0
        %1573 = vmatpush.xpose.msra.mxu0 0.0
        %1574 = vmatpush.xpose.msra.mxu0 0.0
        %1575 = vmatpush.xpose.msra.mxu0 0.0
        %1576 = vmatpush.xpose.msra.mxu0 0.0
        %1577 = vmatpush.xpose.msra.mxu0 0.0
        %1578 = vmatpush.xpose.msra.mxu0 0.0
        %1579 = vmatpush.xpose.msra.mxu0 0.0
        %1580 = vmatpush.xpose.msra.mxu0 0.0
        %1581 = vmatpush.xpose.msra.mxu0 0.0
        %1582 = vmatpush.xpose.msra.mxu0 %v1565
        %1583 = vmatmul.f32.gmra.mxu0 %v1563
        %v1584 = vpop.f32.mrf.mxu0
        %v1585 = vadd.f32 0.0, %v1584
        %1586 = vdwg.mxu0
        %1587 = vrot.lane.b32.xlu0 %v791, 112
        %v1588 = vpop.permute.xlu0 %1587
        %1589 = vrot.lane.b32.xlu0 %v825, 112
        %v1590 = vpop.permute.xlu0 %1589
        %v1591 = vsel %vm861, %v1588, 0
        %v1593 = vsel %vm861, %v1590, 0
        %1595 = vmatpush.xpose.msra.mxu0 0.0
        %1596 = vmatpush.xpose.msra.mxu0 0.0
        %1597 = vmatpush.xpose.msra.mxu0 0.0
        %1598 = vmatpush.xpose.msra.mxu0 0.0
        %1599 = vmatpush.xpose.msra.mxu0 0.0
        %1600 = vmatpush.xpose.msra.mxu0 0.0
        %1601 = vmatpush.xpose.msra.mxu0 0.0
        %1602 = vmatpush.xpose.msra.mxu0 0.0
        %1603 = vmatpush.xpose.msra.mxu0 0.0
        %1604 = vmatpush.xpose.msra.mxu0 0.0
        %1605 = vmatpush.xpose.msra.mxu0 0.0
        %1606 = vmatpush.xpose.msra.mxu0 0.0
        %1607 = vmatpush.xpose.msra.mxu0 0.0
        %1608 = vmatpush.xpose.msra.mxu0 0.0
        %1609 = vmatpush.xpose.msra.mxu0 0.0
        %1610 = vmatpush.xpose.msra.mxu0 %v1593
        %1611 = vmatmul.f32.gmra.mxu0 %v1591
        %v1612 = vpop.f32.mrf.mxu0
        %v1613 = vadd.f32 0.0, %v1612
        %1614 = vdwg.mxu0
        %v1615 = vmul.f32 %v1529, 0.35355338
        %v1616 = vmul.f32 %v1557, 0.35355338
        %v1617 = vmul.f32 %v1585, 0.35355338
        %v1618 = vmul.f32 %v1613, 0.35355338
        %v1619 = vsel %vm861, %v1615, -inf
        %1620 = vmax.xlane.f32.xlu0 %v1619
        %v1621 = vpop.xlane.xlu0 %1620
        %v1622 = vsel %vm861, %v1616, -inf
        %1623 = vmax.xlane.f32.xlu0 %v1622
        %v1624 = vpop.xlane.xlu0 %1623
        %v1625 = vsel %vm861, %v1617, -inf
        %1626 = vmax.xlane.f32.xlu0 %v1625
        %v1627 = vpop.xlane.xlu0 %1626
        %v1628 = vsel %vm861, %v1618, -inf
        %1629 = vmax.xlane.f32.xlu0 %v1628
        %v1630 = vpop.xlane.xlu0 %1629
        %v1631 = vsub.f32 %v1615, %v1621
        %v1632 = vsub.f32 %v1616, %v1624
        %v1633 = vsub.f32 %v1617, %v1627
        %v1634 = vsub.f32 %v1618, %v1630
        %v1635 = vmul.f32 %v1631, 1.442695
        %v1636 = vpow.pop %v1635
        %v1637 = vmul.f32 %v1632, 1.442695
        %v1638 = vpow.pop %v1637
        %v1639 = vmul.f32 %v1633, 1.442695
        %v1640 = vpow.pop %v1639
        %v1641 = vmul.f32 %v1634, 1.442695
        %v1642 = vpow.pop %v1641
        %v1643 = vsel %vm861, %v1636, 0.0
        %1644 = vadd.xlane.f32.xlu0 %v1643
        %v1645 = vpop.xlane.xlu0 %1644
        %v1646 = vsel %vm861, %v1638, 0.0
        %1647 = vadd.xlane.f32.xlu0 %v1646
        %v1648 = vpop.xlane.xlu0 %1647
        %v1649 = vsel %vm861, %v1640, 0.0
        %1650 = vadd.xlane.f32.xlu0 %v1649
        %v1651 = vpop.xlane.xlu0 %1650
        %v1652 = vsel %vm861, %v1642, 0.0
        %1653 = vadd.xlane.f32.xlu0 %v1652
        %v1654 = vpop.xlane.xlu0 %1653
        %v1655 = vrcp.pop %v1645
        %v1656 = vmul.f32 %v1645, %v1655
        %v1657 = vsub.f32 1.0, %v1656
        %v1658 = vmul.f32 %v1655, %v1657
        %v1659 = vadd.f32 %v1655, %v1658
        %vm1660 = vweird.f32 %v1645
        %vm1661 = vweird.f32 %v1655
        %vm1662 = vmor %vm1660, %vm1661
        %v1663 = vsel %vm1662, %v1655, %v1659
        %v1664 = vand.u32 2147483647, %v1645
        %vm1665 = vcmp.eq.f32.partialorder %v1664, 8.507059e+37
        %v1666 = vand.u32 %v1645, 2147483648
        %v1667 = vor.u32 1.1754944e-38, %v1666
        %v1668 = vsel %vm1665, %v1667, %v1663
        %v1669 = vmul.f32 %v1636, %v1668
        %v1670 = vrcp.pop %v1648
        %v1671 = vmul.f32 %v1648, %v1670
        %v1672 = vsub.f32 1.0, %v1671
        %v1673 = vmul.f32 %v1670, %v1672
        %v1674 = vadd.f32 %v1670, %v1673
        %vm1675 = vweird.f32 %v1648
        %vm1676 = vweird.f32 %v1670
        %vm1677 = vmor %vm1675, %vm1676
        %v1678 = vsel %vm1677, %v1670, %v1674
        %v1679 = vand.u32 2147483647, %v1648
        %vm1680 = vcmp.eq.f32.partialorder %v1679, 8.507059e+37
        %v1681 = vand.u32 %v1648, 2147483648
        %v1682 = vor.u32 1.1754944e-38, %v1681
        %v1683 = vsel %vm1680, %v1682, %v1678
        %v1684 = vmul.f32 %v1638, %v1683
        %v1685 = vrcp.pop %v1651
        %v1686 = vmul.f32 %v1651, %v1685
        %v1687 = vsub.f32 1.0, %v1686
        %v1688 = vmul.f32 %v1685, %v1687
        %v1689 = vadd.f32 %v1685, %v1688
        %vm1690 = vweird.f32 %v1651
        %vm1691 = vweird.f32 %v1685
        %vm1692 = vmor %vm1690, %vm1691
        %v1693 = vsel %vm1692, %v1685, %v1689
        %v1694 = vand.u32 2147483647, %v1651
        %vm1695 = vcmp.eq.f32.partialorder %v1694, 8.507059e+37
        %v1696 = vand.u32 %v1651, 2147483648
        %v1697 = vor.u32 1.1754944e-38, %v1696
        %v1698 = vsel %vm1695, %v1697, %v1693
        %v1699 = vmul.f32 %v1640, %v1698
        %v1700 = vrcp.pop %v1654
        %v1701 = vmul.f32 %v1654, %v1700
        %v1702 = vsub.f32 1.0, %v1701
        %v1703 = vmul.f32 %v1700, %v1702
        %v1704 = vadd.f32 %v1700, %v1703
        %vm1705 = vweird.f32 %v1654
        %vm1706 = vweird.f32 %v1700
        %vm1707 = vmor %vm1705, %vm1706
        %v1708 = vsel %vm1707, %v1700, %v1704
        %v1709 = vand.u32 2147483647, %v1654
        %vm1710 = vcmp.eq.f32.partialorder %v1709, 8.507059e+37
        %v1711 = vand.u32 %v1654, 2147483648
        %v1712 = vor.u32 1.1754944e-38, %v1711
        %v1713 = vsel %vm1710, %v1712, %v1708
        %v1714 = vmul.f32 %v1642, %v1713
        %1715 = vrot.lane.b32.xlu0 %v852, 112
        %v1716 = vpop.permute.xlu0 %1715
        %v1719 = vsel %vm861, %v1669, 0
        %1721 = vmatpush.msra.mxu0 0.0
        %1722 = vmatpush.msra.mxu0 0.0
        %1723 = vmatpush.msra.mxu0 0.0
        %1724 = vmatpush.msra.mxu0 0.0
        %1725 = vmatpush.msra.mxu0 0.0
        %1726 = vmatpush.msra.mxu0 0.0
        %1727 = vmatpush.msra.mxu0 0.0
        %1728 = vmatpush.msra.mxu0 0.0
        %1729 = vmatpush.msra.mxu0 0.0
        %1730 = vmatpush.msra.mxu0 0.0
        %1731 = vmatpush.msra.mxu0 0.0
        %1732 = vmatpush.msra.mxu0 0.0
        %1733 = vmatpush.msra.mxu0 0.0
        %1734 = vmatpush.msra.mxu0 0.0
        %1735 = vmatpush.msra.mxu0 0.0
        %1736 = vmatpush.msra.mxu0 %v1716
        %1737 = vmatmul.f32.gmra.mxu0 %v1719
        %v1738 = vpop.f32.mrf.mxu0
        %v1739 = vadd.f32 0.0, %v1738
        %1740 = vdwg.mxu0
        %1741 = vrot.lane.b32.xlu0 %v854, 112
        %v1742 = vpop.permute.xlu0 %1741
        %v1745 = vsel %vm861, %v1684, 0
        %1747 = vmatpush.msra.mxu0 0.0
        %1748 = vmatpush.msra.mxu0 0.0
        %1749 = vmatpush.msra.mxu0 0.0
        %1750 = vmatpush.msra.mxu0 0.0
        %1751 = vmatpush.msra.mxu0 0.0
        %1752 = vmatpush.msra.mxu0 0.0
        %1753 = vmatpush.msra.mxu0 0.0
        %1754 = vmatpush.msra.mxu0 0.0
        %1755 = vmatpush.msra.mxu0 0.0
        %1756 = vmatpush.msra.mxu0 0.0
        %1757 = vmatpush.msra.mxu0 0.0
        %1758 = vmatpush.msra.mxu0 0.0
        %1759 = vmatpush.msra.mxu0 0.0
        %1760 = vmatpush.msra.mxu0 0.0
        %1761 = vmatpush.msra.mxu0 0.0
        %1762 = vmatpush.msra.mxu0 %v1742
        %1763 = vmatmul.f32.gmra.mxu0 %v1745
        %v1764 = vpop.f32.mrf.mxu0
        %v1765 = vadd.f32 0.0, %v1764
        %1766 = vdwg.mxu0
        %1767 = vrot.lane.b32.xlu0 %v857, 112
        %v1768 = vpop.permute.xlu0 %1767
        %v1771 = vsel %vm861, %v1699, 0
        %1773 = vmatpush.msra.mxu0 0.0
        %1774 = vmatpush.msra.mxu0 0.0
        %1775 = vmatpush.msra.mxu0 0.0
        %1776 = vmatpush.msra.mxu0 0.0
        %1777 = vmatpush.msra.mxu0 0.0
        %1778 = vmatpush.msra.mxu0 0.0
        %1779 = vmatpush.msra.mxu0 0.0
        %1780 = vmatpush.msra.mxu0 0.0
        %1781 = vmatpush.msra.mxu0 0.0
        %1782 = vmatpush.msra.mxu0 0.0
        %1783 = vmatpush.msra.mxu0 0.0
        %1784 = vmatpush.msra.mxu0 0.0
        %1785 = vmatpush.msra.mxu0 0.0
        %1786 = vmatpush.msra.mxu0 0.0
        %1787 = vmatpush.msra.mxu0 0.0
        %1788 = vmatpush.msra.mxu0 %v1768
        %1789 = vmatmul.f32.gmra.mxu0 %v1771
        %v1790 = vpop.f32.mrf.mxu0
        %v1791 = vadd.f32 0.0, %v1790
        %1792 = vdwg.mxu0
        %1793 = vrot.lane.b32.xlu0 %v859, 112
        %v1794 = vpop.permute.xlu0 %1793
        %v1797 = vsel %vm861, %v1714, 0
        %1799 = vmatpush.msra.mxu0 0.0
        %1800 = vmatpush.msra.mxu0 0.0
        %1801 = vmatpush.msra.mxu0 0.0
        %1802 = vmatpush.msra.mxu0 0.0
        %1803 = vmatpush.msra.mxu0 0.0
        %1804 = vmatpush.msra.mxu0 0.0
        %1805 = vmatpush.msra.mxu0 0.0
        %1806 = vmatpush.msra.mxu0 0.0
        %1807 = vmatpush.msra.mxu0 0.0
        %1808 = vmatpush.msra.mxu0 0.0
        %1809 = vmatpush.msra.mxu0 0.0
        %1810 = vmatpush.msra.mxu0 0.0
        %1811 = vmatpush.msra.mxu0 0.0
        %1812 = vmatpush.msra.mxu0 0.0
        %1813 = vmatpush.msra.mxu0 0.0
        %1814 = vmatpush.msra.mxu0 %v1794
        %1815 = vmatmul.f32.gmra.mxu0 %v1797
        %v1816 = vpop.f32.mrf.mxu0
        %v1817 = vadd.f32 0.0, %v1816
        %1818 = vdwg.mxu0
        %1823 = vrot.lane.b32.xlu0 %v1739, 16
        %v1824 = vpop.permute.xlu0 %1823
        %1825 = vrot.lane.b32.xlu0 %v1765, 16
        %v1826 = vpop.permute.xlu0 %1825
        %1827 = vrot.lane.b32.xlu0 %v1791, 16
        %v1828 = vpop.permute.xlu0 %1827
        %1829 = vrot.lane.b32.xlu0 %v1817, 16
        %v1830 = vpop.permute.xlu0 %1829
        %vm1835 = vcmask 195712
        %1836 = vst.msk [vmem:[#allocation3] sm:$0xff] %vm1835, %v1824
        %1837 = vst.msk [vmem:[#allocation3 + $0x8] sm:$0xff] %vm1835, %v1826
        %1838 = vst.msk [vmem:[#allocation3 + $0x10] sm:$0xff] %vm1835, %v1828
        %1839 = vst.msk [vmem:[#allocation3 + $0x18] sm:$0xff] %vm1835, %v1830
        %1840 = vrot.lane.b32.xlu0 %v784, 104
        %v1841 = vpop.permute.xlu0 %1840
        %1842 = vrot.lane.b32.xlu0 %v818, 104
        %v1843 = vpop.permute.xlu0 %1842
        %v1844 = vsel %vm861, %v1841, 0
        %v1846 = vsel %vm861, %v1843, 0
        %1848 = vmatpush.xpose.msra.mxu0 0.0
        %1849 = vmatpush.xpose.msra.mxu0 0.0
        %1850 = vmatpush.xpose.msra.mxu0 0.0
        %1851 = vmatpush.xpose.msra.mxu0 0.0
        %1852 = vmatpush.xpose.msra.mxu0 0.0
        %1853 = vmatpush.xpose.msra.mxu0 0.0
        %1854 = vmatpush.xpose.msra.mxu0 0.0
        %1855 = vmatpush.xpose.msra.mxu0 0.0
        %1856 = vmatpush.xpose.msra.mxu0 0.0
        %1857 = vmatpush.xpose.msra.mxu0 0.0
        %1858 = vmatpush.xpose.msra.mxu0 0.0
        %1859 = vmatpush.xpose.msra.mxu0 0.0
        %1860 = vmatpush.xpose.msra.mxu0 0.0
        %1861 = vmatpush.xpose.msra.mxu0 0.0
        %1862 = vmatpush.xpose.msra.mxu0 0.0
        %1863 = vmatpush.xpose.msra.mxu0 %v1846
        %1864 = vmatmul.f32.gmra.mxu0 %v1844
        %v1865 = vpop.f32.mrf.mxu0
        %v1866 = vadd.f32 0.0, %v1865
        %1867 = vdwg.mxu0
        %1868 = vrot.lane.b32.xlu0 %v786, 104
        %v1869 = vpop.permute.xlu0 %1868
        %1870 = vrot.lane.b32.xlu0 %v820, 104
        %v1871 = vpop.permute.xlu0 %1870
        %v1872 = vsel %vm861, %v1869, 0
        %v1874 = vsel %vm861, %v1871, 0
        %1876 = vmatpush.xpose.msra.mxu0 0.0
        %1877 = vmatpush.xpose.msra.mxu0 0.0
        %1878 = vmatpush.xpose.msra.mxu0 0.0
        %1879 = vmatpush.xpose.msra.mxu0 0.0
        %1880 = vmatpush.xpose.msra.mxu0 0.0
        %1881 = vmatpush.xpose.msra.mxu0 0.0
        %1882 = vmatpush.xpose.msra.mxu0 0.0
        %1883 = vmatpush.xpose.msra.mxu0 0.0
        %1884 = vmatpush.xpose.msra.mxu0 0.0
        %1885 = vmatpush.xpose.msra.mxu0 0.0
        %1886 = vmatpush.xpose.msra.mxu0 0.0
        %1887 = vmatpush.xpose.msra.mxu0 0.0
        %1888 = vmatpush.xpose.msra.mxu0 0.0
        %1889 = vmatpush.xpose.msra.mxu0 0.0
        %1890 = vmatpush.xpose.msra.mxu0 0.0
        %1891 = vmatpush.xpose.msra.mxu0 %v1874
        %1892 = vmatmul.f32.gmra.mxu0 %v1872
        %v1893 = vpop.f32.mrf.mxu0
        %v1894 = vadd.f32 0.0, %v1893
        %1895 = vdwg.mxu0
        %1896 = vrot.lane.b32.xlu0 %v789, 104
        %v1897 = vpop.permute.xlu0 %1896
        %1898 = vrot.lane.b32.xlu0 %v823, 104
        %v1899 = vpop.permute.xlu0 %1898
        %v1900 = vsel %vm861, %v1897, 0
        %v1902 = vsel %vm861, %v1899, 0
        %1904 = vmatpush.xpose.msra.mxu0 0.0
        %1905 = vmatpush.xpose.msra.mxu0 0.0
        %1906 = vmatpush.xpose.msra.mxu0 0.0
        %1907 = vmatpush.xpose.msra.mxu0 0.0
        %1908 = vmatpush.xpose.msra.mxu0 0.0
        %1909 = vmatpush.xpose.msra.mxu0 0.0
        %1910 = vmatpush.xpose.msra.mxu0 0.0
        %1911 = vmatpush.xpose.msra.mxu0 0.0
        %1912 = vmatpush.xpose.msra.mxu0 0.0
        %1913 = vmatpush.xpose.msra.mxu0 0.0
        %1914 = vmatpush.xpose.msra.mxu0 0.0
        %1915 = vmatpush.xpose.msra.mxu0 0.0
        %1916 = vmatpush.xpose.msra.mxu0 0.0
        %1917 = vmatpush.xpose.msra.mxu0 0.0
        %1918 = vmatpush.xpose.msra.mxu0 0.0
        %1919 = vmatpush.xpose.msra.mxu0 %v1902
        %1920 = vmatmul.f32.gmra.mxu0 %v1900
        %v1921 = vpop.f32.mrf.mxu0
        %v1922 = vadd.f32 0.0, %v1921
        %1923 = vdwg.mxu0
        %1924 = vrot.lane.b32.xlu0 %v791, 104
        %v1925 = vpop.permute.xlu0 %1924
        %1926 = vrot.lane.b32.xlu0 %v825, 104
        %v1927 = vpop.permute.xlu0 %1926
        %v1928 = vsel %vm861, %v1925, 0
        %v1930 = vsel %vm861, %v1927, 0
        %1932 = vmatpush.xpose.msra.mxu0 0.0
        %1933 = vmatpush.xpose.msra.mxu0 0.0
        %1934 = vmatpush.xpose.msra.mxu0 0.0
        %1935 = vmatpush.xpose.msra.mxu0 0.0
        %1936 = vmatpush.xpose.msra.mxu0 0.0
        %1937 = vmatpush.xpose.msra.mxu0 0.0
        %1938 = vmatpush.xpose.msra.mxu0 0.0
        %1939 = vmatpush.xpose.msra.mxu0 0.0
        %1940 = vmatpush.xpose.msra.mxu0 0.0
        %1941 = vmatpush.xpose.msra.mxu0 0.0
        %1942 = vmatpush.xpose.msra.mxu0 0.0
        %1943 = vmatpush.xpose.msra.mxu0 0.0
        %1944 = vmatpush.xpose.msra.mxu0 0.0
        %1945 = vmatpush.xpose.msra.mxu0 0.0
        %1946 = vmatpush.xpose.msra.mxu0 0.0
        %1947 = vmatpush.xpose.msra.mxu0 %v1930
        %1948 = vmatmul.f32.gmra.mxu0 %v1928
        %v1949 = vpop.f32.mrf.mxu0
        %v1950 = vadd.f32 0.0, %v1949
        %1951 = vdwg.mxu0
        %v1952 = vmul.f32 %v1866, 0.35355338
        %v1953 = vmul.f32 %v1894, 0.35355338
        %v1954 = vmul.f32 %v1922, 0.35355338
        %v1955 = vmul.f32 %v1950, 0.35355338
        %v1956 = vsel %vm861, %v1952, -inf
        %1957 = vmax.xlane.f32.xlu0 %v1956
        %v1958 = vpop.xlane.xlu0 %1957
        %v1959 = vsel %vm861, %v1953, -inf
        %1960 = vmax.xlane.f32.xlu0 %v1959
        %v1961 = vpop.xlane.xlu0 %1960
        %v1962 = vsel %vm861, %v1954, -inf
        %1963 = vmax.xlane.f32.xlu0 %v1962
        %v1964 = vpop.xlane.xlu0 %1963
        %v1965 = vsel %vm861, %v1955, -inf
        %1966 = vmax.xlane.f32.xlu0 %v1965
        %v1967 = vpop.xlane.xlu0 %1966
        %v1968 = vsub.f32 %v1952, %v1958
        %v1969 = vsub.f32 %v1953, %v1961
        %v1970 = vsub.f32 %v1954, %v1964
        %v1971 = vsub.f32 %v1955, %v1967
        %v1972 = vmul.f32 %v1968, 1.442695
        %v1973 = vpow.pop %v1972
        %v1974 = vmul.f32 %v1969, 1.442695
        %v1975 = vpow.pop %v1974
        %v1976 = vmul.f32 %v1970, 1.442695
        %v1977 = vpow.pop %v1976
        %v1978 = vmul.f32 %v1971, 1.442695
        %v1979 = vpow.pop %v1978
        %v1980 = vsel %vm861, %v1973, 0.0
        %1981 = vadd.xlane.f32.xlu0 %v1980
        %v1982 = vpop.xlane.xlu0 %1981
        %v1983 = vsel %vm861, %v1975, 0.0
        %1984 = vadd.xlane.f32.xlu0 %v1983
        %v1985 = vpop.xlane.xlu0 %1984
        %v1986 = vsel %vm861, %v1977, 0.0
        %1987 = vadd.xlane.f32.xlu0 %v1986
        %v1988 = vpop.xlane.xlu0 %1987
        %v1989 = vsel %vm861, %v1979, 0.0
        %1990 = vadd.xlane.f32.xlu0 %v1989
        %v1991 = vpop.xlane.xlu0 %1990
        %v1992 = vrcp.pop %v1982
        %v1993 = vmul.f32 %v1982, %v1992
        %v1994 = vsub.f32 1.0, %v1993
        %v1995 = vmul.f32 %v1992, %v1994
        %v1996 = vadd.f32 %v1992, %v1995
        %vm1997 = vweird.f32 %v1982
        %vm1998 = vweird.f32 %v1992
        %vm1999 = vmor %vm1997, %vm1998
        %v2000 = vsel %vm1999, %v1992, %v1996
        %v2001 = vand.u32 2147483647, %v1982
        %vm2002 = vcmp.eq.f32.partialorder %v2001, 8.507059e+37
        %v2003 = vand.u32 %v1982, 2147483648
        %v2004 = vor.u32 1.1754944e-38, %v2003
        %v2005 = vsel %vm2002, %v2004, %v2000
        %v2006 = vmul.f32 %v1973, %v2005
        %v2007 = vrcp.pop %v1985
        %v2008 = vmul.f32 %v1985, %v2007
        %v2009 = vsub.f32 1.0, %v2008
        %v2010 = vmul.f32 %v2007, %v2009
        %v2011 = vadd.f32 %v2007, %v2010
        %vm2012 = vweird.f32 %v1985
        %vm2013 = vweird.f32 %v2007
        %vm2014 = vmor %vm2012, %vm2013
        %v2015 = vsel %vm2014, %v2007, %v2011
        %v2016 = vand.u32 2147483647, %v1985
        %vm2017 = vcmp.eq.f32.partialorder %v2016, 8.507059e+37
        %v2018 = vand.u32 %v1985, 2147483648
        %v2019 = vor.u32 1.1754944e-38, %v2018
        %v2020 = vsel %vm2017, %v2019, %v2015
        %v2021 = vmul.f32 %v1975, %v2020
        %v2022 = vrcp.pop %v1988
        %v2023 = vmul.f32 %v1988, %v2022
        %v2024 = vsub.f32 1.0, %v2023
        %v2025 = vmul.f32 %v2022, %v2024
        %v2026 = vadd.f32 %v2022, %v2025
        %vm2027 = vweird.f32 %v1988
        %vm2028 = vweird.f32 %v2022
        %vm2029 = vmor %vm2027, %vm2028
        %v2030 = vsel %vm2029, %v2022, %v2026
        %v2031 = vand.u32 2147483647, %v1988
        %vm2032 = vcmp.eq.f32.partialorder %v2031, 8.507059e+37
        %v2033 = vand.u32 %v1988, 2147483648
        %v2034 = vor.u32 1.1754944e-38, %v2033
        %v2035 = vsel %vm2032, %v2034, %v2030
        %v2036 = vmul.f32 %v1977, %v2035
        %v2037 = vrcp.pop %v1991
        %v2038 = vmul.f32 %v1991, %v2037
        %v2039 = vsub.f32 1.0, %v2038
        %v2040 = vmul.f32 %v2037, %v2039
        %v2041 = vadd.f32 %v2037, %v2040
        %vm2042 = vweird.f32 %v1991
        %vm2043 = vweird.f32 %v2037
        %vm2044 = vmor %vm2042, %vm2043
        %v2045 = vsel %vm2044, %v2037, %v2041
        %v2046 = vand.u32 2147483647, %v1991
        %vm2047 = vcmp.eq.f32.partialorder %v2046, 8.507059e+37
        %v2048 = vand.u32 %v1991, 2147483648
        %v2049 = vor.u32 1.1754944e-38, %v2048
        %v2050 = vsel %vm2047, %v2049, %v2045
        %v2051 = vmul.f32 %v1979, %v2050
        %2052 = vrot.lane.b32.xlu0 %v852, 104
        %v2053 = vpop.permute.xlu0 %2052
        %v2056 = vsel %vm861, %v2006, 0
        %2058 = vmatpush.msra.mxu0 0.0
        %2059 = vmatpush.msra.mxu0 0.0
        %2060 = vmatpush.msra.mxu0 0.0
        %2061 = vmatpush.msra.mxu0 0.0
        %2062 = vmatpush.msra.mxu0 0.0
        %2063 = vmatpush.msra.mxu0 0.0
        %2064 = vmatpush.msra.mxu0 0.0
        %2065 = vmatpush.msra.mxu0 0.0
        %2066 = vmatpush.msra.mxu0 0.0
        %2067 = vmatpush.msra.mxu0 0.0
        %2068 = vmatpush.msra.mxu0 0.0
        %2069 = vmatpush.msra.mxu0 0.0
        %2070 = vmatpush.msra.mxu0 0.0
        %2071 = vmatpush.msra.mxu0 0.0
        %2072 = vmatpush.msra.mxu0 0.0
        %2073 = vmatpush.msra.mxu0 %v2053
        %2074 = vmatmul.f32.gmra.mxu0 %v2056
        %v2075 = vpop.f32.mrf.mxu0
        %v2076 = vadd.f32 0.0, %v2075
        %2077 = vdwg.mxu0
        %2078 = vrot.lane.b32.xlu0 %v854, 104
        %v2079 = vpop.permute.xlu0 %2078
        %v2082 = vsel %vm861, %v2021, 0
        %2084 = vmatpush.msra.mxu0 0.0
        %2085 = vmatpush.msra.mxu0 0.0
        %2086 = vmatpush.msra.mxu0 0.0
        %2087 = vmatpush.msra.mxu0 0.0
        %2088 = vmatpush.msra.mxu0 0.0
        %2089 = vmatpush.msra.mxu0 0.0
        %2090 = vmatpush.msra.mxu0 0.0
        %2091 = vmatpush.msra.mxu0 0.0
        %2092 = vmatpush.msra.mxu0 0.0
        %2093 = vmatpush.msra.mxu0 0.0
        %2094 = vmatpush.msra.mxu0 0.0
        %2095 = vmatpush.msra.mxu0 0.0
        %2096 = vmatpush.msra.mxu0 0.0
        %2097 = vmatpush.msra.mxu0 0.0
        %2098 = vmatpush.msra.mxu0 0.0
        %2099 = vmatpush.msra.mxu0 %v2079
        %2100 = vmatmul.f32.gmra.mxu0 %v2082
        %v2101 = vpop.f32.mrf.mxu0
        %v2102 = vadd.f32 0.0, %v2101
        %2103 = vdwg.mxu0
        %2104 = vrot.lane.b32.xlu0 %v857, 104
        %v2105 = vpop.permute.xlu0 %2104
        %v2108 = vsel %vm861, %v2036, 0
        %2110 = vmatpush.msra.mxu0 0.0
        %2111 = vmatpush.msra.mxu0 0.0
        %2112 = vmatpush.msra.mxu0 0.0
        %2113 = vmatpush.msra.mxu0 0.0
        %2114 = vmatpush.msra.mxu0 0.0
        %2115 = vmatpush.msra.mxu0 0.0
        %2116 = vmatpush.msra.mxu0 0.0
        %2117 = vmatpush.msra.mxu0 0.0
        %2118 = vmatpush.msra.mxu0 0.0
        %2119 = vmatpush.msra.mxu0 0.0
        %2120 = vmatpush.msra.mxu0 0.0
        %2121 = vmatpush.msra.mxu0 0.0
        %2122 = vmatpush.msra.mxu0 0.0
        %2123 = vmatpush.msra.mxu0 0.0
        %2124 = vmatpush.msra.mxu0 0.0
        %2125 = vmatpush.msra.mxu0 %v2105
        %2126 = vmatmul.f32.gmra.mxu0 %v2108
        %v2127 = vpop.f32.mrf.mxu0
        %v2128 = vadd.f32 0.0, %v2127
        %2129 = vdwg.mxu0
        %2130 = vrot.lane.b32.xlu0 %v859, 104
        %v2131 = vpop.permute.xlu0 %2130
        %v2134 = vsel %vm861, %v2051, 0
        %2136 = vmatpush.msra.mxu0 0.0
        %2137 = vmatpush.msra.mxu0 0.0
        %2138 = vmatpush.msra.mxu0 0.0
        %2139 = vmatpush.msra.mxu0 0.0
        %2140 = vmatpush.msra.mxu0 0.0
        %2141 = vmatpush.msra.mxu0 0.0
        %2142 = vmatpush.msra.mxu0 0.0
        %2143 = vmatpush.msra.mxu0 0.0
        %2144 = vmatpush.msra.mxu0 0.0
        %2145 = vmatpush.msra.mxu0 0.0
        %2146 = vmatpush.msra.mxu0 0.0
        %2147 = vmatpush.msra.mxu0 0.0
        %2148 = vmatpush.msra.mxu0 0.0
        %2149 = vmatpush.msra.mxu0 0.0
        %2150 = vmatpush.msra.mxu0 0.0
        %2151 = vmatpush.msra.mxu0 %v2131
        %2152 = vmatmul.f32.gmra.mxu0 %v2134
        %v2153 = vpop.f32.mrf.mxu0
        %v2154 = vadd.f32 0.0, %v2153
        %2155 = vdwg.mxu0
        %2160 = vrot.lane.b32.xlu0 %v2076, 24
        %v2161 = vpop.permute.xlu0 %2160
        %2162 = vrot.lane.b32.xlu0 %v2102, 24
        %v2163 = vpop.permute.xlu0 %2162
        %2164 = vrot.lane.b32.xlu0 %v2128, 24
        %v2165 = vpop.permute.xlu0 %2164
        %2166 = vrot.lane.b32.xlu0 %v2154, 24
        %v2167 = vpop.permute.xlu0 %2166
        %vm2172 = vcmask 261312
        %2173 = vst.msk [vmem:[#allocation3] sm:$0xff] %vm2172, %v2161
        %2174 = vst.msk [vmem:[#allocation3 + $0x8] sm:$0xff] %vm2172, %v2163
        %2175 = vst.msk [vmem:[#allocation3 + $0x10] sm:$0xff] %vm2172, %v2165
        %2176 = vst.msk [vmem:[#allocation3 + $0x18] sm:$0xff] %vm2172, %v2167
        %v2177 = vld [vmem:[#allocation3] sm:$0xff]
        %v2178 = vld [vmem:[#allocation3 + $0x8] sm:$0xff]
        %v2179 = vld [vmem:[#allocation3 + $0x10] sm:$0xff]
        %v2180 = vld [vmem:[#allocation3 + $0x18] sm:$0xff]
        %v2181 = vpack.c.bf16 %v2178, %v2177
        %v2182 = vpack.c.bf16 %v2180, %v2179
        %v2184 = vperm.slane %v724, 0
        %v2190 = vunpack.c.l.b16 %v719
        %v2191 = vunpack.c.l.b16 %v720
        %v2192 = vunpack.c.l.b16 %v721
        %v2193 = vunpack.c.l.b16 %v722
        %v2194 = vpack.c.b16 %v2191, %v2190
        %v2195 = vpack.c.b16 %v2193, %v2192
        %v2199 = vsel %vm767, %v2181, 0
        %v2202 = vsel %vm767, %v2182, 0
        %2204 = vmatpush.bf16.msra.mxu0 0
        %2205 = vmatpush.bf16.msra.mxu0 0
        %2206 = vmatpush.bf16.msra.mxu0 0
        %2207 = vmatpush.bf16.msra.mxu0 0
        %2208 = vmatpush.bf16.msra.mxu0 0
        %2209 = vmatpush.bf16.msra.mxu0 0
        %2210 = vmatpush.bf16.msra.mxu0 %v2195
        %2211 = vmatpush.bf16.msra.mxu0 %v2194
        %2212 = vmatmul.bf16.gmra.mxu0 %v2199
        %v2213 = vpop.f32.mrf.mxu0
        %v2214 = vadd.f32 %v2184, %v2213
        %v2215 = vpop.f32.mrf.mxu0
        %v2216 = vadd.f32 %v2184, %v2215
        %2217 = vmatmul.bf16.gmra.mxu0 %v2202
        %v2218 = vpop.f32.mrf.mxu0
        %v2219 = vadd.f32 %v2184, %v2218
        %v2220 = vpop.f32.mrf.mxu0
        %v2221 = vadd.f32 %v2184, %v2220
        %2222 = vdwg.mxu0
        %v2223 = vadd.f32 %v746, %v2214
        %v2224 = vadd.f32 %v747, %v2216
        %v2225 = vadd.f32 %v748, %v2219
        %v2226 = vadd.f32 %v749, %v2221
        %s2227 = scalar_lea.vmem [#allocation12], %s40
        %v2228 = vld [vmem:[%s2227] sm:$0x1]
        %s2229 = scalar_lea.vmem %s10, %s40
        %v2230 = vld [vmem:[%s2229] sm:$0x1]
        %v2231 = vsel %vm767, %v2223, 0.0
        %2232 = vadd.xlane.f32.xlu0 %v2231
        %v2233 = vpop.xlane.xlu0 %2232
        %v2234 = vsel %vm767, %v2224, 0.0
        %2235 = vadd.xlane.f32.xlu0 %v2234
        %v2236 = vpop.xlane.xlu0 %2235
        %v2237 = vsel %vm767, %v2225, 0.0
        %2238 = vadd.xlane.f32.xlu0 %v2237
        %v2239 = vpop.xlane.xlu0 %2238
        %v2240 = vsel %vm767, %v2226, 0.0
        %2241 = vadd.xlane.f32.xlu0 %v2240
        %v2242 = vpop.xlane.xlu0 %2241
        %v2243 = vrcp.pop 32.0
        %v2244 = vmul.f32 32.0, %v2243
        %v2245 = vsub.f32 1.0, %v2244
        %v2246 = vmul.f32 %v2243, %v2245
        %v2247 = vadd.f32 %v2243, %v2246
        %vm2248 = vweird.f32 %v2243
        %v2249 = vsel %vm2248, %v2243, %v2247
        %v2250 = vmul.f32 %v2233, %v2249
        %v2251 = vmul.f32 %v2236, %v2249
        %v2252 = vmul.f32 %v2239, %v2249
        %v2253 = vmul.f32 %v2242, %v2249
        %v2254 = vsub.f32 %v2223, %v2250
        %v2255 = vsub.f32 %v2224, %v2251
        %v2256 = vsub.f32 %v2225, %v2252
        %v2257 = vsub.f32 %v2226, %v2253
        %v2258 = vmul.f32 %v2254, %v2254
        %v2259 = vmul.f32 %v2255, %v2255
        %v2260 = vmul.f32 %v2256, %v2256
        %v2261 = vmul.f32 %v2257, %v2257
        %v2262 = vsel %vm767, %v2258, 0.0
        %2263 = vadd.xlane.f32.xlu0 %v2262
        %v2264 = vpop.xlane.xlu0 %2263
        %v2265 = vsel %vm767, %v2259, 0.0
        %2266 = vadd.xlane.f32.xlu0 %v2265
        %v2267 = vpop.xlane.xlu0 %2266
        %v2268 = vsel %vm767, %v2260, 0.0
        %2269 = vadd.xlane.f32.xlu0 %v2268
        %v2270 = vpop.xlane.xlu0 %2269
        %v2271 = vsel %vm767, %v2261, 0.0
        %2272 = vadd.xlane.f32.xlu0 %v2271
        %v2273 = vpop.xlane.xlu0 %2272
        %v2274 = vmul.f32 %v2264, %v2249
        %v2275 = vmul.f32 %v2267, %v2249
        %v2276 = vmul.f32 %v2270, %v2249
        %v2277 = vmul.f32 %v2273, %v2249
        %v2278 = vadd.f32 %v2274, 1e-05
        %v2279 = vadd.f32 %v2275, 1e-05
        %v2280 = vadd.f32 %v2276, 1e-05
        %v2281 = vadd.f32 %v2277, 1e-05
        %v2282 = vrsqrt.pop %v2278
        %v2283 = vmul.f32 %v2282, %v2278
        %v2284 = vmul.f32 %v2283, %v2282
        %v2285 = vmul.f32 0.5, %v2284
        %v2286 = vsub.f32 1.5, %v2285
        %v2287 = vmul.f32 %v2282, %v2286
        %vm2288 = vweird.f32 %v2278
        %vm2289 = vweird.f32 %v2282
        %vm2290 = vmor %vm2288, %vm2289
        %v2291 = vsel %vm2290, %v2282, %v2287
        %v2292 = vrsqrt.pop %v2279
        %v2293 = vmul.f32 %v2292, %v2279
        %v2294 = vmul.f32 %v2293, %v2292
        %v2295 = vmul.f32 0.5, %v2294
        %v2296 = vsub.f32 1.5, %v2295
        %v2297 = vmul.f32 %v2292, %v2296
        %vm2298 = vweird.f32 %v2279
        %vm2299 = vweird.f32 %v2292
        %vm2300 = vmor %vm2298, %vm2299
        %v2301 = vsel %vm2300, %v2292, %v2297
        %v2302 = vrsqrt.pop %v2280
        %v2303 = vmul.f32 %v2302, %v2280
        %v2304 = vmul.f32 %v2303, %v2302
        %v2305 = vmul.f32 0.5, %v2304
        %v2306 = vsub.f32 1.5, %v2305
        %v2307 = vmul.f32 %v2302, %v2306
        %vm2308 = vweird.f32 %v2280
        %vm2309 = vweird.f32 %v2302
        %vm2310 = vmor %vm2308, %vm2309
        %v2311 = vsel %vm2310, %v2302, %v2307
        %v2312 = vrsqrt.pop %v2281
        %v2313 = vmul.f32 %v2312, %v2281
        %v2314 = vmul.f32 %v2313, %v2312
        %v2315 = vmul.f32 0.5, %v2314
        %v2316 = vsub.f32 1.5, %v2315
        %v2317 = vmul.f32 %v2312, %v2316
        %vm2318 = vweird.f32 %v2281
        %vm2319 = vweird.f32 %v2312
        %vm2320 = vmor %vm2318, %vm2319
        %v2321 = vsel %vm2320, %v2312, %v2317
        %v2322 = vmul.f32 %v2254, %v2291
        %v2323 = vmul.f32 %v2255, %v2301
        %v2324 = vmul.f32 %v2256, %v2311
        %v2325 = vmul.f32 %v2257, %v2321
        %v2327 = vperm.slane %v2228, 0
        %v2329 = vmul.f32 %v2322, %v2327
        %v2330 = vmul.f32 %v2323, %v2327
        %v2331 = vmul.f32 %v2324, %v2327
        %v2332 = vmul.f32 %v2325, %v2327
        %v2334 = vperm.slane %v2230, 0
        %v2336 = vadd.f32 %v2329, %v2334
        %v2337 = vadd.f32 %v2330, %v2334
        %v2338 = vadd.f32 %v2331, %v2334
        %v2339 = vadd.f32 %v2332, %v2334
        %v2340 = vpack.c.bf16 %v2337, %v2336
        %v2341 = vpack.c.bf16 %v2339, %v2338
        %v2343 = vperm.slane %v732, 0
        %v2349 = vunpack.c.l.b16 %v727
        %v2350 = vunpack.c.l.b16 %v728
        %v2351 = vunpack.c.l.b16 %v729
        %v2352 = vunpack.c.l.b16 %v730
        %v2353 = vpack.c.b16 %v2350, %v2349
        %v2354 = vpack.c.b16 %v2352, %v2351
        %v2358 = vsel %vm767, %v2340, 0
        %v2361 = vsel %vm767, %v2341, 0
        %2363 = vmatpush.bf16.msra.mxu0 0
        %2364 = vmatpush.bf16.msra.mxu0 0
        %2365 = vmatpush.bf16.msra.mxu0 0
        %2366 = vmatpush.bf16.msra.mxu0 0
        %2367 = vmatpush.bf16.msra.mxu0 0
        %2368 = vmatpush.bf16.msra.mxu0 0
        %2369 = vmatpush.bf16.msra.mxu0 %v2354
        %2370 = vmatpush.bf16.msra.mxu0 %v2353
        %2371 = vmatmul.bf16.gmra.mxu0 %v2358
        %v2372 = vpop.f32.mrf.mxu0
        %v2373 = vadd.f32 %v2343, %v2372
        %v2374 = vpop.f32.mrf.mxu0
        %v2375 = vadd.f32 %v2343, %v2374
        %2376 = vmatmul.bf16.gmra.mxu0 %v2361
        %v2377 = vpop.f32.mrf.mxu0
        %v2378 = vadd.f32 %v2343, %v2377
        %v2379 = vpop.f32.mrf.mxu0
        %v2380 = vadd.f32 %v2343, %v2379
        %2381 = vdwg.mxu0
        %v2382 = vmax.f32 %v2373, 0.0
        %v2383 = vmax.f32 %v2375, 0.0
        %v2384 = vmax.f32 %v2378, 0.0
        %v2385 = vmax.f32 %v2380, 0.0
        %v2386 = vpack.c.bf16 %v2383, %v2382
        %v2387 = vpack.c.bf16 %v2385, %v2384
        %v2389 = vperm.slane %v745, 0
        %v2399 = vunpack.c.l.b16 %v736
        %v2400 = vunpack.c.l.b16 %v737
        %v2401 = vunpack.c.l.b16 %v738
        %v2402 = vunpack.c.l.b16 %v739
        %v2403 = vunpack.c.l.b16 %v740
        %v2404 = vunpack.c.l.b16 %v741
        %v2405 = vunpack.c.l.b16 %v742
        %v2406 = vunpack.c.l.b16 %v743
        %v2407 = vpack.c.b16 %v2400, %v2399
        %v2408 = vpack.c.b16 %v2402, %v2401
        %v2409 = vpack.c.b16 %v2404, %v2403
        %v2410 = vpack.c.b16 %v2406, %v2405
        %vm2415 = vcmask 523264
        %v2417 = vsel %vm2415, %v2386, 0
        %v2420 = vsel %vm2415, %v2387, 0
        %2422 = vmatpush.bf16.msra.mxu0 0
        %2423 = vmatpush.bf16.msra.mxu0 0
        %2424 = vmatpush.bf16.msra.mxu0 0
        %2425 = vmatpush.bf16.msra.mxu0 0
        %2426 = vmatpush.bf16.msra.mxu0 %v2410
        %2427 = vmatpush.bf16.msra.mxu0 %v2409
        %2428 = vmatpush.bf16.msra.mxu0 %v2408
        %2429 = vmatpush.bf16.msra.mxu0 %v2407
        %2430 = vmatmul.bf16.gmra.mxu0 %v2417
        %v2431 = vpop.f32.mrf.mxu0
        %v2432 = vadd.f32 %v2389, %v2431
        %v2433 = vpop.f32.mrf.mxu0
        %v2434 = vadd.f32 %v2389, %v2433
        %2435 = vmatmul.bf16.gmra.mxu0 %v2420
        %v2436 = vpop.f32.mrf.mxu0
        %v2437 = vadd.f32 %v2389, %v2436
        %v2438 = vpop.f32.mrf.mxu0
        %v2439 = vadd.f32 %v2389, %v2438
        %2440 = vdwg.mxu0
        %v2441 = vadd.f32 %v2336, %v2432
        %v2442 = vadd.f32 %v2337, %v2434
        %v2443 = vadd.f32 %v2338, %v2437
        %v2444 = vadd.f32 %v2339, %v2439
        %s2445 = scalar_lea.vmem [#allocation15], %s40
        %v2446 = vld [vmem:[%s2445] sm:$0x1]
        %s2447 = scalar_lea.vmem %s16, %s40
        %v2448 = vld [vmem:[%s2447] sm:$0x1]
        %v2449 = vsel %vm767, %v2441, 0.0
        %2450 = vadd.xlane.f32.xlu0 %v2449
        %v2451 = vpop.xlane.xlu0 %2450
        %v2452 = vsel %vm767, %v2442, 0.0
        %2453 = vadd.xlane.f32.xlu0 %v2452
        %v2454 = vpop.xlane.xlu0 %2453
        %v2455 = vsel %vm767, %v2443, 0.0
        %2456 = vadd.xlane.f32.xlu0 %v2455
        %v2457 = vpop.xlane.xlu0 %2456
        %v2458 = vsel %vm767, %v2444, 0.0
        %2459 = vadd.xlane.f32.xlu0 %v2458
        %v2460 = vpop.xlane.xlu0 %2459
        %v2461 = vmul.f32 %v2451, %v2249
        %v2462 = vmul.f32 %v2454, %v2249
        %v2463 = vmul.f32 %v2457, %v2249
        %v2464 = vmul.f32 %v2460, %v2249
        %v2465 = vsub.f32 %v2441, %v2461
        %v2466 = vsub.f32 %v2442, %v2462
        %v2467 = vsub.f32 %v2443, %v2463
        %v2468 = vsub.f32 %v2444, %v2464
        %v2469 = vmul.f32 %v2465, %v2465
        %v2470 = vmul.f32 %v2466, %v2466
        %v2471 = vmul.f32 %v2467, %v2467
        %v2472 = vmul.f32 %v2468, %v2468
        %v2473 = vsel %vm767, %v2469, 0.0
        %2474 = vadd.xlane.f32.xlu0 %v2473
        %v2475 = vpop.xlane.xlu0 %2474
        %v2476 = vsel %vm767, %v2470, 0.0
        %2477 = vadd.xlane.f32.xlu0 %v2476
        %v2478 = vpop.xlane.xlu0 %2477
        %v2479 = vsel %vm767, %v2471, 0.0
        %2480 = vadd.xlane.f32.xlu0 %v2479
        %v2481 = vpop.xlane.xlu0 %2480
        %v2482 = vsel %vm767, %v2472, 0.0
        %2483 = vadd.xlane.f32.xlu0 %v2482
        %v2484 = vpop.xlane.xlu0 %2483
        %v2485 = vmul.f32 %v2475, %v2249
        %v2486 = vmul.f32 %v2478, %v2249
        %v2487 = vmul.f32 %v2481, %v2249
        %v2488 = vmul.f32 %v2484, %v2249
        %v2489 = vadd.f32 %v2485, 1e-05
        %v2490 = vadd.f32 %v2486, 1e-05
        %v2491 = vadd.f32 %v2487, 1e-05
        %v2492 = vadd.f32 %v2488, 1e-05
        %v2493 = vrsqrt.pop %v2489
        %v2494 = vmul.f32 %v2493, %v2489
        %v2495 = vmul.f32 %v2494, %v2493
        %v2496 = vmul.f32 0.5, %v2495
        %v2497 = vsub.f32 1.5, %v2496
        %v2498 = vmul.f32 %v2493, %v2497
        %vm2499 = vweird.f32 %v2489
        %vm2500 = vweird.f32 %v2493
        %vm2501 = vmor %vm2499, %vm2500
        %v2502 = vsel %vm2501, %v2493, %v2498
        %v2503 = vrsqrt.pop %v2490
        %v2504 = vmul.f32 %v2503, %v2490
        %v2505 = vmul.f32 %v2504, %v2503
        %v2506 = vmul.f32 0.5, %v2505
        %v2507 = vsub.f32 1.5, %v2506
        %v2508 = vmul.f32 %v2503, %v2507
        %vm2509 = vweird.f32 %v2490
        %vm2510 = vweird.f32 %v2503
        %vm2511 = vmor %vm2509, %vm2510
        %v2512 = vsel %vm2511, %v2503, %v2508
        %v2513 = vrsqrt.pop %v2491
        %v2514 = vmul.f32 %v2513, %v2491
        %v2515 = vmul.f32 %v2514, %v2513
        %v2516 = vmul.f32 0.5, %v2515
        %v2517 = vsub.f32 1.5, %v2516
        %v2518 = vmul.f32 %v2513, %v2517
        %vm2519 = vweird.f32 %v2491
        %vm2520 = vweird.f32 %v2513
        %vm2521 = vmor %vm2519, %vm2520
        %v2522 = vsel %vm2521, %v2513, %v2518
        %v2523 = vrsqrt.pop %v2492
        %v2524 = vmul.f32 %v2523, %v2492
        %v2525 = vmul.f32 %v2524, %v2523
        %v2526 = vmul.f32 0.5, %v2525
        %v2527 = vsub.f32 1.5, %v2526
        %v2528 = vmul.f32 %v2523, %v2527
        %vm2529 = vweird.f32 %v2492
        %vm2530 = vweird.f32 %v2523
        %vm2531 = vmor %vm2529, %vm2530
        %v2532 = vsel %vm2531, %v2523, %v2528
        %v2533 = vmul.f32 %v2465, %v2502
        %v2534 = vmul.f32 %v2466, %v2512
        %v2535 = vmul.f32 %v2467, %v2522
        %v2536 = vmul.f32 %v2468, %v2532
        %v2538 = vperm.slane %v2446, 0
        %v2540 = vmul.f32 %v2533, %v2538
        %v2541 = vmul.f32 %v2534, %v2538
        %v2542 = vmul.f32 %v2535, %v2538
        %v2543 = vmul.f32 %v2536, %v2538
        %v2545 = vperm.slane %v2448, 0
        %v2547 = vadd.f32 %v2540, %v2545
        %v2548 = vadd.f32 %v2541, %v2545
        %v2549 = vadd.f32 %v2542, %v2545
        %v2550 = vadd.f32 %v2543, %v2545
        %2551 = vst.msk [vmem:[#allocation2] sm:$0xff] %vm767, %v2547
        %2552 = vst.msk [vmem:[#allocation2 + $0x8] sm:$0xff] %vm767, %v2548
        %2553 = vst.msk [vmem:[#allocation2 + $0x10] sm:$0xff] %vm767, %v2549
        %2554 = vst.msk [vmem:[#allocation2 + $0x18] sm:$0xff] %vm767, %v2550
        %p2555 = scmp.eq.s32.totalorder %s40, 1
        // Predicated region
        $region121: #{tpu_custom_call.1} parent=87 // pred_check
          %p2556 = pneg %p2555
        $region122: #{tpu_custom_call.1} parent=87 // pred_check_branch
          %2558 = sbr.rel (%p2556) target = $region124
        $region123: #{tpu_custom_call.1} parent=87 // pred_region
          %2559 = vst.msk [vmem:[%s670] sm:$0xff] %vm767, %v2547
          %2560 = vst.msk [vmem:[%s670 + $0x8] sm:$0xff] %vm767, %v2548
          %2561 = vst.msk [vmem:[%s670 + $0x10] sm:$0xff] %vm767, %v2549
          %2562 = vst.msk [vmem:[%s670 + $0x18] sm:$0xff] %vm767, %v2550
        $region124: #{tpu_custom_call.1} parent=87 // pred_fallthru
          _
        %s2563 = sand.u32 %s417, 1
        %s2564 = scalar_lea.sflag [#allocation6], %s2563
        %s2565 = sand.u32 %s417, 1
        %s2566 = smul.addr %s2565, 32
        %s2567 = scalar_lea.vmem [#allocation16], %s2566
        // Predicated region
        $region125: #{tpu_custom_call.1} parent=87 // pred_check
          %p2568 = pneg %p427
        $region126: #{tpu_custom_call.1} parent=87 // pred_check_branch
          %2570 = sbr.rel (%p2568) target = $region128
        $region127: #{tpu_custom_call.1} parent=87 // pred_region
          %s2571 = smul.u32 4, %s39
          %2573 = vsyncadd %s2564, 0
          %s2574 = smul.addr %s2571, 8
          %s2575 = scalar_lea.hbm %s17, %s2574
          %s2576 = sshll.u32 %s2567, 4
          %s2577 = int_to_ptr.vmem [resolvable:$true] %s2576
          %s2578 = sshll.u32 %s2575, 4
          %s2579 = int_to_ptr.hbm [resolvable:$true] %s2578
          %2584 = dma.vmem_to_hbm [thread:$0]  %s2577, 512, %s2579, %s2564, 128, 128, 8
        $region128: #{tpu_custom_call.1} parent=87 // pred_fallthru
          _
      $region88: #{tpu_custom_call.1} parent=5 // pred_fallthru
        _
      %p2585 = scmp.le.s32.totalorder 2, %s30
      // Predicated region
      $region129: #{tpu_custom_call.1} parent=5 // pred_check
        %p2586 = pneg %p2585
      $region130: #{tpu_custom_call.1} parent=5 // pred_check_branch
        %2588 = sbr.rel (%p2586) target = $region132
      $region131: #{tpu_custom_call.1} parent=5 // pred_region
        %s2589 = ssub.s32 %s30, 2
        // Predicated region
        $region133: #{tpu_custom_call.1} parent=131 // pred_check
          %p2590 = pneg %p433
        $region134: #{tpu_custom_call.1} parent=131 // pred_check_branch
          %2592 = sbr.rel (%p2590) target = $region136
        $region135: #{tpu_custom_call.1} parent=131 // pred_region
          %s2593 = sand.u32 %s418, 1
          %s2594 = scalar_lea.sflag [#allocation6], %s2593
          %s2595 = sand.u32 %s418, 1
          %s2596 = smul.addr %s2595, 32
          %s2597 = scalar_lea.vmem [#allocation16], %s2596
          %2599 = dma.done %s2594, 512
        $region136: #{tpu_custom_call.1} parent=131 // pred_fallthru
          _
      $region132: #{tpu_custom_call.1} parent=5 // pred_fallthru
        _
    $region6: #{tpu_custom_call.1} parent=1 // loop_footer
      %s34 = sadd.s32 1, %s30
    $region7: #{tpu_custom_call.1} parent=1 // loop_footer_branch
      %29 = sbr.rel target = $region3
    $region8: #{tpu_custom_call.1} parent=1 // loop_exit
      _
    %2600 = vsyncpa [#allocation5], 1
    %s2601 = scalar_lea.sflag [#allocation5], 1
    %2602 = vsyncpa %s2601, 1
    %2603 = vsyncpa [#allocation8], 1
    %2604 = vsyncpa [#allocation11], 1
    %2605 = vsyncpa [#allocation14], 1
    %2606 = vsyncpa [#allocation6], 1
    %s2607 = scalar_lea.sflag [#allocation6], 1
    %2608 = vsyncpa %s2607, 1

</llo_original>
